<compile_context>
chip_gen: v7x
topology: tpu7x:2x2x1
jax: 0.10.0
libtpu: 0.0.40
codegen_flags: <defaults>
</compile_context>

<pallas_src>
import functools

import jax
import jax.numpy as jnp
from jax.experimental import pallas as pl
from jax.experimental.pallas import tpu as pltpu

VMEM_SPEC = pl.BlockSpec(memory_space=pltpu.MemorySpace.VMEM)

LG1_S = 12 * 15 * 15   # 2700
LG2_S = 32 * 5 * 5     # 800
K1 = 2 * 5 * 5         # 50
K2 = 12 * 5 * 5        # 300
K1PAD = 64             # contraction dim padded (multiple of 8)
K2PAD = 384            # 3 * 128 -> lane-dense weight rows
TRESH = 0.25
DECAY = 0.9
SPIKE = 0.2


# ----------------------------- Pallas kernels ------------------------------ #

def _conv_pool_gate_kernel(cols_ref, w_ref, b_ref, tresh_ref, decay_ref,
                           pot_ref, gated_ref, newpot_ref, *, spike):
    """Fused conv-as-matmul + bias + 2x2 maxpool + LinearGated (one batch elem).

    cols_ref : (4, Kpad, S)   im2col slab per pool offset (dh, dw)
    w_ref    : (Cout, Kpad)   flattened conv weight, zero-padded K
    b_ref    : (Cout, 1)      conv bias
    tresh/decay/pot/outputs : (Cout, S)  channel-major, spatial on lanes.
    """
    w = w_ref[...]
    # conv evaluated at the 4 pool offsets; maxpool == elementwise max of them.
    s = jnp.dot(w, cols_ref[0], preferred_element_type=jnp.float32)
    for dd in range(1, 4):
        s = jnp.maximum(
            s, jnp.dot(w, cols_ref[dd], preferred_element_type=jnp.float32))
    conv = s + b_ref[...]                 # per-channel bias commutes with max
    # LinearGated epilogue (tanh -> EUP, max/select -> VPU: free under matmul)
    pot = pot_ref[...] + jnp.tanh(conv)
    mask = pot >= tresh_ref[...]
    gated = jnp.where(mask, pot, 0.0)
    gated_ref[...] = gated
    newpot_ref[...] = gated * spike + jnp.where(mask, 0.0, pot) * decay_ref[...]


def _fc_gate_kernel(lg1_ref, lg2_ref, wa_ref, wb_ref, b_ref,
                    tresh_ref, decay_ref, pot_ref, o_ref, newpot_ref, *, spike):
    """fc1 over [lg1 | lg2] with a pre-split weight (no concat) + LinearGated."""
    fc = (jnp.dot(lg1_ref[...], wa_ref[...], preferred_element_type=jnp.float32)
          + jnp.dot(lg2_ref[...], wb_ref[...], preferred_element_type=jnp.float32)
          + b_ref[...])
    pot = pot_ref[...] + jnp.tanh(fc)
    mask = pot >= tresh_ref[...]
    gated = jnp.where(mask, pot, 0.0)
    o_ref[...] = gated
    newpot_ref[...] = gated * spike + jnp.where(mask, 0.0, pot) * decay_ref[...]


# ------------------------------ kernel wrappers ----------------------------- #

def conv_pool_gate(cols, w, b, tresh, decay, pot, spike):
    """cols: (B, 4, Kpad, S) -> (gated, new_pot), each (B, Cout, S)."""
    B, ndd, kpad, S = cols.shape
    Cout = w.shape[0]
    kernel = functools.partial(_conv_pool_gate_kernel, spike=spike)
    batch_block = pl.BlockSpec((None, Cout, S), lambda bb: (bb, 0, 0))
    return pl.pallas_call(
        kernel,
        grid=(B,),
        out_shape=(jax.ShapeDtypeStruct((B, Cout, S), jnp.float32),
                   jax.ShapeDtypeStruct((B, Cout, S), jnp.float32)),
        in_specs=[
            pl.BlockSpec((None, ndd, kpad, S), lambda bb: (bb, 0, 0, 0)),
            pl.BlockSpec((Cout, kpad), lambda bb: (0, 0)),
            pl.BlockSpec((Cout, 1), lambda bb: (0, 0)),
            pl.BlockSpec((Cout, S), lambda bb: (0, 0)),
            pl.BlockSpec((Cout, S), lambda bb: (0, 0)),
            batch_block,
        ],
        out_specs=(batch_block, batch_block),
        compiler_params=pltpu.CompilerParams(
            dimension_semantics=("parallel",)),
    )(cols, w, b, tresh, decay, pot)


def fc_gate(lg1_flat, lg2_flat, wa, wb, b, tresh, decay, pot, spike):
    B = lg1_flat.shape[0]
    N = wa.shape[1]
    kernel = functools.partial(_fc_gate_kernel, spike=spike)
    return pl.pallas_call(
        kernel,
        out_shape=(jax.ShapeDtypeStruct((B, N), jnp.float32),
                   jax.ShapeDtypeStruct((B, N), jnp.float32)),
        in_specs=[VMEM_SPEC] * 8,
        out_specs=(VMEM_SPEC, VMEM_SPEC),
    )(lg1_flat, lg2_flat, wa, wb, b, tresh, decay, pot)


# ------------------------------- glue (JAX) -------------------------------- #

def build_pool_cols(x, k, kpad):
    """Pool-offset-major im2col for a valid 5x5 conv followed by 2x2 maxpool.

    Returns (B, 4, kpad, Ph*Pw) with
      [b, dh*2+dw, c*k*k + i*k + j, ph*Pw + pw] = x[b, c, 2*ph+dh+i, 2*pw+dw+j]
    and rows C*k*k .. kpad-1 zero-padded (weights are padded to match).
    """
    B, C, H, W = x.shape
    Ho, Wo = H - k + 1, W - k + 1
    Ph, Pw = Ho // 2, Wo // 2
    per_dd = []
    for dh in (0, 1):
        for dw in (0, 1):
            wins = []
            for i in range(k):
                for j in range(k):
                    wins.append(
                        x[:, :, dh + i: dh + i + 2 * Ph: 2,
                              dw + j: dw + j + 2 * Pw: 2])   # (B, C, Ph, Pw)
            ww = jnp.stack(wins, axis=2)                      # (B, C, k*k, Ph, Pw)
            per_dd.append(ww.reshape(B, C * k * k, Ph * Pw))
    cols = jnp.stack(per_dd, axis=1)                          # (B, 4, C*k*k, S)
    if kpad > C * k * k:
        cols = jnp.pad(cols, ((0, 0), (0, 0), (0, kpad - C * k * k), (0, 0)))
    return cols


def init_params(key):
    """Raw params in PyTorch layouts (Conv2d OIHW, Linear (out,in))."""
    ks = jax.random.split(key, 6)
    return {
        "c1_w": jax.random.normal(ks[0], (12, 2, 5, 5), jnp.float32) * 0.1,
        "c1_b": jax.random.normal(ks[1], (12,), jnp.float32) * 0.1,
        "c2_w": jax.random.normal(ks[2], (32, 12, 5, 5), jnp.float32) * 0.05,
        "c2_b": jax.random.normal(ks[3], (32,), jnp.float32) * 0.05,
        "fc1_w": jax.random.normal(ks[4], (10, LG1_S + LG2_S), jnp.float32) * 0.02,
        "fc1_b": jax.random.normal(ks[5], (10,), jnp.float32) * 0.02,
        "lg1_tresh": jnp.full((LG1_S,), TRESH, jnp.float32),
        "lg1_decay": jnp.full((LG1_S,), DECAY, jnp.float32),
        "lg2_tresh": jnp.full((LG2_S,), TRESH, jnp.float32),
        "lg2_decay": jnp.full((LG2_S,), DECAY, jnp.float32),
        "lg3_tresh": jnp.full((10,), TRESH, jnp.float32),
        "lg3_decay": jnp.full((10,), DECAY, jnp.float32),
    }


def prepare_params(p):
    """One-time relayout (outside the hot path) into kernel-friendly layouts."""
    return {
        "c1_w2d": jnp.pad(p["c1_w"].reshape(12, K1), ((0, 0), (0, K1PAD - K1))),
        "c1_b2d": p["c1_b"].reshape(12, 1),
        "c2_w2d": jnp.pad(p["c2_w"].reshape(32, K2), ((0, 0), (0, K2PAD - K2))),
        "c2_b2d": p["c2_b"].reshape(32, 1),
        "fc1_wa": p["fc1_w"][:, :LG1_S].T,      # (2700, 10)
        "fc1_wb": p["fc1_w"][:, LG1_S:].T,      # (800, 10)
        "fc1_b2d": p["fc1_b"].reshape(1, 10),
        "lg1_tresh2d": p["lg1_tresh"].reshape(12, 225),
        "lg1_decay2d": p["lg1_decay"].reshape(12, 225),
        "lg2_tresh2d": p["lg2_tresh"].reshape(32, 25),
        "lg2_decay2d": p["lg2_decay"].reshape(32, 25),
        "lg3_tresh2d": p["lg3_tresh"].reshape(1, 10),
        "lg3_decay2d": p["lg3_decay"].reshape(1, 10),
    }


def net_forward(params, x, pot1, pot2, pot3):
    # Dropout layers (d0/d1/d2/d3) are identity at inference (eval mode).
    # TODO(synk): training-mode dropout (random mask + 1/(1-p) scaling) not modeled.
    B = x.shape[0]

    # layer 1: conv1(2->12, 5x5) + maxpool2 + LinearGated, fused.
    cols1 = build_pool_cols(x, 5, K1PAD)                    # (B, 4, 64, 225)
    lg1, pot1n = conv_pool_gate(
        cols1, params["c1_w2d"], params["c1_b2d"],
        params["lg1_tresh2d"], params["lg1_decay2d"],
        pot1.reshape(B, 12, 225), SPIKE)                    # (B, 12, 225) x2

    # layer 2: conv2(12->32, 5x5) + maxpool2 + LinearGated, fused.
    cols2 = build_pool_cols(lg1.reshape(B, 12, 15, 15), 5, K2PAD)  # (B, 4, 384, 25)
    lg2, pot2n = conv_pool_gate(
        cols2, params["c2_w2d"], params["c2_b2d"],
        params["lg2_tresh2d"], params["lg2_decay2d"],
        pot2.reshape(B, 32, 25), SPIKE)                     # (B, 32, 25) x2

    # head: fc1 over [lg1_flat | lg2_flat] (split weight, no concat) + gate.
    o, pot3n = fc_gate(
        lg1.reshape(B, LG1_S), lg2.reshape(B, LG2_S),
        params["fc1_wa"], params["fc1_wb"], params["fc1_b2d"],
        params["lg3_tresh2d"], params["lg3_decay2d"], pot3, SPIKE)

    return o, pot1n.reshape(B, LG1_S), pot2n.reshape(B, LG2_S), pot3n


# --------------------------- pure-JAX reference ----------------------------- #

def reference_forward(raw, x, pot1, pot2, pot3):
    def conv(a, w, b):
        y = jax.lax.conv_general_dilated(
            a, w, window_strides=(1, 1), padding="VALID",
            dimension_numbers=("NCHW", "OIHW", "NCHW"))
        return y + b.reshape(1, -1, 1, 1)

    def pool(a):
        return jax.lax.reduce_window(
            a, -jnp.inf, jax.lax.max, (1, 1, 2, 2), (1, 1, 2, 2), "VALID")

    def gate(a, pot, tresh, decay):
        pot = pot + jnp.tanh(a)
        mask = pot >= tresh
        gated = jnp.where(mask, pot, 0.0)
        return gated, gated * SPIKE + jnp.where(mask, 0.0, pot) * decay

    B = x.shape[0]
    m1 = pool(conv(x, raw["c1_w"], raw["c1_b"])).reshape(B, -1)
    lg1, pot1 = gate(m1, pot1, raw["lg1_tresh"], raw["lg1_decay"])
    m2 = pool(conv(lg1.reshape(B, 12, 15, 15),
                   raw["c2_w"], raw["c2_b"])).reshape(B, -1)
    lg2, pot2 = gate(m2, pot2, raw["lg2_tresh"], raw["lg2_decay"])
    fc = jnp.concatenate([lg1, lg2], axis=1) @ raw["fc1_w"].T + raw["fc1_b"]
    o, pot3 = gate(fc, pot3, raw["lg3_tresh"], raw["lg3_decay"])
    return o, pot1, pot2, pot3


if __name__ == "__main__":
    key = jax.random.PRNGKey(0)
    kp, kx = jax.random.split(key)
    raw = init_params(kp)
    params = prepare_params(raw)

    B = 2
    x = jax.random.normal(kx, (B, 2, 34, 34), jnp.float32)
    pot1 = jnp.zeros((B, LG1_S), jnp.float32)
    pot2 = jnp.zeros((B, LG2_S), jnp.float32)
    pot3 = jnp.zeros((B, 10), jnp.float32)

    fwd = jax.jit(net_forward)
    o, p1, p2, p3 = fwd(params, x, pot1, pot2, pot3)
    o2, p1b, p2b, p3b = fwd(params, x, p1, p2, p3)   # second timestep (state reuse)
    jax.block_until_ready((o, p1, p2, p3, o2, p1b, p2b, p3b))

    assert o.shape == (B, 10) and p1.shape == (B, LG1_S)
    assert p2.shape == (B, LG2_S) and p3.shape == (B, 10)

    # Numeric sanity check vs XLA reference. Tolerate a few isolated threshold
    # flips (values landing within float noise of tresh) from MXU-vs-XLA
    # accumulation-order differences.
    ref = reference_forward(raw, x, pot1, pot2, pot3)
    for got, want in zip((o, p1, p2, p3), ref):
        tol = 1e-3 * (1.0 + jnp.abs(want))
        frac_bad = float(jnp.mean((jnp.abs(got - want) > tol).astype(jnp.float32)))
        assert frac_bad < 0.01, f"mismatch fraction {frac_bad}"

    print("KERNEL_OK")
</pallas_src>

<mosaic_0001>
module attributes {stable_mosaic.version = 11 : i64} {
  func.func @_conv_pool_gate_kernel(%arg0: i32, %arg1: memref<1x4x64x225xf32, #tpu.memory_space<vmem>>, %arg2: memref<12x64xf32, #tpu.memory_space<vmem>>, %arg3: memref<12x1xf32, #tpu.memory_space<vmem>>, %arg4: memref<12x225xf32, #tpu.memory_space<vmem>>, %arg5: memref<12x225xf32, #tpu.memory_space<vmem>>, %arg6: memref<1x12x225xf32, #tpu.memory_space<vmem>>, %arg7: memref<1x12x225xf32, #tpu.memory_space<vmem>>, %arg8: memref<1x12x225xf32, #tpu.memory_space<vmem>>) attributes {dimension_semantics = [#tpu.dimension_semantics<parallel>], iteration_bounds = array<i64: 2>, scalar_prefetch = 0 : i64, scratch_operands = 0 : i64, tpu.core_type = #tpu.core_type<tc>, window_params = [{transform_indices = @transform_0, window_bounds = array<i64: 1, 4, 64, 225>}, {pipeline_mode = #tpu.pipeline_mode<synchronous>, transform_indices = @transform_1, window_bounds = array<i64: 12, 64>}, {pipeline_mode = #tpu.pipeline_mode<synchronous>, transform_indices = @transform_2, window_bounds = array<i64: 12, 1>}, {pipeline_mode = #tpu.pipeline_mode<synchronous>, transform_indices = @transform_3, window_bounds = array<i64: 12, 225>}, {pipeline_mode = #tpu.pipeline_mode<synchronous>, transform_indices = @transform_4, window_bounds = array<i64: 12, 225>}, {transform_indices = @transform_5, window_bounds = array<i64: 1, 12, 225>}, {transform_indices = @transform_6, window_bounds = array<i64: 1, 12, 225>}, {transform_indices = @transform_7, window_bounds = array<i64: 1, 12, 225>}]} {
    %c0 = arith.constant 0 : index
    %c0_0 = arith.constant 0 : index
    %0 = vector.load %arg2[%c0, %c0_0] : memref<12x64xf32, #tpu.memory_space<vmem>>, vector<12x64xf32>
    %c0_1 = arith.constant 0 : index
    %c0_2 = arith.constant 0 : index
    %c0_3 = arith.constant 0 : index
    %c0_4 = arith.constant 0 : index
    %1 = vector.load %arg1[%c0_1, %c0_2, %c0_3, %c0_4] : memref<1x4x64x225xf32, #tpu.memory_space<vmem>>, vector<1x1x64x225xf32>
    %2 = vector.shape_cast %1 : vector<1x1x64x225xf32> to vector<64x225xf32>
    %cst = arith.constant dense<0.000000e+00> : vector<12x225xf32>
    %3 = tpu.matmul %0, %2, %cst {dimension_numbers = #tpu.dot_dimension_numbers<[1], [0], [0], [1], [0, 0, 1, 1], [], []>} : vector<12x64xf32>, vector<64x225xf32>, vector<12x225xf32> -> vector<12x225xf32>
    %c0_5 = arith.constant 0 : index
    %c1 = arith.constant 1 : index
    %c0_6 = arith.constant 0 : index
    %c0_7 = arith.constant 0 : index
    %4 = vector.load %arg1[%c0_5, %c1, %c0_6, %c0_7] : memref<1x4x64x225xf32, #tpu.memory_space<vmem>>, vector<1x1x64x225xf32>
    %5 = vector.shape_cast %4 : vector<1x1x64x225xf32> to vector<64x225xf32>
    %cst_8 = arith.constant dense<0.000000e+00> : vector<12x225xf32>
    %6 = tpu.matmul %0, %5, %cst_8 {dimension_numbers = #tpu.dot_dimension_numbers<[1], [0], [0], [1], [0, 0, 1, 1], [], []>} : vector<12x64xf32>, vector<64x225xf32>, vector<12x225xf32> -> vector<12x225xf32>
    %7 = arith.maximumf %3, %6 : vector<12x225xf32>
    %c0_9 = arith.constant 0 : index
    %c2 = arith.constant 2 : index
    %c0_10 = arith.constant 0 : index
    %c0_11 = arith.constant 0 : index
    %8 = vector.load %arg1[%c0_9, %c2, %c0_10, %c0_11] : memref<1x4x64x225xf32, #tpu.memory_space<vmem>>, vector<1x1x64x225xf32>
    %9 = vector.shape_cast %8 : vector<1x1x64x225xf32> to vector<64x225xf32>
    %cst_12 = arith.constant dense<0.000000e+00> : vector<12x225xf32>
    %10 = tpu.matmul %0, %9, %cst_12 {dimension_numbers = #tpu.dot_dimension_numbers<[1], [0], [0], [1], [0, 0, 1, 1], [], []>} : vector<12x64xf32>, vector<64x225xf32>, vector<12x225xf32> -> vector<12x225xf32>
    %11 = arith.maximumf %7, %10 : vector<12x225xf32>
    %c0_13 = arith.constant 0 : index
    %c3 = arith.constant 3 : index
    %c0_14 = arith.constant 0 : index
    %c0_15 = arith.constant 0 : index
    %12 = vector.load %arg1[%c0_13, %c3, %c0_14, %c0_15] : memref<1x4x64x225xf32, #tpu.memory_space<vmem>>, vector<1x1x64x225xf32>
    %13 = vector.shape_cast %12 : vector<1x1x64x225xf32> to vector<64x225xf32>
    %cst_16 = arith.constant dense<0.000000e+00> : vector<12x225xf32>
    %14 = tpu.matmul %0, %13, %cst_16 {dimension_numbers = #tpu.dot_dimension_numbers<[1], [0], [0], [1], [0, 0, 1, 1], [], []>} : vector<12x64xf32>, vector<64x225xf32>, vector<12x225xf32> -> vector<12x225xf32>
    %15 = arith.maximumf %11, %14 : vector<12x225xf32>
    %c0_17 = arith.constant 0 : index
    %c0_18 = arith.constant 0 : index
    %16 = vector.load %arg3[%c0_17, %c0_18] : memref<12x1xf32, #tpu.memory_space<vmem>>, vector<12x1xf32>
    %17 = vector.broadcast %16 : vector<12x1xf32> to vector<12x225xf32>
    %18 = arith.addf %15, %17 : vector<12x225xf32>
    %c0_19 = arith.constant 0 : index
    %c0_20 = arith.constant 0 : index
    %c0_21 = arith.constant 0 : index
    %19 = vector.load %arg6[%c0_19, %c0_20, %c0_21] : memref<1x12x225xf32, #tpu.memory_space<vmem>>, vector<1x12x225xf32>
    %20 = vector.shape_cast %19 : vector<1x12x225xf32> to vector<12x225xf32>
    %21 = math.tanh %18 : vector<12x225xf32>
    %22 = arith.addf %20, %21 : vector<12x225xf32>
    %c0_22 = arith.constant 0 : index
    %c0_23 = arith.constant 0 : index
    %23 = vector.load %arg4[%c0_22, %c0_23] : memref<12x225xf32, #tpu.memory_space<vmem>>, vector<12x225xf32>
    %24 = arith.cmpf oge, %22, %23 : vector<12x225xf32>
    %cst_24 = arith.constant 0.000000e+00 : f32
    %25 = vector.broadcast %cst_24 : f32 to vector<12x225xf32>
    %26 = arith.select %24, %22, %25 : vector<12x225xi1>, vector<12x225xf32>
    %c0_25 = arith.constant 0 : index
    %c0_26 = arith.constant 0 : index
    %c0_27 = arith.constant 0 : index
    %27 = vector.load %arg7[%c0_25, %c0_26, %c0_27] : memref<1x12x225xf32, #tpu.memory_space<vmem>>, vector<1x12x225xf32>
    %28 = vector.shape_cast %27 : vector<1x12x225xf32> to vector<12x225xf32>
    %29 = vector.shape_cast %26 : vector<12x225xf32> to vector<1x12x225xf32>
    tpu.vector_store %arg7[%c0_25, %c0_26, %c0_27], %29 {strides = array<i32>} : memref<1x12x225xf32, #tpu.memory_space<vmem>>, vector<1x12x225xf32>,
    %cst_28 = arith.constant 2.000000e-01 : f32
    %30 = vector.broadcast %cst_28 : f32 to vector<12x225xf32>
    %31 = arith.mulf %26, %30 : vector<12x225xf32>
    %cst_29 = arith.constant 0.000000e+00 : f32
    %32 = vector.broadcast %cst_29 : f32 to vector<12x225xf32>
    %33 = arith.select %24, %32, %22 : vector<12x225xi1>, vector<12x225xf32>
    %c0_30 = arith.constant 0 : index
    %c0_31 = arith.constant 0 : index
    %34 = vector.load %arg5[%c0_30, %c0_31] : memref<12x225xf32, #tpu.memory_space<vmem>>, vector<12x225xf32>
    %35 = arith.mulf %33, %34 : vector<12x225xf32>
    %36 = arith.addf %31, %35 : vector<12x225xf32>
    %c0_32 = arith.constant 0 : index
    %c0_33 = arith.constant 0 : index
    %c0_34 = arith.constant 0 : index
    %37 = vector.load %arg8[%c0_32, %c0_33, %c0_34] : memref<1x12x225xf32, #tpu.memory_space<vmem>>, vector<1x12x225xf32>
    %38 = vector.shape_cast %37 : vector<1x12x225xf32> to vector<12x225xf32>
    %39 = vector.shape_cast %36 : vector<12x225xf32> to vector<1x12x225xf32>
    tpu.vector_store %arg8[%c0_32, %c0_33, %c0_34], %39 {strides = array<i32>} : memref<1x12x225xf32, #tpu.memory_space<vmem>>, vector<1x12x225xf32>,
    return
  }
  func.func @transform_0(%arg0: i32) -> (i32, i32, i32, i32) {
    %c0_i32 = arith.constant 0 : i32
    %c0_i32_0 = arith.constant 0 : i32
    %c0_i32_1 = arith.constant 0 : i32
    %c0_i32_2 = arith.constant 0 : i32
    return %arg0, %c0_i32, %c0_i32_0, %c0_i32_1 : i32, i32, i32, i32
  }
  func.func @transform_1(%arg0: i32) -> (i32, i32) {
    %c0_i32 = arith.constant 0 : i32
    %c0_i32_0 = arith.constant 0 : i32
    %c0_i32_1 = arith.constant 0 : i32
    return %c0_i32, %c0_i32_0 : i32, i32
  }
  func.func @transform_2(%arg0: i32) -> (i32, i32) {
    %c0_i32 = arith.constant 0 : i32
    %c0_i32_0 = arith.constant 0 : i32
    %c0_i32_1 = arith.constant 0 : i32
    return %c0_i32, %c0_i32_0 : i32, i32
  }
  func.func @transform_3(%arg0: i32) -> (i32, i32) {
    %c0_i32 = arith.constant 0 : i32
    %c0_i32_0 = arith.constant 0 : i32
    %c0_i32_1 = arith.constant 0 : i32
    return %c0_i32, %c0_i32_0 : i32, i32
  }
  func.func @transform_4(%arg0: i32) -> (i32, i32) {
    %c0_i32 = arith.constant 0 : i32
    %c0_i32_0 = arith.constant 0 : i32
    %c0_i32_1 = arith.constant 0 : i32
    return %c0_i32, %c0_i32_0 : i32, i32
  }
  func.func @transform_5(%arg0: i32) -> (i32, i32, i32) {
    %c0_i32 = arith.constant 0 : i32
    %c0_i32_0 = arith.constant 0 : i32
    %c0_i32_1 = arith.constant 0 : i32
    return %arg0, %c0_i32, %c0_i32_0 : i32, i32, i32
  }
  func.func @transform_6(%arg0: i32) -> (i32, i32, i32) {
    %c0_i32 = arith.constant 0 : i32
    %c0_i32_0 = arith.constant 0 : i32
    %c0_i32_1 = arith.constant 0 : i32
    return %arg0, %c0_i32, %c0_i32_0 : i32, i32, i32
  }
  func.func @transform_7(%arg0: i32) -> (i32, i32, i32) {
    %c0_i32 = arith.constant 0 : i32
    %c0_i32_0 = arith.constant 0 : i32
    %c0_i32_1 = arith.constant 0 : i32
    return %arg0, %c0_i32, %c0_i32_0 : i32, i32, i32
  }
}

module attributes {stable_mosaic.version = 11 : i64} {
  func.func @_conv_pool_gate_kernel(%arg0: i32, %arg1: memref<1x4x384x25xf32, #tpu.memory_space<vmem>>, %arg2: memref<32x384xf32, #tpu.memory_space<vmem>>, %arg3: memref<32x1xf32, #tpu.memory_space<vmem>>, %arg4: memref<32x25xf32, #tpu.memory_space<vmem>>, %arg5: memref<32x25xf32, #tpu.memory_space<vmem>>, %arg6: memref<1x32x25xf32, #tpu.memory_space<vmem>>, %arg7: memref<1x32x25xf32, #tpu.memory_space<vmem>>, %arg8: memref<1x32x25xf32, #tpu.memory_space<vmem>>) attributes {dimension_semantics = [#tpu.dimension_semantics<parallel>], iteration_bounds = array<i64: 2>, scalar_prefetch = 0 : i64, scratch_operands = 0 : i64, tpu.core_type = #tpu.core_type<tc>, window_params = [{transform_indices = @transform_0, window_bounds = array<i64: 1, 4, 384, 25>}, {pipeline_mode = #tpu.pipeline_mode<synchronous>, transform_indices = @transform_1, window_bounds = array<i64: 32, 384>}, {pipeline_mode = #tpu.pipeline_mode<synchronous>, transform_indices = @transform_2, window_bounds = array<i64: 32, 1>}, {pipeline_mode = #tpu.pipeline_mode<synchronous>, transform_indices = @transform_3, window_bounds = array<i64: 32, 25>}, {pipeline_mode = #tpu.pipeline_mode<synchronous>, transform_indices = @transform_4, window_bounds = array<i64: 32, 25>}, {transform_indices = @transform_5, window_bounds = array<i64: 1, 32, 25>}, {transform_indices = @transform_6, window_bounds = array<i64: 1, 32, 25>}, {transform_indices = @transform_7, window_bounds = array<i64: 1, 32, 25>}]} {
    %c0 = arith.constant 0 : index
    %c0_0 = arith.constant 0 : index
    %0 = vector.load %arg2[%c0, %c0_0] : memref<32x384xf32, #tpu.memory_space<vmem>>, vector<32x384xf32>
    %c0_1 = arith.constant 0 : index
    %c0_2 = arith.constant 0 : index
    %c0_3 = arith.constant 0 : index
    %c0_4 = arith.constant 0 : index
    %1 = vector.load %arg1[%c0_1, %c0_2, %c0_3, %c0_4] : memref<1x4x384x25xf32, #tpu.memory_space<vmem>>, vector<1x1x384x25xf32>
    %2 = vector.shape_cast %1 : vector<1x1x384x25xf32> to vector<384x25xf32>
    %cst = arith.constant dense<0.000000e+00> : vector<32x25xf32>
    %3 = tpu.matmul %0, %2, %cst {dimension_numbers = #tpu.dot_dimension_numbers<[1], [0], [0], [1], [0, 0, 1, 1], [], []>} : vector<32x384xf32>, vector<384x25xf32>, vector<32x25xf32> -> vector<32x25xf32>
    %c0_5 = arith.constant 0 : index
    %c1 = arith.constant 1 : index
    %c0_6 = arith.constant 0 : index
    %c0_7 = arith.constant 0 : index
    %4 = vector.load %arg1[%c0_5, %c1, %c0_6, %c0_7] : memref<1x4x384x25xf32, #tpu.memory_space<vmem>>, vector<1x1x384x25xf32>
    %5 = vector.shape_cast %4 : vector<1x1x384x25xf32> to vector<384x25xf32>
    %cst_8 = arith.constant dense<0.000000e+00> : vector<32x25xf32>
    %6 = tpu.matmul %0, %5, %cst_8 {dimension_numbers = #tpu.dot_dimension_numbers<[1], [0], [0], [1], [0, 0, 1, 1], [], []>} : vector<32x384xf32>, vector<384x25xf32>, vector<32x25xf32> -> vector<32x25xf32>
    %7 = arith.maximumf %3, %6 : vector<32x25xf32>
    %c0_9 = arith.constant 0 : index
    %c2 = arith.constant 2 : index
    %c0_10 = arith.constant 0 : index
    %c0_11 = arith.constant 0 : index
    %8 = vector.load %arg1[%c0_9, %c2, %c0_10, %c0_11] : memref<1x4x384x25xf32, #tpu.memory_space<vmem>>, vector<1x1x384x25xf32>
    %9 = vector.shape_cast %8 : vector<1x1x384x25xf32> to vector<384x25xf32>
    %cst_12 = arith.constant dense<0.000000e+00> : vector<32x25xf32>
    %10 = tpu.matmul %0, %9, %cst_12 {dimension_numbers = #tpu.dot_dimension_numbers<[1], [0], [0], [1], [0, 0, 1, 1], [], []>} : vector<32x384xf32>, vector<384x25xf32>, vector<32x25xf32> -> vector<32x25xf32>
    %11 = arith.maximumf %7, %10 : vector<32x25xf32>
    %c0_13 = arith.constant 0 : index
    %c3 = arith.constant 3 : index
    %c0_14 = arith.constant 0 : index
    %c0_15 = arith.constant 0 : index
    %12 = vector.load %arg1[%c0_13, %c3, %c0_14, %c0_15] : memref<1x4x384x25xf32, #tpu.memory_space<vmem>>, vector<1x1x384x25xf32>
    %13 = vector.shape_cast %12 : vector<1x1x384x25xf32> to vector<384x25xf32>
    %cst_16 = arith.constant dense<0.000000e+00> : vector<32x25xf32>
    %14 = tpu.matmul %0, %13, %cst_16 {dimension_numbers = #tpu.dot_dimension_numbers<[1], [0], [0], [1], [0, 0, 1, 1], [], []>} : vector<32x384xf32>, vector<384x25xf32>, vector<32x25xf32> -> vector<32x25xf32>
    %15 = arith.maximumf %11, %14 : vector<32x25xf32>
    %c0_17 = arith.constant 0 : index
    %c0_18 = arith.constant 0 : index
    %16 = vector.load %arg3[%c0_17, %c0_18] : memref<32x1xf32, #tpu.memory_space<vmem>>, vector<32x1xf32>
    %17 = vector.broadcast %16 : vector<32x1xf32> to vector<32x25xf32>
    %18 = arith.addf %15, %17 : vector<32x25xf32>
    %c0_19 = arith.constant 0 : index
    %c0_20 = arith.constant 0 : index
    %c0_21 = arith.constant 0 : index
    %19 = vector.load %arg6[%c0_19, %c0_20, %c0_21] : memref<1x32x25xf32, #tpu.memory_space<vmem>>, vector<1x32x25xf32>
    %20 = vector.shape_cast %19 : vector<1x32x25xf32> to vector<32x25xf32>
    %21 = math.tanh %18 : vector<32x25xf32>
    %22 = arith.addf %20, %21 : vector<32x25xf32>
    %c0_22 = arith.constant 0 : index
    %c0_23 = arith.constant 0 : index
    %23 = vector.load %arg4[%c0_22, %c0_23] : memref<32x25xf32, #tpu.memory_space<vmem>>, vector<32x25xf32>
    %24 = arith.cmpf oge, %22, %23 : vector<32x25xf32>
    %cst_24 = arith.constant 0.000000e+00 : f32
    %25 = vector.broadcast %cst_24 : f32 to vector<32x25xf32>
    %26 = arith.select %24, %22, %25 : vector<32x25xi1>, vector<32x25xf32>
    %c0_25 = arith.constant 0 : index
    %c0_26 = arith.constant 0 : index
    %c0_27 = arith.constant 0 : index
    %27 = vector.load %arg7[%c0_25, %c0_26, %c0_27] : memref<1x32x25xf32, #tpu.memory_space<vmem>>, vector<1x32x25xf32>
    %28 = vector.shape_cast %27 : vector<1x32x25xf32> to vector<32x25xf32>
    %29 = vector.shape_cast %26 : vector<32x25xf32> to vector<1x32x25xf32>
    tpu.vector_store %arg7[%c0_25, %c0_26, %c0_27], %29 {strides = array<i32>} : memref<1x32x25xf32, #tpu.memory_space<vmem>>, vector<1x32x25xf32>,
    %cst_28 = arith.constant 2.000000e-01 : f32
    %30 = vector.broadcast %cst_28 : f32 to vector<32x25xf32>
    %31 = arith.mulf %26, %30 : vector<32x25xf32>
    %cst_29 = arith.constant 0.000000e+00 : f32
    %32 = vector.broadcast %cst_29 : f32 to vector<32x25xf32>
    %33 = arith.select %24, %32, %22 : vector<32x25xi1>, vector<32x25xf32>
    %c0_30 = arith.constant 0 : index
    %c0_31 = arith.constant 0 : index
    %34 = vector.load %arg5[%c0_30, %c0_31] : memref<32x25xf32, #tpu.memory_space<vmem>>, vector<32x25xf32>
    %35 = arith.mulf %33, %34 : vector<32x25xf32>
    %36 = arith.addf %31, %35 : vector<32x25xf32>
    %c0_32 = arith.constant 0 : index
    %c0_33 = arith.constant 0 : index
    %c0_34 = arith.constant 0 : index
    %37 = vector.load %arg8[%c0_32, %c0_33, %c0_34] : memref<1x32x25xf32, #tpu.memory_space<vmem>>, vector<1x32x25xf32>
    %38 = vector.shape_cast %37 : vector<1x32x25xf32> to vector<32x25xf32>
    %39 = vector.shape_cast %36 : vector<32x25xf32> to vector<1x32x25xf32>
    tpu.vector_store %arg8[%c0_32, %c0_33, %c0_34], %39 {strides = array<i32>} : memref<1x32x25xf32, #tpu.memory_space<vmem>>, vector<1x32x25xf32>,
    return
  }
  func.func @transform_0(%arg0: i32) -> (i32, i32, i32, i32) {
    %c0_i32 = arith.constant 0 : i32
    %c0_i32_0 = arith.constant 0 : i32
    %c0_i32_1 = arith.constant 0 : i32
    %c0_i32_2 = arith.constant 0 : i32
    return %arg0, %c0_i32, %c0_i32_0, %c0_i32_1 : i32, i32, i32, i32
  }
  func.func @transform_1(%arg0: i32) -> (i32, i32) {
    %c0_i32 = arith.constant 0 : i32
    %c0_i32_0 = arith.constant 0 : i32
    %c0_i32_1 = arith.constant 0 : i32
    return %c0_i32, %c0_i32_0 : i32, i32
  }
  func.func @transform_2(%arg0: i32) -> (i32, i32) {
    %c0_i32 = arith.constant 0 : i32
    %c0_i32_0 = arith.constant 0 : i32
    %c0_i32_1 = arith.constant 0 : i32
    return %c0_i32, %c0_i32_0 : i32, i32
  }
  func.func @transform_3(%arg0: i32) -> (i32, i32) {
    %c0_i32 = arith.constant 0 : i32
    %c0_i32_0 = arith.constant 0 : i32
    %c0_i32_1 = arith.constant 0 : i32
    return %c0_i32, %c0_i32_0 : i32, i32
  }
  func.func @transform_4(%arg0: i32) -> (i32, i32) {
    %c0_i32 = arith.constant 0 : i32
    %c0_i32_0 = arith.constant 0 : i32
    %c0_i32_1 = arith.constant 0 : i32
    return %c0_i32, %c0_i32_0 : i32, i32
  }
  func.func @transform_5(%arg0: i32) -> (i32, i32, i32) {
    %c0_i32 = arith.constant 0 : i32
    %c0_i32_0 = arith.constant 0 : i32
    %c0_i32_1 = arith.constant 0 : i32
    return %arg0, %c0_i32, %c0_i32_0 : i32, i32, i32
  }
  func.func @transform_6(%arg0: i32) -> (i32, i32, i32) {
    %c0_i32 = arith.constant 0 : i32
    %c0_i32_0 = arith.constant 0 : i32
    %c0_i32_1 = arith.constant 0 : i32
    return %arg0, %c0_i32, %c0_i32_0 : i32, i32, i32
  }
  func.func @transform_7(%arg0: i32) -> (i32, i32, i32) {
    %c0_i32 = arith.constant 0 : i32
    %c0_i32_0 = arith.constant 0 : i32
    %c0_i32_1 = arith.constant 0 : i32
    return %arg0, %c0_i32, %c0_i32_0 : i32, i32, i32
  }
}

module attributes {stable_mosaic.version = 11 : i64} {
  func.func @_fc_gate_kernel(%arg0: memref<2x2700xf32, #tpu.memory_space<vmem>>, %arg1: memref<2x800xf32, #tpu.memory_space<vmem>>, %arg2: memref<2700x10xf32, #tpu.memory_space<vmem>>, %arg3: memref<800x10xf32, #tpu.memory_space<vmem>>, %arg4: memref<1x10xf32, #tpu.memory_space<vmem>>, %arg5: memref<1x10xf32, #tpu.memory_space<vmem>>, %arg6: memref<1x10xf32, #tpu.memory_space<vmem>>, %arg7: memref<2x10xf32, #tpu.memory_space<vmem>>, %arg8: memref<2x10xf32, #tpu.memory_space<vmem>>, %arg9: memref<2x10xf32, #tpu.memory_space<vmem>>) attributes {dimension_semantics = [], scalar_prefetch = 0 : i64, scratch_operands = 0 : i64, tpu.core_type = #tpu.core_type<tc>} {
    %c0 = arith.constant 0 : index
    %c0_0 = arith.constant 0 : index
    %0 = vector.load %arg0[%c0, %c0_0] : memref<2x2700xf32, #tpu.memory_space<vmem>>, vector<2x2700xf32>
    %c0_1 = arith.constant 0 : index
    %c0_2 = arith.constant 0 : index
    %1 = vector.load %arg2[%c0_1, %c0_2] : memref<2700x10xf32, #tpu.memory_space<vmem>>, vector<2700x10xf32>
    %cst = arith.constant dense<0.000000e+00> : vector<2x10xf32>
    %2 = tpu.matmul %0, %1, %cst {dimension_numbers = #tpu.dot_dimension_numbers<[1], [0], [0], [1], [0, 0, 1, 1], [], []>} : vector<2x2700xf32>, vector<2700x10xf32>, vector<2x10xf32> -> vector<2x10xf32>
    %c0_3 = arith.constant 0 : index
    %c0_4 = arith.constant 0 : index
    %3 = vector.load %arg1[%c0_3, %c0_4] : memref<2x800xf32, #tpu.memory_space<vmem>>, vector<2x800xf32>
    %c0_5 = arith.constant 0 : index
    %c0_6 = arith.constant 0 : index
    %4 = vector.load %arg3[%c0_5, %c0_6] : memref<800x10xf32, #tpu.memory_space<vmem>>, vector<800x10xf32>
    %cst_7 = arith.constant dense<0.000000e+00> : vector<2x10xf32>
    %5 = tpu.matmul %3, %4, %cst_7 {dimension_numbers = #tpu.dot_dimension_numbers<[1], [0], [0], [1], [0, 0, 1, 1], [], []>} : vector<2x800xf32>, vector<800x10xf32>, vector<2x10xf32> -> vector<2x10xf32>
    %6 = arith.addf %2, %5 : vector<2x10xf32>
    %c0_8 = arith.constant 0 : index
    %c0_9 = arith.constant 0 : index
    %7 = vector.load %arg4[%c0_8, %c0_9] : memref<1x10xf32, #tpu.memory_space<vmem>>, vector<1x10xf32>
    %8 = vector.broadcast %7 : vector<1x10xf32> to vector<2x10xf32>
    %9 = arith.addf %6, %8 : vector<2x10xf32>
    %c0_10 = arith.constant 0 : index
    %c0_11 = arith.constant 0 : index
    %10 = vector.load %arg7[%c0_10, %c0_11] : memref<2x10xf32, #tpu.memory_space<vmem>>, vector<2x10xf32>
    %11 = math.tanh %9 : vector<2x10xf32>
    %12 = arith.addf %10, %11 : vector<2x10xf32>
    %c0_12 = arith.constant 0 : index
    %c0_13 = arith.constant 0 : index
    %13 = vector.load %arg5[%c0_12, %c0_13] : memref<1x10xf32, #tpu.memory_space<vmem>>, vector<1x10xf32>
    %14 = vector.broadcast %13 : vector<1x10xf32> to vector<2x10xf32>
    %15 = arith.cmpf oge, %12, %14 : vector<2x10xf32>
    %cst_14 = arith.constant 0.000000e+00 : f32
    %16 = vector.broadcast %cst_14 : f32 to vector<2x10xf32>
    %17 = arith.select %15, %12, %16 : vector<2x10xi1>, vector<2x10xf32>
    %c0_15 = arith.constant 0 : index
    %c0_16 = arith.constant 0 : index
    %18 = vector.load %arg8[%c0_15, %c0_16] : memref<2x10xf32, #tpu.memory_space<vmem>>, vector<2x10xf32>
    tpu.vector_store %arg8[%c0_15, %c0_16], %17 {strides = array<i32>} : memref<2x10xf32, #tpu.memory_space<vmem>>, vector<2x10xf32>,
    %cst_17 = arith.constant 2.000000e-01 : f32
    %19 = vector.broadcast %cst_17 : f32 to vector<2x10xf32>
    %20 = arith.mulf %17, %19 : vector<2x10xf32>
    %cst_18 = arith.constant 0.000000e+00 : f32
    %21 = vector.broadcast %cst_18 : f32 to vector<2x10xf32>
    %22 = arith.select %15, %21, %12 : vector<2x10xi1>, vector<2x10xf32>
    %c0_19 = arith.constant 0 : index
    %c0_20 = arith.constant 0 : index
    %23 = vector.load %arg6[%c0_19, %c0_20] : memref<1x10xf32, #tpu.memory_space<vmem>>, vector<1x10xf32>
    %24 = vector.broadcast %23 : vector<1x10xf32> to vector<2x10xf32>
    %25 = arith.mulf %22, %24 : vector<2x10xf32>
    %26 = arith.addf %20, %25 : vector<2x10xf32>
    %c0_21 = arith.constant 0 : index
    %c0_22 = arith.constant 0 : index
    %27 = vector.load %arg9[%c0_21, %c0_22] : memref<2x10xf32, #tpu.memory_space<vmem>>, vector<2x10xf32>
    tpu.vector_store %arg9[%c0_21, %c0_22], %26 {strides = array<i32>} : memref<2x10xf32, #tpu.memory_space<vmem>>, vector<2x10xf32>,
    return
  }
}

</mosaic_0001>

<llo_original>
// kernel: net_forward.3
$region0: #{net_forward.3}
  #allocation0 [shape = 'u32[]', space=smem, size = 0x4, offset = 0x4, fixed_abs, tag = 'smem constant byte address 0x4 - core index']
  #allocation1 [shape = 'u32[144,128]{1,0:T(1,128)}', space=vmem, size = 0x12000, scoped, tag = 'internal scratch']
  %s0 = inlined_call_operand.vmem [shape: f32[2,4,64,225], index: 0, kind: input, shape index: {}]
  %s1 = inlined_call_operand.vmem [shape: f32[12,64], index: 1, kind: input, shape index: {}]
  %s2 = inlined_call_operand.vmem [shape: f32[12,1], index: 2, kind: input, shape index: {}]
  %s3 = inlined_call_operand.vmem [shape: f32[12,225], index: 3, kind: input, shape index: {}]
  %s4 = inlined_call_operand.vmem [shape: f32[12,225], index: 4, kind: input, shape index: {}]
  %s5 = inlined_call_operand.vmem [shape: f32[2,12,225], index: 5, kind: input, shape index: {}]
  %s6 = inlined_call_operand.vmem [shape: f32[2,12,225], index: 6, kind: output, shape index: {0}]
  %s7 = inlined_call_operand.vmem [shape: f32[2,12,225], index: 7, kind: output, shape index: {1}]
  %8 = xla_tuple %s6, %s7
  %s9 = sld [smem:[#allocation0]]
  $region65: #{net_forward.3} parent=0
    _
  %s11 = ssub.s32 1, %s9
  %s12 = scalar_select 0, %s11, %s9
  loop: start=0, step=1, limit=4
  $region2: #{net_forward.3} parent=0 // loop_pre_header
    _
  $region3: #{net_forward.3} parent=0 // loop_header
    %s14 = sphi 0, %s18
    %p15 = scmp.ge.s32.totalorder %s14, 4
    %s24 = sphi 0, %s26
    %s27 = sphi 0, %s24
    %s28 = sphi 0, %s27
    %s44 = sphi 0, %s28
    %s48 = sphi 0, %s48
    %s50 = sphi 0, %s48
    %s51 = sphi 0, %s50
    %s65 = sphi 0, %s51
    %s69 = sphi 0, %s69
    %s71 = sphi 0, %s69
    %s72 = sphi 0, %s71
    %s86 = sphi 0, %s72
    %s90 = sphi 0, %s90
    %s92 = sphi 0, %s90
    %s93 = sphi 0, %s92
    %s107 = sphi 0, %s93
    %s111 = sphi 0, %s111
    %s113 = sphi 0, %s111
    %s114 = sphi 0, %s113
    %s128 = sphi 0, %s114
    %s134 = sphi 0, %s136
    %s137 = sphi 0, %s134
    %s138 = sphi 0, %s137
    %s154 = sphi 0, %s138
    %s160 = sphi 0, %s162
    %s163 = sphi 0, %s160
    %s164 = sphi 0, %s163
    %s180 = sphi 0, %s164
    %s186 = sphi 0, %s188
    %s189 = sphi 0, %s186
    %s190 = sphi 0, %s189
    %s206 = sphi 0, %s190
  $region4: #{net_forward.3} parent=0 // loop_header_branch
    %17 = sbr.rel (%p15) target = $region8
  $region5: #{net_forward.3} parent=0 // loop_body
    %s19 = ssub.s32 %s14, 1
    %s20 = ssub.s32 %s14, 2
    %s21 = sadd.s32 %s14, 1
    %s22 = ssub.s32 %s14, %s21
    %p23 = scmp.eq.s32.totalorder %s22, 0
    %s25 = sadd.s32 %s24, 1
    %s26 = scalar_select %p23, %s24, %s25
    %p29 = pneg %p23
    %p30 = scmp.eq.s32.totalorder %s14, 1
    %p31 = por %p29, %p30
    %p32 = scmp.ne.s32.totalorder %s24, %s27
    %p33 = scmp.eq.s32.totalorder %s14, 0
    %p34 = por %p32, %p33
    %p35 = scmp.ne.s32.totalorder %s24, %s27
    %p36 = scmp.eq.s32.totalorder %s19, 1
    %p37 = por %p35, %p36
    %p38 = scmp.ne.s32.totalorder %s27, %s28
    %p39 = scmp.eq.s32.totalorder %s19, 0
    %p40 = por %p38, %p39
    %p41 = scmp.ne.s32.totalorder %s27, %s28
    %p42 = scmp.eq.s32.totalorder %s20, 1
    %p43 = por %p41, %p42
    %p45 = scmp.ne.s32.totalorder %s28, %s44
    %p46 = scmp.eq.s32.totalorder %s20, 0
    %p47 = por %p45, %p46
    %s49 = sadd.s32 %s48, 1
    %p52 = scmp.eq.s32.totalorder %s14, 1
    %p53 = scmp.ne.s32.totalorder %s48, %s50
    %p54 = scmp.eq.s32.totalorder %s14, 0
    %p55 = por %p53, %p54
    %p56 = scmp.ne.s32.totalorder %s48, %s50
    %p57 = scmp.eq.s32.totalorder %s19, 1
    %p58 = por %p56, %p57
    %p59 = scmp.ne.s32.totalorder %s50, %s51
    %p60 = scmp.eq.s32.totalorder %s19, 0
    %p61 = por %p59, %p60
    %p62 = scmp.ne.s32.totalorder %s50, %s51
    %p63 = scmp.eq.s32.totalorder %s20, 1
    %p64 = por %p62, %p63
    %p66 = scmp.ne.s32.totalorder %s51, %s65
    %p67 = scmp.eq.s32.totalorder %s20, 0
    %p68 = por %p66, %p67
    %s70 = sadd.s32 %s69, 1
    %p73 = scmp.eq.s32.totalorder %s14, 1
    %p74 = scmp.ne.s32.totalorder %s69, %s71
    %p75 = scmp.eq.s32.totalorder %s14, 0
    %p76 = por %p74, %p75
    %p77 = scmp.ne.s32.totalorder %s69, %s71
    %p78 = scmp.eq.s32.totalorder %s19, 1
    %p79 = por %p77, %p78
    %p80 = scmp.ne.s32.totalorder %s71, %s72
    %p81 = scmp.eq.s32.totalorder %s19, 0
    %p82 = por %p80, %p81
    %p83 = scmp.ne.s32.totalorder %s71, %s72
    %p84 = scmp.eq.s32.totalorder %s20, 1
    %p85 = por %p83, %p84
    %p87 = scmp.ne.s32.totalorder %s72, %s86
    %p88 = scmp.eq.s32.totalorder %s20, 0
    %p89 = por %p87, %p88
    %s91 = sadd.s32 %s90, 1
    %p94 = scmp.eq.s32.totalorder %s14, 1
    %p95 = scmp.ne.s32.totalorder %s90, %s92
    %p96 = scmp.eq.s32.totalorder %s14, 0
    %p97 = por %p95, %p96
    %p98 = scmp.ne.s32.totalorder %s90, %s92
    %p99 = scmp.eq.s32.totalorder %s19, 1
    %p100 = por %p98, %p99
    %p101 = scmp.ne.s32.totalorder %s92, %s93
    %p102 = scmp.eq.s32.totalorder %s19, 0
    %p103 = por %p101, %p102
    %p104 = scmp.ne.s32.totalorder %s92, %s93
    %p105 = scmp.eq.s32.totalorder %s20, 1
    %p106 = por %p104, %p105
    %p108 = scmp.ne.s32.totalorder %s93, %s107
    %p109 = scmp.eq.s32.totalorder %s20, 0
    %p110 = por %p108, %p109
    %s112 = sadd.s32 %s111, 1
    %p115 = scmp.eq.s32.totalorder %s14, 1
    %p116 = scmp.ne.s32.totalorder %s111, %s113
    %p117 = scmp.eq.s32.totalorder %s14, 0
    %p118 = por %p116, %p117
    %p119 = scmp.ne.s32.totalorder %s111, %s113
    %p120 = scmp.eq.s32.totalorder %s19, 1
    %p121 = por %p119, %p120
    %p122 = scmp.ne.s32.totalorder %s113, %s114
    %p123 = scmp.eq.s32.totalorder %s19, 0
    %p124 = por %p122, %p123
    %p125 = scmp.ne.s32.totalorder %s113, %s114
    %p126 = scmp.eq.s32.totalorder %s20, 1
    %p127 = por %p125, %p126
    %p129 = scmp.ne.s32.totalorder %s114, %s128
    %p130 = scmp.eq.s32.totalorder %s20, 0
    %p131 = por %p129, %p130
    %s132 = ssub.s32 %s14, %s21
    %p133 = scmp.eq.s32.totalorder %s132, 0
    %s135 = sadd.s32 %s134, 1
    %s136 = scalar_select %p133, %s134, %s135
    %p139 = pneg %p133
    %p140 = scmp.eq.s32.totalorder %s14, 1
    %p141 = por %p139, %p140
    %p142 = scmp.ne.s32.totalorder %s134, %s137
    %p143 = scmp.eq.s32.totalorder %s14, 0
    %p144 = por %p142, %p143
    %p145 = scmp.ne.s32.totalorder %s134, %s137
    %p146 = scmp.eq.s32.totalorder %s19, 1
    %p147 = por %p145, %p146
    %p148 = scmp.ne.s32.totalorder %s137, %s138
    %p149 = scmp.eq.s32.totalorder %s19, 0
    %p150 = por %p148, %p149
    %p151 = scmp.ne.s32.totalorder %s137, %s138
    %p152 = scmp.eq.s32.totalorder %s20, 1
    %p153 = por %p151, %p152
    %p155 = scmp.ne.s32.totalorder %s138, %s154
    %p156 = scmp.eq.s32.totalorder %s20, 0
    %p157 = por %p155, %p156
    %s158 = ssub.s32 %s14, %s21
    %p159 = scmp.eq.s32.totalorder %s158, 0
    %s161 = sadd.s32 %s160, 1
    %s162 = scalar_select %p159, %s160, %s161
    %p165 = pneg %p159
    %p166 = scmp.eq.s32.totalorder %s14, 1
    %p167 = por %p165, %p166
    %p168 = scmp.ne.s32.totalorder %s160, %s163
    %p169 = scmp.eq.s32.totalorder %s14, 0
    %p170 = por %p168, %p169
    %p171 = scmp.ne.s32.totalorder %s160, %s163
    %p172 = scmp.eq.s32.totalorder %s19, 1
    %p173 = por %p171, %p172
    %p174 = scmp.ne.s32.totalorder %s163, %s164
    %p175 = scmp.eq.s32.totalorder %s19, 0
    %p176 = por %p174, %p175
    %p177 = scmp.ne.s32.totalorder %s163, %s164
    %p178 = scmp.eq.s32.totalorder %s20, 1
    %p179 = por %p177, %p178
    %p181 = scmp.ne.s32.totalorder %s164, %s180
    %p182 = scmp.eq.s32.totalorder %s20, 0
    %p183 = por %p181, %p182
    %s184 = ssub.s32 %s14, %s21
    %p185 = scmp.eq.s32.totalorder %s184, 0
    %s187 = sadd.s32 %s186, 1
    %s188 = scalar_select %p185, %s186, %s187
    %p191 = pneg %p185
    %p192 = scmp.eq.s32.totalorder %s14, 1
    %p193 = por %p191, %p192
    %p194 = scmp.ne.s32.totalorder %s186, %s189
    %p195 = scmp.eq.s32.totalorder %s14, 0
    %p196 = por %p194, %p195
    %p197 = scmp.ne.s32.totalorder %s186, %s189
    %p198 = scmp.eq.s32.totalorder %s19, 1
    %p199 = por %p197, %p198
    %p200 = scmp.ne.s32.totalorder %s189, %s190
    %p201 = scmp.eq.s32.totalorder %s19, 0
    %p202 = por %p200, %p201
    %p203 = scmp.ne.s32.totalorder %s189, %s190
    %p204 = scmp.eq.s32.totalorder %s20, 1
    %p205 = por %p203, %p204
    %p207 = scmp.ne.s32.totalorder %s190, %s206
    %p208 = scmp.eq.s32.totalorder %s20, 0
    %p209 = por %p207, %p208
    %p210 = scmp.le.s32.totalorder 1, %s14
    %p211 = scmp.lt.s32.totalorder %s14, 3
    %p212 = pnand %p210, %p211
    %p213 = pneg %p212
    // Predicated region
    $region9: #{net_forward.3} parent=5 // pred_check
      _
    $region10: #{net_forward.3} parent=5 // pred_check_branch
      %215 = sbr.rel (%p212) target = $region12
    $region11: #{net_forward.3} parent=5 // pred_region
      %s216 = ssub.s32 %s14, 1
      // Predicated region
      $region13: #{net_forward.3} parent=11 // pred_check
        %p217 = pneg %p61
      $region14: #{net_forward.3} parent=11 // pred_check_branch
        %219 = sbr.rel (%p217) target = $region16
      $region15: #{net_forward.3} parent=11 // pred_region
        _
      $region16: #{net_forward.3} parent=11 // pred_fallthru
        _
      // Predicated region
      $region17: #{net_forward.3} parent=11 // pred_check
        %p220 = pneg %p82
      $region18: #{net_forward.3} parent=11 // pred_check_branch
        %222 = sbr.rel (%p220) target = $region20
      $region19: #{net_forward.3} parent=11 // pred_region
        _
      $region20: #{net_forward.3} parent=11 // pred_fallthru
        _
      // Predicated region
      $region21: #{net_forward.3} parent=11 // pred_check
        %p223 = pneg %p103
      $region22: #{net_forward.3} parent=11 // pred_check_branch
        %225 = sbr.rel (%p223) target = $region24
      $region23: #{net_forward.3} parent=11 // pred_region
        _
      $region24: #{net_forward.3} parent=11 // pred_fallthru
        _
      // Predicated region
      $region25: #{net_forward.3} parent=11 // pred_check
        %p226 = pneg %p124
      $region26: #{net_forward.3} parent=11 // pred_check_branch
        %228 = sbr.rel (%p226) target = $region28
      $region27: #{net_forward.3} parent=11 // pred_region
        _
      $region28: #{net_forward.3} parent=11 // pred_fallthru
        _
    $region12: #{net_forward.3} parent=5 // pred_fallthru
      _
    %p229 = scmp.lt.s32.totalorder %s14, 2
    // Predicated region
    $region29: #{net_forward.3} parent=5 // pred_check
      %p230 = pneg %p229
    $region30: #{net_forward.3} parent=5 // pred_check_branch
      %232 = sbr.rel (%p230) target = $region32
    $region31: #{net_forward.3} parent=5 // pred_region
      // Predicated region
      $region33: #{net_forward.3} parent=31 // pred_check
        %p233 = pneg %p34
      $region34: #{net_forward.3} parent=31 // pred_check_branch
        %235 = sbr.rel (%p233) target = $region36
      $region35: #{net_forward.3} parent=31 // pred_region
        %p236 = scmp.lt.s32.totalorder %s14, 1
        %s237 = scalar_select %p236, %s14, 1
        %s238 = smul.addr %s237, 64
        %s239 = smul.addr %s238, 8
        %s240 = scalar_lea.vmem %s0, %s239
      $region36: #{net_forward.3} parent=31 // pred_fallthru
        _
      // Predicated region
      $region37: #{net_forward.3} parent=31 // pred_check
        %p241 = pneg %p144
      $region38: #{net_forward.3} parent=31 // pred_check_branch
        %243 = sbr.rel (%p241) target = $region40
      $region39: #{net_forward.3} parent=31 // pred_region
        %p244 = scmp.lt.s32.totalorder %s14, 1
        %s245 = scalar_select %p244, %s14, 1
        %s246 = smul.addr %s245, 4
        %s247 = smul.addr %s246, 8
        %s248 = scalar_lea.vmem %s5, %s247
      $region40: #{net_forward.3} parent=31 // pred_fallthru
        _
    $region32: #{net_forward.3} parent=5 // pred_fallthru
      _
    %p249 = scmp.le.s32.totalorder 1, %s14
    %p250 = scmp.lt.s32.totalorder %s14, 3
    %p251 = pnand %p249, %p250
    %p252 = pneg %p251
    // Predicated region
    $region41: #{net_forward.3} parent=5 // pred_check
      _
    $region42: #{net_forward.3} parent=5 // pred_check_branch
      %254 = sbr.rel (%p251) target = $region44
    $region43: #{net_forward.3} parent=5 // pred_region
      %s255 = ssub.s32 %s14, 1
      %p256 = scmp.lt.s32.totalorder %s19, 1
      %s257 = scalar_select %p256, %s19, 1
      %s258 = smul.addr %s257, 64
      %s259 = smul.addr %s258, 8
      %s260 = scalar_lea.vmem %s0, %s259
      %p261 = pneg %p40
      %p262 = pneg %p37
      %p263 = pneg %p61
      %p264 = pneg %p58
      %p265 = pneg %p82
      %p266 = pneg %p79
      %p267 = pneg %p103
      %p268 = pneg %p100
      %p269 = pneg %p124
      %p270 = pneg %p121
      %p271 = scmp.lt.s32.totalorder %s19, 1
      %s272 = scalar_select %p271, %s19, 1
      %s273 = smul.addr %s272, 4
      %s274 = smul.addr %s273, 8
      %s275 = scalar_lea.vmem %s5, %s274
      %p276 = pneg %p150
      %p277 = pneg %p147
      %p278 = pneg %p176
      %p279 = pneg %p173
      %p280 = scmp.lt.s32.totalorder %s19, 1
      %s281 = scalar_select %p280, %s19, 1
      %s282 = smul.addr %s281, 4
      %s283 = smul.addr %s282, 8
      %s284 = scalar_lea.vmem %s6, %s283
      %p285 = pneg %p202
      %p286 = pneg %p199
      %p287 = scmp.lt.s32.totalorder %s19, 1
      %s288 = scalar_select %p287, %s19, 1
      %s289 = smul.addr %s288, 4
      %s290 = smul.addr %s289, 8
      %s291 = scalar_lea.vmem %s7, %s290
      %p292 = scmp.lt.s32.totalorder %s19, 1
      %s293 = scalar_select %p292, %s19, 1
      %s294 = smul.addr %s293, 64
      %s295 = smul.addr %s294, 8
      %s296 = scalar_lea.vmem %s0, %s295
      %p297 = scmp.lt.s32.totalorder %s19, 1
      %s298 = scalar_select %p297, %s19, 1
      %s299 = smul.addr %s298, 4
      %s300 = smul.addr %s299, 8
      %s301 = scalar_lea.vmem %s5, %s300
      %p302 = scmp.lt.s32.totalorder %s19, 1
      %s303 = scalar_select %p302, %s19, 1
      %s304 = smul.addr %s303, 4
      %s305 = smul.addr %s304, 8
      %s306 = scalar_lea.vmem %s6, %s305
      %p307 = scmp.lt.s32.totalorder %s19, 1
      %s308 = scalar_select %p307, %s19, 1
      %s309 = smul.addr %s308, 4
      %s310 = smul.addr %s309, 8
      %s311 = scalar_lea.vmem %s7, %s310
      %v312 = vld [vmem:[%s1] sm:$0xff]
      %v313 = vld [vmem:[%s1 + $0x8] sm:$0xf]
      %v314 = vld [vmem:[%s296] sm:$0xff]
      %v315 = vld [vmem:[%s296 + $0x8] sm:$0xff]
      %v316 = vld [vmem:[%s296 + $0x10] sm:$0xff]
      %v317 = vld [vmem:[%s296 + $0x18] sm:$0xff]
      %v318 = vld [vmem:[%s296 + $0x20] sm:$0xff]
      %v319 = vld [vmem:[%s296 + $0x28] sm:$0xff]
      %v320 = vld [vmem:[%s296 + $0x30] sm:$0xff]
      %v321 = vld [vmem:[%s296 + $0x38] sm:$0xff]
      %v322 = vld [vmem:[%s296 + $0x40] sm:$0xff]
      %v323 = vld [vmem:[%s296 + $0x48] sm:$0xff]
      %v324 = vld [vmem:[%s296 + $0x50] sm:$0xff]
      %v325 = vld [vmem:[%s296 + $0x58] sm:$0xff]
      %v326 = vld [vmem:[%s296 + $0x60] sm:$0xff]
      %v327 = vld [vmem:[%s296 + $0x68] sm:$0xff]
      %v328 = vld [vmem:[%s296 + $0x70] sm:$0xff]
      %v329 = vld [vmem:[%s296 + $0x78] sm:$0xff]
      %vm330 = vcmask 523264
      %v332 = vsel %vm330, %v312, 0
      %v335 = vsel %vm330, %v313, 0
      %337 = vmatprep.subr.mxu0 %v315
      %338 = vmatpush1.msra.mxu0 %v314
      %339 = vmatprep.subr.mxu0 %v317
      %340 = vmatpush1.msra.mxu0 %v316
      %341 = vmatprep.subr.mxu0 %v319
      %342 = vmatpush1.msra.mxu0 %v318
      %343 = vmatprep.subr.mxu0 %v321
      %344 = vmatpush1.msra.mxu0 %v320
      %345 = vmatprep.subr.mxu0 %v323
      %346 = vmatpush1.msra.mxu0 %v322
      %347 = vmatprep.subr.mxu0 %v325
      %348 = vmatpush1.msra.mxu0 %v324
      %349 = vmatprep.subr.mxu0 %v327
      %350 = vmatpush1.msra.mxu0 %v326
      %351 = vmatprep.subr.mxu0 %v329
      %352 = vmatpush1.msra.mxu0 %v328
      %353 = vmatprep.subr.mxu0 0.0
      %354 = vmatpush1.msra.mxu0 0.0
      %355 = vmatprep.subr.mxu0 0.0
      %356 = vmatpush1.msra.mxu0 0.0
      %357 = vmatprep.subr.mxu0 0.0
      %358 = vmatpush1.msra.mxu0 0.0
      %359 = vmatprep.subr.mxu0 0.0
      %360 = vmatpush1.msra.mxu0 0.0
      %361 = vmatprep.subr.mxu0 0.0
      %362 = vmatpush1.msra.mxu0 0.0
      %363 = vmatprep.subr.mxu0 0.0
      %364 = vmatpush1.msra.mxu0 0.0
      %365 = vmatprep.subr.mxu0 0.0
      %366 = vmatpush1.msra.mxu0 0.0
      %367 = vmatprep.subr.mxu0 0.0
      %368 = vmatpush1.msra.mxu0 0.0
      %369 = vmatprep.subr.mxu0 0.0
      %370 = vmatpush1.msra.mxu0 0.0
      %371 = vmatprep.subr.mxu0 0.0
      %372 = vmatpush1.msra.mxu0 0.0
      %373 = vmatprep.subr.mxu0 0.0
      %374 = vmatpush1.msra.mxu0 0.0
      %375 = vmatprep.subr.mxu0 0.0
      %376 = vmatpush1.msra.mxu0 0.0
      %377 = vmatprep.subr.mxu0 0.0
      %378 = vmatpush1.msra.mxu0 0.0
      %379 = vmatprep.subr.mxu0 0.0
      %380 = vmatpush1.msra.mxu0 0.0
      %381 = vmatprep.subr.mxu0 0.0
      %382 = vmatpush1.msra.mxu0 0.0
      %383 = vmatprep.subr.mxu0 0.0
      %384 = vmatpush1.msra.mxu0 0.0
      %385 = vmatprep.subr.mxu0 0.0
      %386 = vmatpush1.msra.mxu0 0.0
      %387 = vmatprep.subr.mxu0 0.0
      %388 = vmatpush1.msra.mxu0 0.0
      %389 = vmatprep.subr.mxu0 0.0
      %390 = vmatpush1.msra.mxu0 0.0
      %391 = vmatprep.subr.mxu0 0.0
      %392 = vmatpush1.msra.mxu0 0.0
      %393 = vmatprep.subr.mxu0 0.0
      %394 = vmatpush1.msra.mxu0 0.0
      %395 = vmatprep.subr.mxu0 0.0
      %396 = vmatpush1.msra.mxu0 0.0
      %397 = vmatprep.subr.mxu0 0.0
      %398 = vmatpush1.msra.mxu0 0.0
      %399 = vmatprep.subr.mxu0 0.0
      %400 = vmatpush1.msra.mxu0 0.0
      %401 = vmatprep.mubr.f32.mxu0 0.0
      %402 = vmatmul.mubr.f32.gmra.mrb[0].mxu0 %v332
      %v403 = vpop.f32.mrb[0].mxu0
      %v404 = vadd.f32 0.0, %v403
      %v405 = vpop.f32.mrb[0].mxu0
      %v406 = vadd.f32 0.0, %v405
      %407 = vmatprep.mubr.f32.mxu0 0.0
      %408 = vmatmul.mubr.f32.gmra.mrb[0].mxu0 %v335
      %v409 = vpop.f32.mrb[0].mxu0
      %v410 = vadd.f32 0.0, %v409
      %v411 = vpop.f32.mrb[0].mxu0
      %v412 = vadd.f32 0.0, %v411
      %413 = vdwg.mxu0
      %s414 = scalar_lea.vmem %s296, 128
      %v415 = vld [vmem:[%s414] sm:$0xff]
      %v416 = vld [vmem:[%s414 + $0x8] sm:$0xff]
      %v417 = vld [vmem:[%s414 + $0x10] sm:$0xff]
      %v418 = vld [vmem:[%s414 + $0x18] sm:$0xff]
      %v419 = vld [vmem:[%s414 + $0x20] sm:$0xff]
      %v420 = vld [vmem:[%s414 + $0x28] sm:$0xff]
      %v421 = vld [vmem:[%s414 + $0x30] sm:$0xff]
      %v422 = vld [vmem:[%s414 + $0x38] sm:$0xff]
      %v423 = vld [vmem:[%s414 + $0x40] sm:$0xff]
      %v424 = vld [vmem:[%s414 + $0x48] sm:$0xff]
      %v425 = vld [vmem:[%s414 + $0x50] sm:$0xff]
      %v426 = vld [vmem:[%s414 + $0x58] sm:$0xff]
      %v427 = vld [vmem:[%s414 + $0x60] sm:$0xff]
      %v428 = vld [vmem:[%s414 + $0x68] sm:$0xff]
      %v429 = vld [vmem:[%s414 + $0x70] sm:$0xff]
      %v430 = vld [vmem:[%s414 + $0x78] sm:$0xff]
      %431 = vmatprep.subr.mxu0 %v416
      %432 = vmatpush1.msra.mxu0 %v415
      %433 = vmatprep.subr.mxu0 %v418
      %434 = vmatpush1.msra.mxu0 %v417
      %435 = vmatprep.subr.mxu0 %v420
      %436 = vmatpush1.msra.mxu0 %v419
      %437 = vmatprep.subr.mxu0 %v422
      %438 = vmatpush1.msra.mxu0 %v421
      %439 = vmatprep.subr.mxu0 %v424
      %440 = vmatpush1.msra.mxu0 %v423
      %441 = vmatprep.subr.mxu0 %v426
      %442 = vmatpush1.msra.mxu0 %v425
      %443 = vmatprep.subr.mxu0 %v428
      %444 = vmatpush1.msra.mxu0 %v427
      %445 = vmatprep.subr.mxu0 %v430
      %446 = vmatpush1.msra.mxu0 %v429
      %447 = vmatprep.subr.mxu0 0.0
      %448 = vmatpush1.msra.mxu0 0.0
      %449 = vmatprep.subr.mxu0 0.0
      %450 = vmatpush1.msra.mxu0 0.0
      %451 = vmatprep.subr.mxu0 0.0
      %452 = vmatpush1.msra.mxu0 0.0
      %453 = vmatprep.subr.mxu0 0.0
      %454 = vmatpush1.msra.mxu0 0.0
      %455 = vmatprep.subr.mxu0 0.0
      %456 = vmatpush1.msra.mxu0 0.0
      %457 = vmatprep.subr.mxu0 0.0
      %458 = vmatpush1.msra.mxu0 0.0
      %459 = vmatprep.subr.mxu0 0.0
      %460 = vmatpush1.msra.mxu0 0.0
      %461 = vmatprep.subr.mxu0 0.0
      %462 = vmatpush1.msra.mxu0 0.0
      %463 = vmatprep.subr.mxu0 0.0
      %464 = vmatpush1.msra.mxu0 0.0
      %465 = vmatprep.subr.mxu0 0.0
      %466 = vmatpush1.msra.mxu0 0.0
      %467 = vmatprep.subr.mxu0 0.0
      %468 = vmatpush1.msra.mxu0 0.0
      %469 = vmatprep.subr.mxu0 0.0
      %470 = vmatpush1.msra.mxu0 0.0
      %471 = vmatprep.subr.mxu0 0.0
      %472 = vmatpush1.msra.mxu0 0.0
      %473 = vmatprep.subr.mxu0 0.0
      %474 = vmatpush1.msra.mxu0 0.0
      %475 = vmatprep.subr.mxu0 0.0
      %476 = vmatpush1.msra.mxu0 0.0
      %477 = vmatprep.subr.mxu0 0.0
      %478 = vmatpush1.msra.mxu0 0.0
      %479 = vmatprep.subr.mxu0 0.0
      %480 = vmatpush1.msra.mxu0 0.0
      %481 = vmatprep.subr.mxu0 0.0
      %482 = vmatpush1.msra.mxu0 0.0
      %483 = vmatprep.subr.mxu0 0.0
      %484 = vmatpush1.msra.mxu0 0.0
      %485 = vmatprep.subr.mxu0 0.0
      %486 = vmatpush1.msra.mxu0 0.0
      %487 = vmatprep.subr.mxu0 0.0
      %488 = vmatpush1.msra.mxu0 0.0
      %489 = vmatprep.subr.mxu0 0.0
      %490 = vmatpush1.msra.mxu0 0.0
      %491 = vmatprep.subr.mxu0 0.0
      %492 = vmatpush1.msra.mxu0 0.0
      %493 = vmatprep.subr.mxu0 0.0
      %494 = vmatpush1.msra.mxu0 0.0
      %495 = vmatprep.mubr.f32.mxu0 0.0
      %496 = vmatmul.mubr.f32.gmra.mrb[0].mxu0 %v332
      %v497 = vpop.f32.mrb[0].mxu0
      %v498 = vadd.f32 0.0, %v497
      %v499 = vpop.f32.mrb[0].mxu0
      %v500 = vadd.f32 0.0, %v499
      %501 = vmatprep.mubr.f32.mxu0 0.0
      %502 = vmatmul.mubr.f32.gmra.mrb[0].mxu0 %v335
      %v503 = vpop.f32.mrb[0].mxu0
      %v504 = vadd.f32 0.0, %v503
      %v505 = vpop.f32.mrb[0].mxu0
      %v506 = vadd.f32 0.0, %v505
      %507 = vdwg.mxu0
      %v508 = vmax.f32 %v404, %v498
      %v509 = vmax.f32 %v406, %v500
      %v510 = vmax.f32 %v410, %v504
      %v511 = vmax.f32 %v412, %v506
      %s512 = scalar_lea.vmem %s296, 256
      %v513 = vld [vmem:[%s512] sm:$0xff]
      %v514 = vld [vmem:[%s512 + $0x8] sm:$0xff]
      %v515 = vld [vmem:[%s512 + $0x10] sm:$0xff]
      %v516 = vld [vmem:[%s512 + $0x18] sm:$0xff]
      %v517 = vld [vmem:[%s512 + $0x20] sm:$0xff]
      %v518 = vld [vmem:[%s512 + $0x28] sm:$0xff]
      %v519 = vld [vmem:[%s512 + $0x30] sm:$0xff]
      %v520 = vld [vmem:[%s512 + $0x38] sm:$0xff]
      %v521 = vld [vmem:[%s512 + $0x40] sm:$0xff]
      %v522 = vld [vmem:[%s512 + $0x48] sm:$0xff]
      %v523 = vld [vmem:[%s512 + $0x50] sm:$0xff]
      %v524 = vld [vmem:[%s512 + $0x58] sm:$0xff]
      %v525 = vld [vmem:[%s512 + $0x60] sm:$0xff]
      %v526 = vld [vmem:[%s512 + $0x68] sm:$0xff]
      %v527 = vld [vmem:[%s512 + $0x70] sm:$0xff]
      %v528 = vld [vmem:[%s512 + $0x78] sm:$0xff]
      %529 = vmatprep.subr.mxu0 %v514
      %530 = vmatpush1.msra.mxu0 %v513
      %531 = vmatprep.subr.mxu0 %v516
      %532 = vmatpush1.msra.mxu0 %v515
      %533 = vmatprep.subr.mxu0 %v518
      %534 = vmatpush1.msra.mxu0 %v517
      %535 = vmatprep.subr.mxu0 %v520
      %536 = vmatpush1.msra.mxu0 %v519
      %537 = vmatprep.subr.mxu0 %v522
      %538 = vmatpush1.msra.mxu0 %v521
      %539 = vmatprep.subr.mxu0 %v524
      %540 = vmatpush1.msra.mxu0 %v523
      %541 = vmatprep.subr.mxu0 %v526
      %542 = vmatpush1.msra.mxu0 %v525
      %543 = vmatprep.subr.mxu0 %v528
      %544 = vmatpush1.msra.mxu0 %v527
      %545 = vmatprep.subr.mxu0 0.0
      %546 = vmatpush1.msra.mxu0 0.0
      %547 = vmatprep.subr.mxu0 0.0
      %548 = vmatpush1.msra.mxu0 0.0
      %549 = vmatprep.subr.mxu0 0.0
      %550 = vmatpush1.msra.mxu0 0.0
      %551 = vmatprep.subr.mxu0 0.0
      %552 = vmatpush1.msra.mxu0 0.0
      %553 = vmatprep.subr.mxu0 0.0
      %554 = vmatpush1.msra.mxu0 0.0
      %555 = vmatprep.subr.mxu0 0.0
      %556 = vmatpush1.msra.mxu0 0.0
      %557 = vmatprep.subr.mxu0 0.0
      %558 = vmatpush1.msra.mxu0 0.0
      %559 = vmatprep.subr.mxu0 0.0
      %560 = vmatpush1.msra.mxu0 0.0
      %561 = vmatprep.subr.mxu0 0.0
      %562 = vmatpush1.msra.mxu0 0.0
      %563 = vmatprep.subr.mxu0 0.0
      %564 = vmatpush1.msra.mxu0 0.0
      %565 = vmatprep.subr.mxu0 0.0
      %566 = vmatpush1.msra.mxu0 0.0
      %567 = vmatprep.subr.mxu0 0.0
      %568 = vmatpush1.msra.mxu0 0.0
      %569 = vmatprep.subr.mxu0 0.0
      %570 = vmatpush1.msra.mxu0 0.0
      %571 = vmatprep.subr.mxu0 0.0
      %572 = vmatpush1.msra.mxu0 0.0
      %573 = vmatprep.subr.mxu0 0.0
      %574 = vmatpush1.msra.mxu0 0.0
      %575 = vmatprep.subr.mxu0 0.0
      %576 = vmatpush1.msra.mxu0 0.0
      %577 = vmatprep.subr.mxu0 0.0
      %578 = vmatpush1.msra.mxu0 0.0
      %579 = vmatprep.subr.mxu0 0.0
      %580 = vmatpush1.msra.mxu0 0.0
      %581 = vmatprep.subr.mxu0 0.0
      %582 = vmatpush1.msra.mxu0 0.0
      %583 = vmatprep.subr.mxu0 0.0
      %584 = vmatpush1.msra.mxu0 0.0
      %585 = vmatprep.subr.mxu0 0.0
      %586 = vmatpush1.msra.mxu0 0.0
      %587 = vmatprep.subr.mxu0 0.0
      %588 = vmatpush1.msra.mxu0 0.0
      %589 = vmatprep.subr.mxu0 0.0
      %590 = vmatpush1.msra.mxu0 0.0
      %591 = vmatprep.subr.mxu0 0.0
      %592 = vmatpush1.msra.mxu0 0.0
      %593 = vmatprep.mubr.f32.mxu0 0.0
      %594 = vmatmul.mubr.f32.gmra.mrb[0].mxu0 %v332
      %v595 = vpop.f32.mrb[0].mxu0
      %v596 = vadd.f32 0.0, %v595
      %v597 = vpop.f32.mrb[0].mxu0
      %v598 = vadd.f32 0.0, %v597
      %599 = vmatprep.mubr.f32.mxu0 0.0
      %600 = vmatmul.mubr.f32.gmra.mrb[0].mxu0 %v335
      %v601 = vpop.f32.mrb[0].mxu0
      %v602 = vadd.f32 0.0, %v601
      %v603 = vpop.f32.mrb[0].mxu0
      %v604 = vadd.f32 0.0, %v603
      %605 = vdwg.mxu0
      %v606 = vmax.f32 %v508, %v596
      %v607 = vmax.f32 %v509, %v598
      %v608 = vmax.f32 %v510, %v602
      %v609 = vmax.f32 %v511, %v604
      %s610 = scalar_lea.vmem %s296, 384
      %v611 = vld [vmem:[%s610] sm:$0xff]
      %v612 = vld [vmem:[%s610 + $0x8] sm:$0xff]
      %v613 = vld [vmem:[%s610 + $0x10] sm:$0xff]
      %v614 = vld [vmem:[%s610 + $0x18] sm:$0xff]
      %v615 = vld [vmem:[%s610 + $0x20] sm:$0xff]
      %v616 = vld [vmem:[%s610 + $0x28] sm:$0xff]
      %v617 = vld [vmem:[%s610 + $0x30] sm:$0xff]
      %v618 = vld [vmem:[%s610 + $0x38] sm:$0xff]
      %v619 = vld [vmem:[%s610 + $0x40] sm:$0xff]
      %v620 = vld [vmem:[%s610 + $0x48] sm:$0xff]
      %v621 = vld [vmem:[%s610 + $0x50] sm:$0xff]
      %v622 = vld [vmem:[%s610 + $0x58] sm:$0xff]
      %v623 = vld [vmem:[%s610 + $0x60] sm:$0xff]
      %v624 = vld [vmem:[%s610 + $0x68] sm:$0xff]
      %v625 = vld [vmem:[%s610 + $0x70] sm:$0xff]
      %v626 = vld [vmem:[%s610 + $0x78] sm:$0xff]
      %627 = vmatprep.subr.mxu0 %v612
      %628 = vmatpush1.msra.mxu0 %v611
      %629 = vmatprep.subr.mxu0 %v614
      %630 = vmatpush1.msra.mxu0 %v613
      %631 = vmatprep.subr.mxu0 %v616
      %632 = vmatpush1.msra.mxu0 %v615
      %633 = vmatprep.subr.mxu0 %v618
      %634 = vmatpush1.msra.mxu0 %v617
      %635 = vmatprep.subr.mxu0 %v620
      %636 = vmatpush1.msra.mxu0 %v619
      %637 = vmatprep.subr.mxu0 %v622
      %638 = vmatpush1.msra.mxu0 %v621
      %639 = vmatprep.subr.mxu0 %v624
      %640 = vmatpush1.msra.mxu0 %v623
      %641 = vmatprep.subr.mxu0 %v626
      %642 = vmatpush1.msra.mxu0 %v625
      %643 = vmatprep.subr.mxu0 0.0
      %644 = vmatpush1.msra.mxu0 0.0
      %645 = vmatprep.subr.mxu0 0.0
      %646 = vmatpush1.msra.mxu0 0.0
      %647 = vmatprep.subr.mxu0 0.0
      %648 = vmatpush1.msra.mxu0 0.0
      %649 = vmatprep.subr.mxu0 0.0
      %650 = vmatpush1.msra.mxu0 0.0
      %651 = vmatprep.subr.mxu0 0.0
      %652 = vmatpush1.msra.mxu0 0.0
      %653 = vmatprep.subr.mxu0 0.0
      %654 = vmatpush1.msra.mxu0 0.0
      %655 = vmatprep.subr.mxu0 0.0
      %656 = vmatpush1.msra.mxu0 0.0
      %657 = vmatprep.subr.mxu0 0.0
      %658 = vmatpush1.msra.mxu0 0.0
      %659 = vmatprep.subr.mxu0 0.0
      %660 = vmatpush1.msra.mxu0 0.0
      %661 = vmatprep.subr.mxu0 0.0
      %662 = vmatpush1.msra.mxu0 0.0
      %663 = vmatprep.subr.mxu0 0.0
      %664 = vmatpush1.msra.mxu0 0.0
      %665 = vmatprep.subr.mxu0 0.0
      %666 = vmatpush1.msra.mxu0 0.0
      %667 = vmatprep.subr.mxu0 0.0
      %668 = vmatpush1.msra.mxu0 0.0
      %669 = vmatprep.subr.mxu0 0.0
      %670 = vmatpush1.msra.mxu0 0.0
      %671 = vmatprep.subr.mxu0 0.0
      %672 = vmatpush1.msra.mxu0 0.0
      %673 = vmatprep.subr.mxu0 0.0
      %674 = vmatpush1.msra.mxu0 0.0
      %675 = vmatprep.subr.mxu0 0.0
      %676 = vmatpush1.msra.mxu0 0.0
      %677 = vmatprep.subr.mxu0 0.0
      %678 = vmatpush1.msra.mxu0 0.0
      %679 = vmatprep.subr.mxu0 0.0
      %680 = vmatpush1.msra.mxu0 0.0
      %681 = vmatprep.subr.mxu0 0.0
      %682 = vmatpush1.msra.mxu0 0.0
      %683 = vmatprep.subr.mxu0 0.0
      %684 = vmatpush1.msra.mxu0 0.0
      %685 = vmatprep.subr.mxu0 0.0
      %686 = vmatpush1.msra.mxu0 0.0
      %687 = vmatprep.subr.mxu0 0.0
      %688 = vmatpush1.msra.mxu0 0.0
      %689 = vmatprep.subr.mxu0 0.0
      %690 = vmatpush1.msra.mxu0 0.0
      %691 = vmatprep.mubr.f32.mxu0 0.0
      %692 = vmatmul.mubr.f32.gmra.mrb[0].mxu0 %v332
      %v693 = vpop.f32.mrb[0].mxu0
      %v694 = vadd.f32 0.0, %v693
      %v695 = vpop.f32.mrb[0].mxu0
      %v696 = vadd.f32 0.0, %v695
      %697 = vmatprep.mubr.f32.mxu0 0.0
      %698 = vmatmul.mubr.f32.gmra.mrb[0].mxu0 %v335
      %v699 = vpop.f32.mrb[0].mxu0
      %v700 = vadd.f32 0.0, %v699
      %v701 = vpop.f32.mrb[0].mxu0
      %v702 = vadd.f32 0.0, %v701
      %703 = vdwg.mxu0
      %v704 = vmax.f32 %v606, %v694
      %v705 = vmax.f32 %v607, %v696
      %v706 = vmax.f32 %v608, %v700
      %v707 = vmax.f32 %v609, %v702
      %v708 = vld [vmem:[%s2] sm:$0xff]
      %v709 = vld [vmem:[%s2 + $0x8] sm:$0xf]
      %711 = vset.pattern.permute.xlu0 0
      %712 = vperm.xlu0 %711, %v708
      %v713 = vpop.permute.xlu0 %712
      %716 = vset.pattern.permute.xlu0 0
      %717 = vperm.xlu0 %716, %v709
      %v718 = vpop.permute.xlu0 %717
      %v720 = vadd.f32 %v704, %v713
      %v721 = vadd.f32 %v705, %v713
      %v722 = vadd.f32 %v706, %v718
      %v723 = vadd.f32 %v707, %v718
      %v724 = vld [vmem:[%s301] sm:$0xff]
      %v725 = vld [vmem:[%s301 + $0x8] sm:$0xff]
      %v726 = vld [vmem:[%s301 + $0x10] sm:$0xf]
      %v727 = vld [vmem:[%s301 + $0x18] sm:$0xf]
      %v728 = vtanh.pop %v720
      %v729 = vtanh.pop %v721
      %v730 = vtanh.pop %v722
      %v731 = vtanh.pop %v723
      %v732 = vadd.f32 %v724, %v728
      %v733 = vadd.f32 %v725, %v729
      %v734 = vadd.f32 %v726, %v730
      %v735 = vadd.f32 %v727, %v731
      %v736 = vld [vmem:[%s3] sm:$0xff]
      %v737 = vld [vmem:[%s3 + $0x8] sm:$0xff]
      %v738 = vld [vmem:[%s3 + $0x10] sm:$0xf]
      %v739 = vld [vmem:[%s3 + $0x18] sm:$0xf]
      %vm740 = vcmp.ge.f32.partialorder %v732, %v736
      %vm741 = vcmp.ge.f32.partialorder %v733, %v737
      %vm742 = vcmp.ge.f32.partialorder %v734, %v738
      %vm743 = vcmp.ge.f32.partialorder %v735, %v739
      %v744 = vsel %vm740, %v732, 0.0
      %v745 = vsel %vm741, %v733, 0.0
      %v746 = vsel %vm742, %v734, 0.0
      %v747 = vsel %vm743, %v735, 0.0
      %748 = vst [vmem:[%s306] sm:$0xff] %v744
      %vm749 = vcmask 793600
      %750 = vst.msk [vmem:[%s306 + $0x8] sm:$0xff] %vm749, %v745
      %751 = vst [vmem:[%s306 + $0x10] sm:$0xf] %v746
      %vm752 = vcmask 789504
      %753 = vst.msk [vmem:[%s306 + $0x18] sm:$0xf] %vm752, %v747
      %v754 = vmul.f32 %v744, 0.2
      %v755 = vmul.f32 %v745, 0.2
      %v756 = vmul.f32 %v746, 0.2
      %v757 = vmul.f32 %v747, 0.2
      %v758 = vsel %vm740, 0.0, %v732
      %v759 = vsel %vm741, 0.0, %v733
      %v760 = vsel %vm742, 0.0, %v734
      %v761 = vsel %vm743, 0.0, %v735
      %v762 = vld [vmem:[%s4] sm:$0xff]
      %v763 = vld [vmem:[%s4 + $0x8] sm:$0xff]
      %v764 = vld [vmem:[%s4 + $0x10] sm:$0xf]
      %v765 = vld [vmem:[%s4 + $0x18] sm:$0xf]
      %v766 = vmul.f32 %v758, %v762
      %v767 = vmul.f32 %v759, %v763
      %v768 = vmul.f32 %v760, %v764
      %v769 = vmul.f32 %v761, %v765
      %v770 = vadd.f32 %v754, %v766
      %v771 = vadd.f32 %v755, %v767
      %v772 = vadd.f32 %v756, %v768
      %v773 = vadd.f32 %v757, %v769
      %774 = vst [vmem:[%s311] sm:$0xff] %v770
      %775 = vst.msk [vmem:[%s311 + $0x8] sm:$0xff] %vm749, %v771
      %776 = vst [vmem:[%s311 + $0x10] sm:$0xf] %v772
      %777 = vst.msk [vmem:[%s311 + $0x18] sm:$0xf] %vm752, %v773
      %p778 = scmp.lt.s32.totalorder %s19, 1
      %s779 = scalar_select %p778, %s19, 1
      %s780 = smul.addr %s779, 4
      %s781 = smul.addr %s780, 8
      %s782 = scalar_lea.vmem %s6, %s781
      %p783 = scmp.lt.s32.totalorder %s19, 1
      %s784 = scalar_select %p783, %s19, 1
      %s785 = smul.addr %s784, 4
      %s786 = smul.addr %s785, 8
      %s787 = scalar_lea.vmem %s7, %s786
      // Predicated region
      $region45: #{net_forward.3} parent=43 // pred_check
        %p788 = pneg %p173
      $region46: #{net_forward.3} parent=43 // pred_check_branch
        %790 = sbr.rel (%p788) target = $region48
      $region47: #{net_forward.3} parent=43 // pred_region
        _
      $region48: #{net_forward.3} parent=43 // pred_fallthru
        _
      // Predicated region
      $region49: #{net_forward.3} parent=43 // pred_check
        %p791 = pneg %p199
      $region50: #{net_forward.3} parent=43 // pred_check_branch
        %793 = sbr.rel (%p791) target = $region52
      $region51: #{net_forward.3} parent=43 // pred_region
        _
      $region52: #{net_forward.3} parent=43 // pred_fallthru
        _
    $region44: #{net_forward.3} parent=5 // pred_fallthru
      _
    %p794 = scmp.le.s32.totalorder 2, %s14
    // Predicated region
    $region53: #{net_forward.3} parent=5 // pred_check
      %p795 = pneg %p794
    $region54: #{net_forward.3} parent=5 // pred_check_branch
      %797 = sbr.rel (%p795) target = $region56
    $region55: #{net_forward.3} parent=5 // pred_region
      %s798 = ssub.s32 %s14, 2
      // Predicated region
      $region57: #{net_forward.3} parent=55 // pred_check
        %p799 = pneg %p179
      $region58: #{net_forward.3} parent=55 // pred_check_branch
        %801 = sbr.rel (%p799) target = $region60
      $region59: #{net_forward.3} parent=55 // pred_region
        %p802 = scmp.lt.s32.totalorder %s20, 1
        %s803 = scalar_select %p802, %s20, 1
        %s804 = smul.addr %s803, 4
        %s805 = smul.addr %s804, 8
        %s806 = scalar_lea.vmem %s6, %s805
      $region60: #{net_forward.3} parent=55 // pred_fallthru
        _
      // Predicated region
      $region61: #{net_forward.3} parent=55 // pred_check
        %p807 = pneg %p205
      $region62: #{net_forward.3} parent=55 // pred_check_branch
        %809 = sbr.rel (%p807) target = $region64
      $region63: #{net_forward.3} parent=55 // pred_region
        %p810 = scmp.lt.s32.totalorder %s20, 1
        %s811 = scalar_select %p810, %s20, 1
        %s812 = smul.addr %s811, 4
        %s813 = smul.addr %s812, 8
        %s814 = scalar_lea.vmem %s7, %s813
      $region64: #{net_forward.3} parent=55 // pred_fallthru
        _
    $region56: #{net_forward.3} parent=5 // pred_fallthru
      _
  $region6: #{net_forward.3} parent=0 // loop_footer
    %s18 = sadd.s32 1, %s14
  $region7: #{net_forward.3} parent=0 // loop_footer_branch
    %13 = sbr.rel target = $region3
  $region8: #{net_forward.3} parent=0 // loop_exit
    _

// kernel: net_forward.4
$region0: #{net_forward.4}
  #allocation0 [shape = 'u32[]', space=smem, size = 0x4, offset = 0x4, fixed_abs, tag = 'smem constant byte address 0x4 - core index']
  #allocation1 [shape = 'u32[144,128]{1,0:T(1,128)}', space=vmem, size = 0x12000, scoped, tag = 'internal scratch']
  %s0 = inlined_call_operand.vmem [shape: f32[2,4,384,25], index: 0, kind: input, shape index: {}]
  %s1 = inlined_call_operand.vmem [shape: f32[32,384], index: 1, kind: input, shape index: {}]
  %s2 = inlined_call_operand.vmem [shape: f32[32,1], index: 2, kind: input, shape index: {}]
  %s3 = inlined_call_operand.vmem [shape: f32[32,25], index: 3, kind: input, shape index: {}]
  %s4 = inlined_call_operand.vmem [shape: f32[32,25], index: 4, kind: input, shape index: {}]
  %s5 = inlined_call_operand.vmem [shape: f32[2,32,25], index: 5, kind: input, shape index: {}]
  %s6 = inlined_call_operand.vmem [shape: f32[2,32,25], index: 6, kind: output, shape index: {0}]
  %s7 = inlined_call_operand.vmem [shape: f32[2,32,25], index: 7, kind: output, shape index: {1}]
  %8 = xla_tuple %s6, %s7
  %s9 = sld [smem:[#allocation0]]
  $region65: #{net_forward.4} parent=0
    _
  %s11 = ssub.s32 1, %s9
  %s12 = scalar_select 0, %s11, %s9
  loop: start=0, step=1, limit=4
  $region2: #{net_forward.4} parent=0 // loop_pre_header
    _
  $region3: #{net_forward.4} parent=0 // loop_header
    %s14 = sphi 0, %s18
    %p15 = scmp.ge.s32.totalorder %s14, 4
    %s24 = sphi 0, %s26
    %s27 = sphi 0, %s24
    %s28 = sphi 0, %s27
    %s44 = sphi 0, %s28
    %s48 = sphi 0, %s48
    %s50 = sphi 0, %s48
    %s51 = sphi 0, %s50
    %s65 = sphi 0, %s51
    %s69 = sphi 0, %s69
    %s71 = sphi 0, %s69
    %s72 = sphi 0, %s71
    %s86 = sphi 0, %s72
    %s90 = sphi 0, %s90
    %s92 = sphi 0, %s90
    %s93 = sphi 0, %s92
    %s107 = sphi 0, %s93
    %s111 = sphi 0, %s111
    %s113 = sphi 0, %s111
    %s114 = sphi 0, %s113
    %s128 = sphi 0, %s114
    %s134 = sphi 0, %s136
    %s137 = sphi 0, %s134
    %s138 = sphi 0, %s137
    %s154 = sphi 0, %s138
    %s160 = sphi 0, %s162
    %s163 = sphi 0, %s160
    %s164 = sphi 0, %s163
    %s180 = sphi 0, %s164
    %s186 = sphi 0, %s188
    %s189 = sphi 0, %s186
    %s190 = sphi 0, %s189
    %s206 = sphi 0, %s190
  $region4: #{net_forward.4} parent=0 // loop_header_branch
    %17 = sbr.rel (%p15) target = $region8
  $region5: #{net_forward.4} parent=0 // loop_body
    %s19 = ssub.s32 %s14, 1
    %s20 = ssub.s32 %s14, 2
    %s21 = sadd.s32 %s14, 1
    %s22 = ssub.s32 %s14, %s21
    %p23 = scmp.eq.s32.totalorder %s22, 0
    %s25 = sadd.s32 %s24, 1
    %s26 = scalar_select %p23, %s24, %s25
    %p29 = pneg %p23
    %p30 = scmp.eq.s32.totalorder %s14, 1
    %p31 = por %p29, %p30
    %p32 = scmp.ne.s32.totalorder %s24, %s27
    %p33 = scmp.eq.s32.totalorder %s14, 0
    %p34 = por %p32, %p33
    %p35 = scmp.ne.s32.totalorder %s24, %s27
    %p36 = scmp.eq.s32.totalorder %s19, 1
    %p37 = por %p35, %p36
    %p38 = scmp.ne.s32.totalorder %s27, %s28
    %p39 = scmp.eq.s32.totalorder %s19, 0
    %p40 = por %p38, %p39
    %p41 = scmp.ne.s32.totalorder %s27, %s28
    %p42 = scmp.eq.s32.totalorder %s20, 1
    %p43 = por %p41, %p42
    %p45 = scmp.ne.s32.totalorder %s28, %s44
    %p46 = scmp.eq.s32.totalorder %s20, 0
    %p47 = por %p45, %p46
    %s49 = sadd.s32 %s48, 1
    %p52 = scmp.eq.s32.totalorder %s14, 1
    %p53 = scmp.ne.s32.totalorder %s48, %s50
    %p54 = scmp.eq.s32.totalorder %s14, 0
    %p55 = por %p53, %p54
    %p56 = scmp.ne.s32.totalorder %s48, %s50
    %p57 = scmp.eq.s32.totalorder %s19, 1
    %p58 = por %p56, %p57
    %p59 = scmp.ne.s32.totalorder %s50, %s51
    %p60 = scmp.eq.s32.totalorder %s19, 0
    %p61 = por %p59, %p60
    %p62 = scmp.ne.s32.totalorder %s50, %s51
    %p63 = scmp.eq.s32.totalorder %s20, 1
    %p64 = por %p62, %p63
    %p66 = scmp.ne.s32.totalorder %s51, %s65
    %p67 = scmp.eq.s32.totalorder %s20, 0
    %p68 = por %p66, %p67
    %s70 = sadd.s32 %s69, 1
    %p73 = scmp.eq.s32.totalorder %s14, 1
    %p74 = scmp.ne.s32.totalorder %s69, %s71
    %p75 = scmp.eq.s32.totalorder %s14, 0
    %p76 = por %p74, %p75
    %p77 = scmp.ne.s32.totalorder %s69, %s71
    %p78 = scmp.eq.s32.totalorder %s19, 1
    %p79 = por %p77, %p78
    %p80 = scmp.ne.s32.totalorder %s71, %s72
    %p81 = scmp.eq.s32.totalorder %s19, 0
    %p82 = por %p80, %p81
    %p83 = scmp.ne.s32.totalorder %s71, %s72
    %p84 = scmp.eq.s32.totalorder %s20, 1
    %p85 = por %p83, %p84
    %p87 = scmp.ne.s32.totalorder %s72, %s86
    %p88 = scmp.eq.s32.totalorder %s20, 0
    %p89 = por %p87, %p88
    %s91 = sadd.s32 %s90, 1
    %p94 = scmp.eq.s32.totalorder %s14, 1
    %p95 = scmp.ne.s32.totalorder %s90, %s92
    %p96 = scmp.eq.s32.totalorder %s14, 0
    %p97 = por %p95, %p96
    %p98 = scmp.ne.s32.totalorder %s90, %s92
    %p99 = scmp.eq.s32.totalorder %s19, 1
    %p100 = por %p98, %p99
    %p101 = scmp.ne.s32.totalorder %s92, %s93
    %p102 = scmp.eq.s32.totalorder %s19, 0
    %p103 = por %p101, %p102
    %p104 = scmp.ne.s32.totalorder %s92, %s93
    %p105 = scmp.eq.s32.totalorder %s20, 1
    %p106 = por %p104, %p105
    %p108 = scmp.ne.s32.totalorder %s93, %s107
    %p109 = scmp.eq.s32.totalorder %s20, 0
    %p110 = por %p108, %p109
    %s112 = sadd.s32 %s111, 1
    %p115 = scmp.eq.s32.totalorder %s14, 1
    %p116 = scmp.ne.s32.totalorder %s111, %s113
    %p117 = scmp.eq.s32.totalorder %s14, 0
    %p118 = por %p116, %p117
    %p119 = scmp.ne.s32.totalorder %s111, %s113
    %p120 = scmp.eq.s32.totalorder %s19, 1
    %p121 = por %p119, %p120
    %p122 = scmp.ne.s32.totalorder %s113, %s114
    %p123 = scmp.eq.s32.totalorder %s19, 0
    %p124 = por %p122, %p123
    %p125 = scmp.ne.s32.totalorder %s113, %s114
    %p126 = scmp.eq.s32.totalorder %s20, 1
    %p127 = por %p125, %p126
    %p129 = scmp.ne.s32.totalorder %s114, %s128
    %p130 = scmp.eq.s32.totalorder %s20, 0
    %p131 = por %p129, %p130
    %s132 = ssub.s32 %s14, %s21
    %p133 = scmp.eq.s32.totalorder %s132, 0
    %s135 = sadd.s32 %s134, 1
    %s136 = scalar_select %p133, %s134, %s135
    %p139 = pneg %p133
    %p140 = scmp.eq.s32.totalorder %s14, 1
    %p141 = por %p139, %p140
    %p142 = scmp.ne.s32.totalorder %s134, %s137
    %p143 = scmp.eq.s32.totalorder %s14, 0
    %p144 = por %p142, %p143
    %p145 = scmp.ne.s32.totalorder %s134, %s137
    %p146 = scmp.eq.s32.totalorder %s19, 1
    %p147 = por %p145, %p146
    %p148 = scmp.ne.s32.totalorder %s137, %s138
    %p149 = scmp.eq.s32.totalorder %s19, 0
    %p150 = por %p148, %p149
    %p151 = scmp.ne.s32.totalorder %s137, %s138
    %p152 = scmp.eq.s32.totalorder %s20, 1
    %p153 = por %p151, %p152
    %p155 = scmp.ne.s32.totalorder %s138, %s154
    %p156 = scmp.eq.s32.totalorder %s20, 0
    %p157 = por %p155, %p156
    %s158 = ssub.s32 %s14, %s21
    %p159 = scmp.eq.s32.totalorder %s158, 0
    %s161 = sadd.s32 %s160, 1
    %s162 = scalar_select %p159, %s160, %s161
    %p165 = pneg %p159
    %p166 = scmp.eq.s32.totalorder %s14, 1
    %p167 = por %p165, %p166
    %p168 = scmp.ne.s32.totalorder %s160, %s163
    %p169 = scmp.eq.s32.totalorder %s14, 0
    %p170 = por %p168, %p169
    %p171 = scmp.ne.s32.totalorder %s160, %s163
    %p172 = scmp.eq.s32.totalorder %s19, 1
    %p173 = por %p171, %p172
    %p174 = scmp.ne.s32.totalorder %s163, %s164
    %p175 = scmp.eq.s32.totalorder %s19, 0
    %p176 = por %p174, %p175
    %p177 = scmp.ne.s32.totalorder %s163, %s164
    %p178 = scmp.eq.s32.totalorder %s20, 1
    %p179 = por %p177, %p178
    %p181 = scmp.ne.s32.totalorder %s164, %s180
    %p182 = scmp.eq.s32.totalorder %s20, 0
    %p183 = por %p181, %p182
    %s184 = ssub.s32 %s14, %s21
    %p185 = scmp.eq.s32.totalorder %s184, 0
    %s187 = sadd.s32 %s186, 1
    %s188 = scalar_select %p185, %s186, %s187
    %p191 = pneg %p185
    %p192 = scmp.eq.s32.totalorder %s14, 1
    %p193 = por %p191, %p192
    %p194 = scmp.ne.s32.totalorder %s186, %s189
    %p195 = scmp.eq.s32.totalorder %s14, 0
    %p196 = por %p194, %p195
    %p197 = scmp.ne.s32.totalorder %s186, %s189
    %p198 = scmp.eq.s32.totalorder %s19, 1
    %p199 = por %p197, %p198
    %p200 = scmp.ne.s32.totalorder %s189, %s190
    %p201 = scmp.eq.s32.totalorder %s19, 0
    %p202 = por %p200, %p201
    %p203 = scmp.ne.s32.totalorder %s189, %s190
    %p204 = scmp.eq.s32.totalorder %s20, 1
    %p205 = por %p203, %p204
    %p207 = scmp.ne.s32.totalorder %s190, %s206
    %p208 = scmp.eq.s32.totalorder %s20, 0
    %p209 = por %p207, %p208
    %p210 = scmp.le.s32.totalorder 1, %s14
    %p211 = scmp.lt.s32.totalorder %s14, 3
    %p212 = pnand %p210, %p211
    %p213 = pneg %p212
    // Predicated region
    $region9: #{net_forward.4} parent=5 // pred_check
      _
    $region10: #{net_forward.4} parent=5 // pred_check_branch
      %215 = sbr.rel (%p212) target = $region12
    $region11: #{net_forward.4} parent=5 // pred_region
      %s216 = ssub.s32 %s14, 1
      // Predicated region
      $region13: #{net_forward.4} parent=11 // pred_check
        %p217 = pneg %p61
      $region14: #{net_forward.4} parent=11 // pred_check_branch
        %219 = sbr.rel (%p217) target = $region16
      $region15: #{net_forward.4} parent=11 // pred_region
        _
      $region16: #{net_forward.4} parent=11 // pred_fallthru
        _
      // Predicated region
      $region17: #{net_forward.4} parent=11 // pred_check
        %p220 = pneg %p82
      $region18: #{net_forward.4} parent=11 // pred_check_branch
        %222 = sbr.rel (%p220) target = $region20
      $region19: #{net_forward.4} parent=11 // pred_region
        _
      $region20: #{net_forward.4} parent=11 // pred_fallthru
        _
      // Predicated region
      $region21: #{net_forward.4} parent=11 // pred_check
        %p223 = pneg %p103
      $region22: #{net_forward.4} parent=11 // pred_check_branch
        %225 = sbr.rel (%p223) target = $region24
      $region23: #{net_forward.4} parent=11 // pred_region
        _
      $region24: #{net_forward.4} parent=11 // pred_fallthru
        _
      // Predicated region
      $region25: #{net_forward.4} parent=11 // pred_check
        %p226 = pneg %p124
      $region26: #{net_forward.4} parent=11 // pred_check_branch
        %228 = sbr.rel (%p226) target = $region28
      $region27: #{net_forward.4} parent=11 // pred_region
        _
      $region28: #{net_forward.4} parent=11 // pred_fallthru
        _
    $region12: #{net_forward.4} parent=5 // pred_fallthru
      _
    %p229 = scmp.lt.s32.totalorder %s14, 2
    // Predicated region
    $region29: #{net_forward.4} parent=5 // pred_check
      %p230 = pneg %p229
    $region30: #{net_forward.4} parent=5 // pred_check_branch
      %232 = sbr.rel (%p230) target = $region32
    $region31: #{net_forward.4} parent=5 // pred_region
      // Predicated region
      $region33: #{net_forward.4} parent=31 // pred_check
        %p233 = pneg %p34
      $region34: #{net_forward.4} parent=31 // pred_check_branch
        %235 = sbr.rel (%p233) target = $region36
      $region35: #{net_forward.4} parent=31 // pred_region
        %p236 = scmp.lt.s32.totalorder %s14, 1
        %s237 = scalar_select %p236, %s14, 1
        %s238 = smul.addr %s237, 192
        %s239 = smul.addr %s238, 8
        %s240 = scalar_lea.vmem %s0, %s239
      $region36: #{net_forward.4} parent=31 // pred_fallthru
        _
      // Predicated region
      $region37: #{net_forward.4} parent=31 // pred_check
        %p241 = pneg %p144
      $region38: #{net_forward.4} parent=31 // pred_check_branch
        %243 = sbr.rel (%p241) target = $region40
      $region39: #{net_forward.4} parent=31 // pred_region
        %p244 = scmp.lt.s32.totalorder %s14, 1
        %s245 = scalar_select %p244, %s14, 1
        %s246 = smul.addr %s245, 4
        %s247 = smul.addr %s246, 8
        %s248 = scalar_lea.vmem %s5, %s247
      $region40: #{net_forward.4} parent=31 // pred_fallthru
        _
    $region32: #{net_forward.4} parent=5 // pred_fallthru
      _
    %p249 = scmp.le.s32.totalorder 1, %s14
    %p250 = scmp.lt.s32.totalorder %s14, 3
    %p251 = pnand %p249, %p250
    %p252 = pneg %p251
    // Predicated region
    $region41: #{net_forward.4} parent=5 // pred_check
      _
    $region42: #{net_forward.4} parent=5 // pred_check_branch
      %254 = sbr.rel (%p251) target = $region44
    $region43: #{net_forward.4} parent=5 // pred_region
      %s255 = ssub.s32 %s14, 1
      %p256 = scmp.lt.s32.totalorder %s19, 1
      %s257 = scalar_select %p256, %s19, 1
      %s258 = smul.addr %s257, 192
      %s259 = smul.addr %s258, 8
      %s260 = scalar_lea.vmem %s0, %s259
      %p261 = pneg %p40
      %p262 = pneg %p37
      %p263 = pneg %p61
      %p264 = pneg %p58
      %p265 = pneg %p82
      %p266 = pneg %p79
      %p267 = pneg %p103
      %p268 = pneg %p100
      %p269 = pneg %p124
      %p270 = pneg %p121
      %p271 = scmp.lt.s32.totalorder %s19, 1
      %s272 = scalar_select %p271, %s19, 1
      %s273 = smul.addr %s272, 4
      %s274 = smul.addr %s273, 8
      %s275 = scalar_lea.vmem %s5, %s274
      %p276 = pneg %p150
      %p277 = pneg %p147
      %p278 = pneg %p176
      %p279 = pneg %p173
      %p280 = scmp.lt.s32.totalorder %s19, 1
      %s281 = scalar_select %p280, %s19, 1
      %s282 = smul.addr %s281, 4
      %s283 = smul.addr %s282, 8
      %s284 = scalar_lea.vmem %s6, %s283
      %p285 = pneg %p202
      %p286 = pneg %p199
      %p287 = scmp.lt.s32.totalorder %s19, 1
      %s288 = scalar_select %p287, %s19, 1
      %s289 = smul.addr %s288, 4
      %s290 = smul.addr %s289, 8
      %s291 = scalar_lea.vmem %s7, %s290
      %p292 = scmp.lt.s32.totalorder %s19, 1
      %s293 = scalar_select %p292, %s19, 1
      %s294 = smul.addr %s293, 192
      %s295 = smul.addr %s294, 8
      %s296 = scalar_lea.vmem %s0, %s295
      %p297 = scmp.lt.s32.totalorder %s19, 1
      %s298 = scalar_select %p297, %s19, 1
      %s299 = smul.addr %s298, 4
      %s300 = smul.addr %s299, 8
      %s301 = scalar_lea.vmem %s5, %s300
      %p302 = scmp.lt.s32.totalorder %s19, 1
      %s303 = scalar_select %p302, %s19, 1
      %s304 = smul.addr %s303, 4
      %s305 = smul.addr %s304, 8
      %s306 = scalar_lea.vmem %s6, %s305
      %p307 = scmp.lt.s32.totalorder %s19, 1
      %s308 = scalar_select %p307, %s19, 1
      %s309 = smul.addr %s308, 4
      %s310 = smul.addr %s309, 8
      %s311 = scalar_lea.vmem %s7, %s310
      %v312 = vld [vmem:[%s1] sm:$0xff]
      %v313 = vld [vmem:[%s1 + $0x8] sm:$0xff]
      %v314 = vld [vmem:[%s1 + $0x10] sm:$0xff]
      %v315 = vld [vmem:[%s1 + $0x18] sm:$0xff]
      %v316 = vld [vmem:[%s1 + $0x20] sm:$0xff]
      %v317 = vld [vmem:[%s1 + $0x28] sm:$0xff]
      %v318 = vld [vmem:[%s1 + $0x30] sm:$0xff]
      %v319 = vld [vmem:[%s1 + $0x38] sm:$0xff]
      %v320 = vld [vmem:[%s1 + $0x40] sm:$0xff]
      %v321 = vld [vmem:[%s1 + $0x48] sm:$0xff]
      %v322 = vld [vmem:[%s1 + $0x50] sm:$0xff]
      %v323 = vld [vmem:[%s1 + $0x58] sm:$0xff]
      %v324 = vld [vmem:[%s296] sm:$0xff]
      %v325 = vld [vmem:[%s296 + $0x8] sm:$0xff]
      %v326 = vld [vmem:[%s296 + $0x10] sm:$0xff]
      %v327 = vld [vmem:[%s296 + $0x18] sm:$0xff]
      %v328 = vld [vmem:[%s296 + $0x20] sm:$0xff]
      %v329 = vld [vmem:[%s296 + $0x28] sm:$0xff]
      %v330 = vld [vmem:[%s296 + $0x30] sm:$0xff]
      %v331 = vld [vmem:[%s296 + $0x38] sm:$0xff]
      %v332 = vld [vmem:[%s296 + $0x40] sm:$0xff]
      %v333 = vld [vmem:[%s296 + $0x48] sm:$0xff]
      %v334 = vld [vmem:[%s296 + $0x50] sm:$0xff]
      %v335 = vld [vmem:[%s296 + $0x58] sm:$0xff]
      %v336 = vld [vmem:[%s296 + $0x60] sm:$0xff]
      %v337 = vld [vmem:[%s296 + $0x68] sm:$0xff]
      %v338 = vld [vmem:[%s296 + $0x70] sm:$0xff]
      %v339 = vld [vmem:[%s296 + $0x78] sm:$0xff]
      %v340 = vld [vmem:[%s296 + $0x80] sm:$0xff]
      %v341 = vld [vmem:[%s296 + $0x88] sm:$0xff]
      %v342 = vld [vmem:[%s296 + $0x90] sm:$0xff]
      %v343 = vld [vmem:[%s296 + $0x98] sm:$0xff]
      %v344 = vld [vmem:[%s296 + $0xa0] sm:$0xff]
      %v345 = vld [vmem:[%s296 + $0xa8] sm:$0xff]
      %v346 = vld [vmem:[%s296 + $0xb0] sm:$0xff]
      %v347 = vld [vmem:[%s296 + $0xb8] sm:$0xff]
      %v348 = vld [vmem:[%s296 + $0xc0] sm:$0xff]
      %v349 = vld [vmem:[%s296 + $0xc8] sm:$0xff]
      %v350 = vld [vmem:[%s296 + $0xd0] sm:$0xff]
      %v351 = vld [vmem:[%s296 + $0xd8] sm:$0xff]
      %v352 = vld [vmem:[%s296 + $0xe0] sm:$0xff]
      %v353 = vld [vmem:[%s296 + $0xe8] sm:$0xff]
      %v354 = vld [vmem:[%s296 + $0xf0] sm:$0xff]
      %v355 = vld [vmem:[%s296 + $0xf8] sm:$0xff]
      %v356 = vld [vmem:[%s296 + $0x100] sm:$0xff]
      %v357 = vld [vmem:[%s296 + $0x108] sm:$0xff]
      %v358 = vld [vmem:[%s296 + $0x110] sm:$0xff]
      %v359 = vld [vmem:[%s296 + $0x118] sm:$0xff]
      %v360 = vld [vmem:[%s296 + $0x120] sm:$0xff]
      %v361 = vld [vmem:[%s296 + $0x128] sm:$0xff]
      %v362 = vld [vmem:[%s296 + $0x130] sm:$0xff]
      %v363 = vld [vmem:[%s296 + $0x138] sm:$0xff]
      %v364 = vld [vmem:[%s296 + $0x140] sm:$0xff]
      %v365 = vld [vmem:[%s296 + $0x148] sm:$0xff]
      %v366 = vld [vmem:[%s296 + $0x150] sm:$0xff]
      %v367 = vld [vmem:[%s296 + $0x158] sm:$0xff]
      %v368 = vld [vmem:[%s296 + $0x160] sm:$0xff]
      %v369 = vld [vmem:[%s296 + $0x168] sm:$0xff]
      %v370 = vld [vmem:[%s296 + $0x170] sm:$0xff]
      %v371 = vld [vmem:[%s296 + $0x178] sm:$0xff]
      %372 = vmatprep.subr.mxu0 0.0
      %373 = vmatpush1.msra.mxu0 %v324
      %374 = vmatprep.subr.mxu0 0.0
      %375 = vmatpush1.msra.mxu0 %v325
      %376 = vmatprep.subr.mxu0 0.0
      %377 = vmatpush1.msra.mxu0 %v326
      %378 = vmatprep.subr.mxu0 0.0
      %379 = vmatpush1.msra.mxu0 %v327
      %380 = vmatprep.subr.mxu0 0.0
      %381 = vmatpush1.msra.mxu0 %v328
      %382 = vmatprep.subr.mxu0 0.0
      %383 = vmatpush1.msra.mxu0 %v329
      %384 = vmatprep.subr.mxu0 0.0
      %385 = vmatpush1.msra.mxu0 %v330
      %386 = vmatprep.subr.mxu0 0.0
      %387 = vmatpush1.msra.mxu0 %v331
      %388 = vmatprep.subr.mxu0 0.0
      %389 = vmatpush1.msra.mxu0 %v332
      %390 = vmatprep.subr.mxu0 0.0
      %391 = vmatpush1.msra.mxu0 %v333
      %392 = vmatprep.subr.mxu0 0.0
      %393 = vmatpush1.msra.mxu0 %v334
      %394 = vmatprep.subr.mxu0 0.0
      %395 = vmatpush1.msra.mxu0 %v335
      %396 = vmatprep.subr.mxu0 0.0
      %397 = vmatpush1.msra.mxu0 %v336
      %398 = vmatprep.subr.mxu0 0.0
      %399 = vmatpush1.msra.mxu0 %v337
      %400 = vmatprep.subr.mxu0 0.0
      %401 = vmatpush1.msra.mxu0 %v338
      %402 = vmatprep.subr.mxu0 0.0
      %403 = vmatpush1.msra.mxu0 %v339
      %404 = vmatprep.subr.mxu0 0.0
      %405 = vmatpush1.msra.mxu0 %v340
      %406 = vmatprep.subr.mxu0 0.0
      %407 = vmatpush1.msra.mxu0 %v341
      %408 = vmatprep.subr.mxu0 0.0
      %409 = vmatpush1.msra.mxu0 %v342
      %410 = vmatprep.subr.mxu0 0.0
      %411 = vmatpush1.msra.mxu0 %v343
      %412 = vmatprep.subr.mxu0 0.0
      %413 = vmatpush1.msra.mxu0 %v344
      %414 = vmatprep.subr.mxu0 0.0
      %415 = vmatpush1.msra.mxu0 %v345
      %416 = vmatprep.subr.mxu0 0.0
      %417 = vmatpush1.msra.mxu0 %v346
      %418 = vmatprep.subr.mxu0 0.0
      %419 = vmatpush1.msra.mxu0 %v347
      %420 = vmatprep.subr.mxu0 0.0
      %421 = vmatpush1.msra.mxu0 %v348
      %422 = vmatprep.subr.mxu0 0.0
      %423 = vmatpush1.msra.mxu0 %v349
      %424 = vmatprep.subr.mxu0 0.0
      %425 = vmatpush1.msra.mxu0 %v350
      %426 = vmatprep.subr.mxu0 0.0
      %427 = vmatpush1.msra.mxu0 %v351
      %428 = vmatprep.subr.mxu0 0.0
      %429 = vmatpush1.msra.mxu0 %v352
      %430 = vmatprep.subr.mxu0 0.0
      %431 = vmatpush1.msra.mxu0 %v353
      %432 = vmatprep.subr.mxu0 0.0
      %433 = vmatpush1.msra.mxu0 %v354
      %434 = vmatprep.subr.mxu0 0.0
      %435 = vmatpush1.msra.mxu0 %v355
      %436 = vmatprep.mubr.f32.mxu0 %v313
      %437 = vmatmul.mubr.f32.gmra.mrb[0].mxu0 %v312
      %v438 = vpop.f32.mrb[0].mxu0
      %v439 = vadd.f32 0.0, %v438
      %v440 = vpop.f32.mrb[0].mxu0
      %441 = vmatprep.mubr.f32.mxu0 %v316
      %442 = vmatmul.mubr.f32.gmra.mrb[0].mxu0 %v315
      %v443 = vpop.f32.mrb[0].mxu0
      %v444 = vadd.f32 0.0, %v443
      %v445 = vpop.f32.mrb[0].mxu0
      %446 = vmatprep.mubr.f32.mxu0 %v319
      %447 = vmatmul.mubr.f32.gmra.mrb[0].mxu0 %v318
      %v448 = vpop.f32.mrb[0].mxu0
      %v449 = vadd.f32 0.0, %v448
      %v450 = vpop.f32.mrb[0].mxu0
      %451 = vmatprep.mubr.f32.mxu0 %v322
      %452 = vmatmul.mubr.f32.gmra.mrb[0].mxu0 %v321
      %v453 = vpop.f32.mrb[0].mxu0
      %v454 = vadd.f32 0.0, %v453
      %v455 = vpop.f32.mrb[0].mxu0
      %456 = vdwg.mxu0
      %457 = vmatprep.subr.mxu0 0.0
      %458 = vmatpush1.msra.mxu0 %v356
      %459 = vmatprep.subr.mxu0 0.0
      %460 = vmatpush1.msra.mxu0 %v357
      %461 = vmatprep.subr.mxu0 0.0
      %462 = vmatpush1.msra.mxu0 %v358
      %463 = vmatprep.subr.mxu0 0.0
      %464 = vmatpush1.msra.mxu0 %v359
      %465 = vmatprep.subr.mxu0 0.0
      %466 = vmatpush1.msra.mxu0 %v360
      %467 = vmatprep.subr.mxu0 0.0
      %468 = vmatpush1.msra.mxu0 %v361
      %469 = vmatprep.subr.mxu0 0.0
      %470 = vmatpush1.msra.mxu0 %v362
      %471 = vmatprep.subr.mxu0 0.0
      %472 = vmatpush1.msra.mxu0 %v363
      %473 = vmatprep.subr.mxu0 0.0
      %474 = vmatpush1.msra.mxu0 %v364
      %475 = vmatprep.subr.mxu0 0.0
      %476 = vmatpush1.msra.mxu0 %v365
      %477 = vmatprep.subr.mxu0 0.0
      %478 = vmatpush1.msra.mxu0 %v366
      %479 = vmatprep.subr.mxu0 0.0
      %480 = vmatpush1.msra.mxu0 %v367
      %481 = vmatprep.subr.mxu0 0.0
      %482 = vmatpush1.msra.mxu0 %v368
      %483 = vmatprep.subr.mxu0 0.0
      %484 = vmatpush1.msra.mxu0 %v369
      %485 = vmatprep.subr.mxu0 0.0
      %486 = vmatpush1.msra.mxu0 %v370
      %487 = vmatprep.subr.mxu0 0.0
      %488 = vmatpush1.msra.mxu0 %v371
      %489 = vmatprep.subr.mxu0 0.0
      %490 = vmatpush1.msra.mxu0 0.0
      %491 = vmatprep.subr.mxu0 0.0
      %492 = vmatpush1.msra.mxu0 0.0
      %493 = vmatprep.subr.mxu0 0.0
      %494 = vmatpush1.msra.mxu0 0.0
      %495 = vmatprep.subr.mxu0 0.0
      %496 = vmatpush1.msra.mxu0 0.0
      %497 = vmatprep.subr.mxu0 0.0
      %498 = vmatpush1.msra.mxu0 0.0
      %499 = vmatprep.subr.mxu0 0.0
      %500 = vmatpush1.msra.mxu0 0.0
      %501 = vmatprep.subr.mxu0 0.0
      %502 = vmatpush1.msra.mxu0 0.0
      %503 = vmatprep.subr.mxu0 0.0
      %504 = vmatpush1.msra.mxu0 0.0
      %505 = vmatprep.subr.mxu0 0.0
      %506 = vmatpush1.msra.mxu0 0.0
      %507 = vmatprep.subr.mxu0 0.0
      %508 = vmatpush1.msra.mxu0 0.0
      %509 = vmatprep.subr.mxu0 0.0
      %510 = vmatpush1.msra.mxu0 0.0
      %511 = vmatprep.subr.mxu0 0.0
      %512 = vmatpush1.msra.mxu0 0.0
      %513 = vmatprep.subr.mxu0 0.0
      %514 = vmatpush1.msra.mxu0 0.0
      %515 = vmatprep.subr.mxu0 0.0
      %516 = vmatpush1.msra.mxu0 0.0
      %517 = vmatprep.subr.mxu0 0.0
      %518 = vmatpush1.msra.mxu0 0.0
      %519 = vmatprep.subr.mxu0 0.0
      %520 = vmatpush1.msra.mxu0 0.0
      %521 = vmatprep.mubr.f32.mxu0 0.0
      %522 = vmatmul.mubr.f32.gmra.mrb[0].mxu0 %v314
      %v523 = vpop.f32.mrb[0].mxu0
      %v524 = vadd.f32 %v439, %v523
      %v525 = vpop.f32.mrb[0].mxu0
      %526 = vmatprep.mubr.f32.mxu0 0.0
      %527 = vmatmul.mubr.f32.gmra.mrb[0].mxu0 %v317
      %v528 = vpop.f32.mrb[0].mxu0
      %v529 = vadd.f32 %v444, %v528
      %v530 = vpop.f32.mrb[0].mxu0
      %531 = vmatprep.mubr.f32.mxu0 0.0
      %532 = vmatmul.mubr.f32.gmra.mrb[0].mxu0 %v320
      %v533 = vpop.f32.mrb[0].mxu0
      %v534 = vadd.f32 %v449, %v533
      %v535 = vpop.f32.mrb[0].mxu0
      %536 = vmatprep.mubr.f32.mxu0 0.0
      %537 = vmatmul.mubr.f32.gmra.mrb[0].mxu0 %v323
      %v538 = vpop.f32.mrb[0].mxu0
      %v539 = vadd.f32 %v454, %v538
      %v540 = vpop.f32.mrb[0].mxu0
      %541 = vdwg.mxu0
      %s542 = scalar_lea.vmem %s296, 384
      %v543 = vld [vmem:[%s542] sm:$0xff]
      %v544 = vld [vmem:[%s542 + $0x8] sm:$0xff]
      %v545 = vld [vmem:[%s542 + $0x10] sm:$0xff]
      %v546 = vld [vmem:[%s542 + $0x18] sm:$0xff]
      %v547 = vld [vmem:[%s542 + $0x20] sm:$0xff]
      %v548 = vld [vmem:[%s542 + $0x28] sm:$0xff]
      %v549 = vld [vmem:[%s542 + $0x30] sm:$0xff]
      %v550 = vld [vmem:[%s542 + $0x38] sm:$0xff]
      %v551 = vld [vmem:[%s542 + $0x40] sm:$0xff]
      %v552 = vld [vmem:[%s542 + $0x48] sm:$0xff]
      %v553 = vld [vmem:[%s542 + $0x50] sm:$0xff]
      %v554 = vld [vmem:[%s542 + $0x58] sm:$0xff]
      %v555 = vld [vmem:[%s542 + $0x60] sm:$0xff]
      %v556 = vld [vmem:[%s542 + $0x68] sm:$0xff]
      %v557 = vld [vmem:[%s542 + $0x70] sm:$0xff]
      %v558 = vld [vmem:[%s542 + $0x78] sm:$0xff]
      %v559 = vld [vmem:[%s542 + $0x80] sm:$0xff]
      %v560 = vld [vmem:[%s542 + $0x88] sm:$0xff]
      %v561 = vld [vmem:[%s542 + $0x90] sm:$0xff]
      %v562 = vld [vmem:[%s542 + $0x98] sm:$0xff]
      %v563 = vld [vmem:[%s542 + $0xa0] sm:$0xff]
      %v564 = vld [vmem:[%s542 + $0xa8] sm:$0xff]
      %v565 = vld [vmem:[%s542 + $0xb0] sm:$0xff]
      %v566 = vld [vmem:[%s542 + $0xb8] sm:$0xff]
      %v567 = vld [vmem:[%s542 + $0xc0] sm:$0xff]
      %v568 = vld [vmem:[%s542 + $0xc8] sm:$0xff]
      %v569 = vld [vmem:[%s542 + $0xd0] sm:$0xff]
      %v570 = vld [vmem:[%s542 + $0xd8] sm:$0xff]
      %v571 = vld [vmem:[%s542 + $0xe0] sm:$0xff]
      %v572 = vld [vmem:[%s542 + $0xe8] sm:$0xff]
      %v573 = vld [vmem:[%s542 + $0xf0] sm:$0xff]
      %v574 = vld [vmem:[%s542 + $0xf8] sm:$0xff]
      %v575 = vld [vmem:[%s542 + $0x100] sm:$0xff]
      %v576 = vld [vmem:[%s542 + $0x108] sm:$0xff]
      %v577 = vld [vmem:[%s542 + $0x110] sm:$0xff]
      %v578 = vld [vmem:[%s542 + $0x118] sm:$0xff]
      %v579 = vld [vmem:[%s542 + $0x120] sm:$0xff]
      %v580 = vld [vmem:[%s542 + $0x128] sm:$0xff]
      %v581 = vld [vmem:[%s542 + $0x130] sm:$0xff]
      %v582 = vld [vmem:[%s542 + $0x138] sm:$0xff]
      %v583 = vld [vmem:[%s542 + $0x140] sm:$0xff]
      %v584 = vld [vmem:[%s542 + $0x148] sm:$0xff]
      %v585 = vld [vmem:[%s542 + $0x150] sm:$0xff]
      %v586 = vld [vmem:[%s542 + $0x158] sm:$0xff]
      %v587 = vld [vmem:[%s542 + $0x160] sm:$0xff]
      %v588 = vld [vmem:[%s542 + $0x168] sm:$0xff]
      %v589 = vld [vmem:[%s542 + $0x170] sm:$0xff]
      %v590 = vld [vmem:[%s542 + $0x178] sm:$0xff]
      %591 = vmatprep.subr.mxu0 0.0
      %592 = vmatpush1.msra.mxu0 %v543
      %593 = vmatprep.subr.mxu0 0.0
      %594 = vmatpush1.msra.mxu0 %v544
      %595 = vmatprep.subr.mxu0 0.0
      %596 = vmatpush1.msra.mxu0 %v545
      %597 = vmatprep.subr.mxu0 0.0
      %598 = vmatpush1.msra.mxu0 %v546
      %599 = vmatprep.subr.mxu0 0.0
      %600 = vmatpush1.msra.mxu0 %v547
      %601 = vmatprep.subr.mxu0 0.0
      %602 = vmatpush1.msra.mxu0 %v548
      %603 = vmatprep.subr.mxu0 0.0
      %604 = vmatpush1.msra.mxu0 %v549
      %605 = vmatprep.subr.mxu0 0.0
      %606 = vmatpush1.msra.mxu0 %v550
      %607 = vmatprep.subr.mxu0 0.0
      %608 = vmatpush1.msra.mxu0 %v551
      %609 = vmatprep.subr.mxu0 0.0
      %610 = vmatpush1.msra.mxu0 %v552
      %611 = vmatprep.subr.mxu0 0.0
      %612 = vmatpush1.msra.mxu0 %v553
      %613 = vmatprep.subr.mxu0 0.0
      %614 = vmatpush1.msra.mxu0 %v554
      %615 = vmatprep.subr.mxu0 0.0
      %616 = vmatpush1.msra.mxu0 %v555
      %617 = vmatprep.subr.mxu0 0.0
      %618 = vmatpush1.msra.mxu0 %v556
      %619 = vmatprep.subr.mxu0 0.0
      %620 = vmatpush1.msra.mxu0 %v557
      %621 = vmatprep.subr.mxu0 0.0
      %622 = vmatpush1.msra.mxu0 %v558
      %623 = vmatprep.subr.mxu0 0.0
      %624 = vmatpush1.msra.mxu0 %v559
      %625 = vmatprep.subr.mxu0 0.0
      %626 = vmatpush1.msra.mxu0 %v560
      %627 = vmatprep.subr.mxu0 0.0
      %628 = vmatpush1.msra.mxu0 %v561
      %629 = vmatprep.subr.mxu0 0.0
      %630 = vmatpush1.msra.mxu0 %v562
      %631 = vmatprep.subr.mxu0 0.0
      %632 = vmatpush1.msra.mxu0 %v563
      %633 = vmatprep.subr.mxu0 0.0
      %634 = vmatpush1.msra.mxu0 %v564
      %635 = vmatprep.subr.mxu0 0.0
      %636 = vmatpush1.msra.mxu0 %v565
      %637 = vmatprep.subr.mxu0 0.0
      %638 = vmatpush1.msra.mxu0 %v566
      %639 = vmatprep.subr.mxu0 0.0
      %640 = vmatpush1.msra.mxu0 %v567
      %641 = vmatprep.subr.mxu0 0.0
      %642 = vmatpush1.msra.mxu0 %v568
      %643 = vmatprep.subr.mxu0 0.0
      %644 = vmatpush1.msra.mxu0 %v569
      %645 = vmatprep.subr.mxu0 0.0
      %646 = vmatpush1.msra.mxu0 %v570
      %647 = vmatprep.subr.mxu0 0.0
      %648 = vmatpush1.msra.mxu0 %v571
      %649 = vmatprep.subr.mxu0 0.0
      %650 = vmatpush1.msra.mxu0 %v572
      %651 = vmatprep.subr.mxu0 0.0
      %652 = vmatpush1.msra.mxu0 %v573
      %653 = vmatprep.subr.mxu0 0.0
      %654 = vmatpush1.msra.mxu0 %v574
      %655 = vmatprep.mubr.f32.mxu0 %v313
      %656 = vmatmul.mubr.f32.gmra.mrb[0].mxu0 %v312
      %v657 = vpop.f32.mrb[0].mxu0
      %v658 = vadd.f32 0.0, %v657
      %v659 = vpop.f32.mrb[0].mxu0
      %660 = vmatprep.mubr.f32.mxu0 %v316
      %661 = vmatmul.mubr.f32.gmra.mrb[0].mxu0 %v315
      %v662 = vpop.f32.mrb[0].mxu0
      %v663 = vadd.f32 0.0, %v662
      %v664 = vpop.f32.mrb[0].mxu0
      %665 = vmatprep.mubr.f32.mxu0 %v319
      %666 = vmatmul.mubr.f32.gmra.mrb[0].mxu0 %v318
      %v667 = vpop.f32.mrb[0].mxu0
      %v668 = vadd.f32 0.0, %v667
      %v669 = vpop.f32.mrb[0].mxu0
      %670 = vmatprep.mubr.f32.mxu0 %v322
      %671 = vmatmul.mubr.f32.gmra.mrb[0].mxu0 %v321
      %v672 = vpop.f32.mrb[0].mxu0
      %v673 = vadd.f32 0.0, %v672
      %v674 = vpop.f32.mrb[0].mxu0
      %675 = vdwg.mxu0
      %676 = vmatprep.subr.mxu0 0.0
      %677 = vmatpush1.msra.mxu0 %v575
      %678 = vmatprep.subr.mxu0 0.0
      %679 = vmatpush1.msra.mxu0 %v576
      %680 = vmatprep.subr.mxu0 0.0
      %681 = vmatpush1.msra.mxu0 %v577
      %682 = vmatprep.subr.mxu0 0.0
      %683 = vmatpush1.msra.mxu0 %v578
      %684 = vmatprep.subr.mxu0 0.0
      %685 = vmatpush1.msra.mxu0 %v579
      %686 = vmatprep.subr.mxu0 0.0
      %687 = vmatpush1.msra.mxu0 %v580
      %688 = vmatprep.subr.mxu0 0.0
      %689 = vmatpush1.msra.mxu0 %v581
      %690 = vmatprep.subr.mxu0 0.0
      %691 = vmatpush1.msra.mxu0 %v582
      %692 = vmatprep.subr.mxu0 0.0
      %693 = vmatpush1.msra.mxu0 %v583
      %694 = vmatprep.subr.mxu0 0.0
      %695 = vmatpush1.msra.mxu0 %v584
      %696 = vmatprep.subr.mxu0 0.0
      %697 = vmatpush1.msra.mxu0 %v585
      %698 = vmatprep.subr.mxu0 0.0
      %699 = vmatpush1.msra.mxu0 %v586
      %700 = vmatprep.subr.mxu0 0.0
      %701 = vmatpush1.msra.mxu0 %v587
      %702 = vmatprep.subr.mxu0 0.0
      %703 = vmatpush1.msra.mxu0 %v588
      %704 = vmatprep.subr.mxu0 0.0
      %705 = vmatpush1.msra.mxu0 %v589
      %706 = vmatprep.subr.mxu0 0.0
      %707 = vmatpush1.msra.mxu0 %v590
      %708 = vmatprep.subr.mxu0 0.0
      %709 = vmatpush1.msra.mxu0 0.0
      %710 = vmatprep.subr.mxu0 0.0
      %711 = vmatpush1.msra.mxu0 0.0
      %712 = vmatprep.subr.mxu0 0.0
      %713 = vmatpush1.msra.mxu0 0.0
      %714 = vmatprep.subr.mxu0 0.0
      %715 = vmatpush1.msra.mxu0 0.0
      %716 = vmatprep.subr.mxu0 0.0
      %717 = vmatpush1.msra.mxu0 0.0
      %718 = vmatprep.subr.mxu0 0.0
      %719 = vmatpush1.msra.mxu0 0.0
      %720 = vmatprep.subr.mxu0 0.0
      %721 = vmatpush1.msra.mxu0 0.0
      %722 = vmatprep.subr.mxu0 0.0
      %723 = vmatpush1.msra.mxu0 0.0
      %724 = vmatprep.subr.mxu0 0.0
      %725 = vmatpush1.msra.mxu0 0.0
      %726 = vmatprep.subr.mxu0 0.0
      %727 = vmatpush1.msra.mxu0 0.0
      %728 = vmatprep.subr.mxu0 0.0
      %729 = vmatpush1.msra.mxu0 0.0
      %730 = vmatprep.subr.mxu0 0.0
      %731 = vmatpush1.msra.mxu0 0.0
      %732 = vmatprep.subr.mxu0 0.0
      %733 = vmatpush1.msra.mxu0 0.0
      %734 = vmatprep.subr.mxu0 0.0
      %735 = vmatpush1.msra.mxu0 0.0
      %736 = vmatprep.subr.mxu0 0.0
      %737 = vmatpush1.msra.mxu0 0.0
      %738 = vmatprep.subr.mxu0 0.0
      %739 = vmatpush1.msra.mxu0 0.0
      %740 = vmatprep.mubr.f32.mxu0 0.0
      %741 = vmatmul.mubr.f32.gmra.mrb[0].mxu0 %v314
      %v742 = vpop.f32.mrb[0].mxu0
      %v743 = vadd.f32 %v658, %v742
      %v744 = vpop.f32.mrb[0].mxu0
      %745 = vmatprep.mubr.f32.mxu0 0.0
      %746 = vmatmul.mubr.f32.gmra.mrb[0].mxu0 %v317
      %v747 = vpop.f32.mrb[0].mxu0
      %v748 = vadd.f32 %v663, %v747
      %v749 = vpop.f32.mrb[0].mxu0
      %750 = vmatprep.mubr.f32.mxu0 0.0
      %751 = vmatmul.mubr.f32.gmra.mrb[0].mxu0 %v320
      %v752 = vpop.f32.mrb[0].mxu0
      %v753 = vadd.f32 %v668, %v752
      %v754 = vpop.f32.mrb[0].mxu0
      %755 = vmatprep.mubr.f32.mxu0 0.0
      %756 = vmatmul.mubr.f32.gmra.mrb[0].mxu0 %v323
      %v757 = vpop.f32.mrb[0].mxu0
      %v758 = vadd.f32 %v673, %v757
      %v759 = vpop.f32.mrb[0].mxu0
      %760 = vdwg.mxu0
      %v761 = vmax.f32 %v524, %v743
      %v762 = vmax.f32 %v529, %v748
      %v763 = vmax.f32 %v534, %v753
      %v764 = vmax.f32 %v539, %v758
      %s765 = scalar_lea.vmem %s296, 768
      %v766 = vld [vmem:[%s765] sm:$0xff]
      %v767 = vld [vmem:[%s765 + $0x8] sm:$0xff]
      %v768 = vld [vmem:[%s765 + $0x10] sm:$0xff]
      %v769 = vld [vmem:[%s765 + $0x18] sm:$0xff]
      %v770 = vld [vmem:[%s765 + $0x20] sm:$0xff]
      %v771 = vld [vmem:[%s765 + $0x28] sm:$0xff]
      %v772 = vld [vmem:[%s765 + $0x30] sm:$0xff]
      %v773 = vld [vmem:[%s765 + $0x38] sm:$0xff]
      %v774 = vld [vmem:[%s765 + $0x40] sm:$0xff]
      %v775 = vld [vmem:[%s765 + $0x48] sm:$0xff]
      %v776 = vld [vmem:[%s765 + $0x50] sm:$0xff]
      %v777 = vld [vmem:[%s765 + $0x58] sm:$0xff]
      %v778 = vld [vmem:[%s765 + $0x60] sm:$0xff]
      %v779 = vld [vmem:[%s765 + $0x68] sm:$0xff]
      %v780 = vld [vmem:[%s765 + $0x70] sm:$0xff]
      %v781 = vld [vmem:[%s765 + $0x78] sm:$0xff]
      %v782 = vld [vmem:[%s765 + $0x80] sm:$0xff]
      %v783 = vld [vmem:[%s765 + $0x88] sm:$0xff]
      %v784 = vld [vmem:[%s765 + $0x90] sm:$0xff]
      %v785 = vld [vmem:[%s765 + $0x98] sm:$0xff]
      %v786 = vld [vmem:[%s765 + $0xa0] sm:$0xff]
      %v787 = vld [vmem:[%s765 + $0xa8] sm:$0xff]
      %v788 = vld [vmem:[%s765 + $0xb0] sm:$0xff]
      %v789 = vld [vmem:[%s765 + $0xb8] sm:$0xff]
      %v790 = vld [vmem:[%s765 + $0xc0] sm:$0xff]
      %v791 = vld [vmem:[%s765 + $0xc8] sm:$0xff]
      %v792 = vld [vmem:[%s765 + $0xd0] sm:$0xff]
      %v793 = vld [vmem:[%s765 + $0xd8] sm:$0xff]
      %v794 = vld [vmem:[%s765 + $0xe0] sm:$0xff]
      %v795 = vld [vmem:[%s765 + $0xe8] sm:$0xff]
      %v796 = vld [vmem:[%s765 + $0xf0] sm:$0xff]
      %v797 = vld [vmem:[%s765 + $0xf8] sm:$0xff]
      %v798 = vld [vmem:[%s765 + $0x100] sm:$0xff]
      %v799 = vld [vmem:[%s765 + $0x108] sm:$0xff]
      %v800 = vld [vmem:[%s765 + $0x110] sm:$0xff]
      %v801 = vld [vmem:[%s765 + $0x118] sm:$0xff]
      %v802 = vld [vmem:[%s765 + $0x120] sm:$0xff]
      %v803 = vld [vmem:[%s765 + $0x128] sm:$0xff]
      %v804 = vld [vmem:[%s765 + $0x130] sm:$0xff]
      %v805 = vld [vmem:[%s765 + $0x138] sm:$0xff]
      %v806 = vld [vmem:[%s765 + $0x140] sm:$0xff]
      %v807 = vld [vmem:[%s765 + $0x148] sm:$0xff]
      %v808 = vld [vmem:[%s765 + $0x150] sm:$0xff]
      %v809 = vld [vmem:[%s765 + $0x158] sm:$0xff]
      %v810 = vld [vmem:[%s765 + $0x160] sm:$0xff]
      %v811 = vld [vmem:[%s765 + $0x168] sm:$0xff]
      %v812 = vld [vmem:[%s765 + $0x170] sm:$0xff]
      %v813 = vld [vmem:[%s765 + $0x178] sm:$0xff]
      %814 = vmatprep.subr.mxu0 0.0
      %815 = vmatpush1.msra.mxu0 %v766
      %816 = vmatprep.subr.mxu0 0.0
      %817 = vmatpush1.msra.mxu0 %v767
      %818 = vmatprep.subr.mxu0 0.0
      %819 = vmatpush1.msra.mxu0 %v768
      %820 = vmatprep.subr.mxu0 0.0
      %821 = vmatpush1.msra.mxu0 %v769
      %822 = vmatprep.subr.mxu0 0.0
      %823 = vmatpush1.msra.mxu0 %v770
      %824 = vmatprep.subr.mxu0 0.0
      %825 = vmatpush1.msra.mxu0 %v771
      %826 = vmatprep.subr.mxu0 0.0
      %827 = vmatpush1.msra.mxu0 %v772
      %828 = vmatprep.subr.mxu0 0.0
      %829 = vmatpush1.msra.mxu0 %v773
      %830 = vmatprep.subr.mxu0 0.0
      %831 = vmatpush1.msra.mxu0 %v774
      %832 = vmatprep.subr.mxu0 0.0
      %833 = vmatpush1.msra.mxu0 %v775
      %834 = vmatprep.subr.mxu0 0.0
      %835 = vmatpush1.msra.mxu0 %v776
      %836 = vmatprep.subr.mxu0 0.0
      %837 = vmatpush1.msra.mxu0 %v777
      %838 = vmatprep.subr.mxu0 0.0
      %839 = vmatpush1.msra.mxu0 %v778
      %840 = vmatprep.subr.mxu0 0.0
      %841 = vmatpush1.msra.mxu0 %v779
      %842 = vmatprep.subr.mxu0 0.0
      %843 = vmatpush1.msra.mxu0 %v780
      %844 = vmatprep.subr.mxu0 0.0
      %845 = vmatpush1.msra.mxu0 %v781
      %846 = vmatprep.subr.mxu0 0.0
      %847 = vmatpush1.msra.mxu0 %v782
      %848 = vmatprep.subr.mxu0 0.0
      %849 = vmatpush1.msra.mxu0 %v783
      %850 = vmatprep.subr.mxu0 0.0
      %851 = vmatpush1.msra.mxu0 %v784
      %852 = vmatprep.subr.mxu0 0.0
      %853 = vmatpush1.msra.mxu0 %v785
      %854 = vmatprep.subr.mxu0 0.0
      %855 = vmatpush1.msra.mxu0 %v786
      %856 = vmatprep.subr.mxu0 0.0
      %857 = vmatpush1.msra.mxu0 %v787
      %858 = vmatprep.subr.mxu0 0.0
      %859 = vmatpush1.msra.mxu0 %v788
      %860 = vmatprep.subr.mxu0 0.0
      %861 = vmatpush1.msra.mxu0 %v789
      %862 = vmatprep.subr.mxu0 0.0
      %863 = vmatpush1.msra.mxu0 %v790
      %864 = vmatprep.subr.mxu0 0.0
      %865 = vmatpush1.msra.mxu0 %v791
      %866 = vmatprep.subr.mxu0 0.0
      %867 = vmatpush1.msra.mxu0 %v792
      %868 = vmatprep.subr.mxu0 0.0
      %869 = vmatpush1.msra.mxu0 %v793
      %870 = vmatprep.subr.mxu0 0.0
      %871 = vmatpush1.msra.mxu0 %v794
      %872 = vmatprep.subr.mxu0 0.0
      %873 = vmatpush1.msra.mxu0 %v795
      %874 = vmatprep.subr.mxu0 0.0
      %875 = vmatpush1.msra.mxu0 %v796
      %876 = vmatprep.subr.mxu0 0.0
      %877 = vmatpush1.msra.mxu0 %v797
      %878 = vmatprep.mubr.f32.mxu0 %v313
      %879 = vmatmul.mubr.f32.gmra.mrb[0].mxu0 %v312
      %v880 = vpop.f32.mrb[0].mxu0
      %v881 = vadd.f32 0.0, %v880
      %v882 = vpop.f32.mrb[0].mxu0
      %883 = vmatprep.mubr.f32.mxu0 %v316
      %884 = vmatmul.mubr.f32.gmra.mrb[0].mxu0 %v315
      %v885 = vpop.f32.mrb[0].mxu0
      %v886 = vadd.f32 0.0, %v885
      %v887 = vpop.f32.mrb[0].mxu0
      %888 = vmatprep.mubr.f32.mxu0 %v319
      %889 = vmatmul.mubr.f32.gmra.mrb[0].mxu0 %v318
      %v890 = vpop.f32.mrb[0].mxu0
      %v891 = vadd.f32 0.0, %v890
      %v892 = vpop.f32.mrb[0].mxu0
      %893 = vmatprep.mubr.f32.mxu0 %v322
      %894 = vmatmul.mubr.f32.gmra.mrb[0].mxu0 %v321
      %v895 = vpop.f32.mrb[0].mxu0
      %v896 = vadd.f32 0.0, %v895
      %v897 = vpop.f32.mrb[0].mxu0
      %898 = vdwg.mxu0
      %899 = vmatprep.subr.mxu0 0.0
      %900 = vmatpush1.msra.mxu0 %v798
      %901 = vmatprep.subr.mxu0 0.0
      %902 = vmatpush1.msra.mxu0 %v799
      %903 = vmatprep.subr.mxu0 0.0
      %904 = vmatpush1.msra.mxu0 %v800
      %905 = vmatprep.subr.mxu0 0.0
      %906 = vmatpush1.msra.mxu0 %v801
      %907 = vmatprep.subr.mxu0 0.0
      %908 = vmatpush1.msra.mxu0 %v802
      %909 = vmatprep.subr.mxu0 0.0
      %910 = vmatpush1.msra.mxu0 %v803
      %911 = vmatprep.subr.mxu0 0.0
      %912 = vmatpush1.msra.mxu0 %v804
      %913 = vmatprep.subr.mxu0 0.0
      %914 = vmatpush1.msra.mxu0 %v805
      %915 = vmatprep.subr.mxu0 0.0
      %916 = vmatpush1.msra.mxu0 %v806
      %917 = vmatprep.subr.mxu0 0.0
      %918 = vmatpush1.msra.mxu0 %v807
      %919 = vmatprep.subr.mxu0 0.0
      %920 = vmatpush1.msra.mxu0 %v808
      %921 = vmatprep.subr.mxu0 0.0
      %922 = vmatpush1.msra.mxu0 %v809
      %923 = vmatprep.subr.mxu0 0.0
      %924 = vmatpush1.msra.mxu0 %v810
      %925 = vmatprep.subr.mxu0 0.0
      %926 = vmatpush1.msra.mxu0 %v811
      %927 = vmatprep.subr.mxu0 0.0
      %928 = vmatpush1.msra.mxu0 %v812
      %929 = vmatprep.subr.mxu0 0.0
      %930 = vmatpush1.msra.mxu0 %v813
      %931 = vmatprep.subr.mxu0 0.0
      %932 = vmatpush1.msra.mxu0 0.0
      %933 = vmatprep.subr.mxu0 0.0
      %934 = vmatpush1.msra.mxu0 0.0
      %935 = vmatprep.subr.mxu0 0.0
      %936 = vmatpush1.msra.mxu0 0.0
      %937 = vmatprep.subr.mxu0 0.0
      %938 = vmatpush1.msra.mxu0 0.0
      %939 = vmatprep.subr.mxu0 0.0
      %940 = vmatpush1.msra.mxu0 0.0
      %941 = vmatprep.subr.mxu0 0.0
      %942 = vmatpush1.msra.mxu0 0.0
      %943 = vmatprep.subr.mxu0 0.0
      %944 = vmatpush1.msra.mxu0 0.0
      %945 = vmatprep.subr.mxu0 0.0
      %946 = vmatpush1.msra.mxu0 0.0
      %947 = vmatprep.subr.mxu0 0.0
      %948 = vmatpush1.msra.mxu0 0.0
      %949 = vmatprep.subr.mxu0 0.0
      %950 = vmatpush1.msra.mxu0 0.0
      %951 = vmatprep.subr.mxu0 0.0
      %952 = vmatpush1.msra.mxu0 0.0
      %953 = vmatprep.subr.mxu0 0.0
      %954 = vmatpush1.msra.mxu0 0.0
      %955 = vmatprep.subr.mxu0 0.0
      %956 = vmatpush1.msra.mxu0 0.0
      %957 = vmatprep.subr.mxu0 0.0
      %958 = vmatpush1.msra.mxu0 0.0
      %959 = vmatprep.subr.mxu0 0.0
      %960 = vmatpush1.msra.mxu0 0.0
      %961 = vmatprep.subr.mxu0 0.0
      %962 = vmatpush1.msra.mxu0 0.0
      %963 = vmatprep.mubr.f32.mxu0 0.0
      %964 = vmatmul.mubr.f32.gmra.mrb[0].mxu0 %v314
      %v965 = vpop.f32.mrb[0].mxu0
      %v966 = vadd.f32 %v881, %v965
      %v967 = vpop.f32.mrb[0].mxu0
      %968 = vmatprep.mubr.f32.mxu0 0.0
      %969 = vmatmul.mubr.f32.gmra.mrb[0].mxu0 %v317
      %v970 = vpop.f32.mrb[0].mxu0
      %v971 = vadd.f32 %v886, %v970
      %v972 = vpop.f32.mrb[0].mxu0
      %973 = vmatprep.mubr.f32.mxu0 0.0
      %974 = vmatmul.mubr.f32.gmra.mrb[0].mxu0 %v320
      %v975 = vpop.f32.mrb[0].mxu0
      %v976 = vadd.f32 %v891, %v975
      %v977 = vpop.f32.mrb[0].mxu0
      %978 = vmatprep.mubr.f32.mxu0 0.0
      %979 = vmatmul.mubr.f32.gmra.mrb[0].mxu0 %v323
      %v980 = vpop.f32.mrb[0].mxu0
      %v981 = vadd.f32 %v896, %v980
      %v982 = vpop.f32.mrb[0].mxu0
      %983 = vdwg.mxu0
      %v984 = vmax.f32 %v761, %v966
      %v985 = vmax.f32 %v762, %v971
      %v986 = vmax.f32 %v763, %v976
      %v987 = vmax.f32 %v764, %v981
      %s988 = scalar_lea.vmem %s296, 1152
      %v989 = vld [vmem:[%s988] sm:$0xff]
      %v990 = vld [vmem:[%s988 + $0x8] sm:$0xff]
      %v991 = vld [vmem:[%s988 + $0x10] sm:$0xff]
      %v992 = vld [vmem:[%s988 + $0x18] sm:$0xff]
      %v993 = vld [vmem:[%s988 + $0x20] sm:$0xff]
      %v994 = vld [vmem:[%s988 + $0x28] sm:$0xff]
      %v995 = vld [vmem:[%s988 + $0x30] sm:$0xff]
      %v996 = vld [vmem:[%s988 + $0x38] sm:$0xff]
      %v997 = vld [vmem:[%s988 + $0x40] sm:$0xff]
      %v998 = vld [vmem:[%s988 + $0x48] sm:$0xff]
      %v999 = vld [vmem:[%s988 + $0x50] sm:$0xff]
      %v1000 = vld [vmem:[%s988 + $0x58] sm:$0xff]
      %v1001 = vld [vmem:[%s988 + $0x60] sm:$0xff]
      %v1002 = vld [vmem:[%s988 + $0x68] sm:$0xff]
      %v1003 = vld [vmem:[%s988 + $0x70] sm:$0xff]
      %v1004 = vld [vmem:[%s988 + $0x78] sm:$0xff]
      %v1005 = vld [vmem:[%s988 + $0x80] sm:$0xff]
      %v1006 = vld [vmem:[%s988 + $0x88] sm:$0xff]
      %v1007 = vld [vmem:[%s988 + $0x90] sm:$0xff]
      %v1008 = vld [vmem:[%s988 + $0x98] sm:$0xff]
      %v1009 = vld [vmem:[%s988 + $0xa0] sm:$0xff]
      %v1010 = vld [vmem:[%s988 + $0xa8] sm:$0xff]
      %v1011 = vld [vmem:[%s988 + $0xb0] sm:$0xff]
      %v1012 = vld [vmem:[%s988 + $0xb8] sm:$0xff]
      %v1013 = vld [vmem:[%s988 + $0xc0] sm:$0xff]
      %v1014 = vld [vmem:[%s988 + $0xc8] sm:$0xff]
      %v1015 = vld [vmem:[%s988 + $0xd0] sm:$0xff]
      %v1016 = vld [vmem:[%s988 + $0xd8] sm:$0xff]
      %v1017 = vld [vmem:[%s988 + $0xe0] sm:$0xff]
      %v1018 = vld [vmem:[%s988 + $0xe8] sm:$0xff]
      %v1019 = vld [vmem:[%s988 + $0xf0] sm:$0xff]
      %v1020 = vld [vmem:[%s988 + $0xf8] sm:$0xff]
      %v1021 = vld [vmem:[%s988 + $0x100] sm:$0xff]
      %v1022 = vld [vmem:[%s988 + $0x108] sm:$0xff]
      %v1023 = vld [vmem:[%s988 + $0x110] sm:$0xff]
      %v1024 = vld [vmem:[%s988 + $0x118] sm:$0xff]
      %v1025 = vld [vmem:[%s988 + $0x120] sm:$0xff]
      %v1026 = vld [vmem:[%s988 + $0x128] sm:$0xff]
      %v1027 = vld [vmem:[%s988 + $0x130] sm:$0xff]
      %v1028 = vld [vmem:[%s988 + $0x138] sm:$0xff]
      %v1029 = vld [vmem:[%s988 + $0x140] sm:$0xff]
      %v1030 = vld [vmem:[%s988 + $0x148] sm:$0xff]
      %v1031 = vld [vmem:[%s988 + $0x150] sm:$0xff]
      %v1032 = vld [vmem:[%s988 + $0x158] sm:$0xff]
      %v1033 = vld [vmem:[%s988 + $0x160] sm:$0xff]
      %v1034 = vld [vmem:[%s988 + $0x168] sm:$0xff]
      %v1035 = vld [vmem:[%s988 + $0x170] sm:$0xff]
      %v1036 = vld [vmem:[%s988 + $0x178] sm:$0xff]
      %1037 = vmatprep.subr.mxu0 0.0
      %1038 = vmatpush1.msra.mxu0 %v989
      %1039 = vmatprep.subr.mxu0 0.0
      %1040 = vmatpush1.msra.mxu0 %v990
      %1041 = vmatprep.subr.mxu0 0.0
      %1042 = vmatpush1.msra.mxu0 %v991
      %1043 = vmatprep.subr.mxu0 0.0
      %1044 = vmatpush1.msra.mxu0 %v992
      %1045 = vmatprep.subr.mxu0 0.0
      %1046 = vmatpush1.msra.mxu0 %v993
      %1047 = vmatprep.subr.mxu0 0.0
      %1048 = vmatpush1.msra.mxu0 %v994
      %1049 = vmatprep.subr.mxu0 0.0
      %1050 = vmatpush1.msra.mxu0 %v995
      %1051 = vmatprep.subr.mxu0 0.0
      %1052 = vmatpush1.msra.mxu0 %v996
      %1053 = vmatprep.subr.mxu0 0.0
      %1054 = vmatpush1.msra.mxu0 %v997
      %1055 = vmatprep.subr.mxu0 0.0
      %1056 = vmatpush1.msra.mxu0 %v998
      %1057 = vmatprep.subr.mxu0 0.0
      %1058 = vmatpush1.msra.mxu0 %v999
      %1059 = vmatprep.subr.mxu0 0.0
      %1060 = vmatpush1.msra.mxu0 %v1000
      %1061 = vmatprep.subr.mxu0 0.0
      %1062 = vmatpush1.msra.mxu0 %v1001
      %1063 = vmatprep.subr.mxu0 0.0
      %1064 = vmatpush1.msra.mxu0 %v1002
      %1065 = vmatprep.subr.mxu0 0.0
      %1066 = vmatpush1.msra.mxu0 %v1003
      %1067 = vmatprep.subr.mxu0 0.0
      %1068 = vmatpush1.msra.mxu0 %v1004
      %1069 = vmatprep.subr.mxu0 0.0
      %1070 = vmatpush1.msra.mxu0 %v1005
      %1071 = vmatprep.subr.mxu0 0.0
      %1072 = vmatpush1.msra.mxu0 %v1006
      %1073 = vmatprep.subr.mxu0 0.0
      %1074 = vmatpush1.msra.mxu0 %v1007
      %1075 = vmatprep.subr.mxu0 0.0
      %1076 = vmatpush1.msra.mxu0 %v1008
      %1077 = vmatprep.subr.mxu0 0.0
      %1078 = vmatpush1.msra.mxu0 %v1009
      %1079 = vmatprep.subr.mxu0 0.0
      %1080 = vmatpush1.msra.mxu0 %v1010
      %1081 = vmatprep.subr.mxu0 0.0
      %1082 = vmatpush1.msra.mxu0 %v1011
      %1083 = vmatprep.subr.mxu0 0.0
      %1084 = vmatpush1.msra.mxu0 %v1012
      %1085 = vmatprep.subr.mxu0 0.0
      %1086 = vmatpush1.msra.mxu0 %v1013
      %1087 = vmatprep.subr.mxu0 0.0
      %1088 = vmatpush1.msra.mxu0 %v1014
      %1089 = vmatprep.subr.mxu0 0.0
      %1090 = vmatpush1.msra.mxu0 %v1015
      %1091 = vmatprep.subr.mxu0 0.0
      %1092 = vmatpush1.msra.mxu0 %v1016
      %1093 = vmatprep.subr.mxu0 0.0
      %1094 = vmatpush1.msra.mxu0 %v1017
      %1095 = vmatprep.subr.mxu0 0.0
      %1096 = vmatpush1.msra.mxu0 %v1018
      %1097 = vmatprep.subr.mxu0 0.0
      %1098 = vmatpush1.msra.mxu0 %v1019
      %1099 = vmatprep.subr.mxu0 0.0
      %1100 = vmatpush1.msra.mxu0 %v1020
      %1101 = vmatprep.mubr.f32.mxu0 %v313
      %1102 = vmatmul.mubr.f32.gmra.mrb[0].mxu0 %v312
      %v1103 = vpop.f32.mrb[0].mxu0
      %v1104 = vadd.f32 0.0, %v1103
      %v1105 = vpop.f32.mrb[0].mxu0
      %1106 = vmatprep.mubr.f32.mxu0 %v316
      %1107 = vmatmul.mubr.f32.gmra.mrb[0].mxu0 %v315
      %v1108 = vpop.f32.mrb[0].mxu0
      %v1109 = vadd.f32 0.0, %v1108
      %v1110 = vpop.f32.mrb[0].mxu0
      %1111 = vmatprep.mubr.f32.mxu0 %v319
      %1112 = vmatmul.mubr.f32.gmra.mrb[0].mxu0 %v318
      %v1113 = vpop.f32.mrb[0].mxu0
      %v1114 = vadd.f32 0.0, %v1113
      %v1115 = vpop.f32.mrb[0].mxu0
      %1116 = vmatprep.mubr.f32.mxu0 %v322
      %1117 = vmatmul.mubr.f32.gmra.mrb[0].mxu0 %v321
      %v1118 = vpop.f32.mrb[0].mxu0
      %v1119 = vadd.f32 0.0, %v1118
      %v1120 = vpop.f32.mrb[0].mxu0
      %1121 = vdwg.mxu0
      %1122 = vmatprep.subr.mxu0 0.0
      %1123 = vmatpush1.msra.mxu0 %v1021
      %1124 = vmatprep.subr.mxu0 0.0
      %1125 = vmatpush1.msra.mxu0 %v1022
      %1126 = vmatprep.subr.mxu0 0.0
      %1127 = vmatpush1.msra.mxu0 %v1023
      %1128 = vmatprep.subr.mxu0 0.0
      %1129 = vmatpush1.msra.mxu0 %v1024
      %1130 = vmatprep.subr.mxu0 0.0
      %1131 = vmatpush1.msra.mxu0 %v1025
      %1132 = vmatprep.subr.mxu0 0.0
      %1133 = vmatpush1.msra.mxu0 %v1026
      %1134 = vmatprep.subr.mxu0 0.0
      %1135 = vmatpush1.msra.mxu0 %v1027
      %1136 = vmatprep.subr.mxu0 0.0
      %1137 = vmatpush1.msra.mxu0 %v1028
      %1138 = vmatprep.subr.mxu0 0.0
      %1139 = vmatpush1.msra.mxu0 %v1029
      %1140 = vmatprep.subr.mxu0 0.0
      %1141 = vmatpush1.msra.mxu0 %v1030
      %1142 = vmatprep.subr.mxu0 0.0
      %1143 = vmatpush1.msra.mxu0 %v1031
      %1144 = vmatprep.subr.mxu0 0.0
      %1145 = vmatpush1.msra.mxu0 %v1032
      %1146 = vmatprep.subr.mxu0 0.0
      %1147 = vmatpush1.msra.mxu0 %v1033
      %1148 = vmatprep.subr.mxu0 0.0
      %1149 = vmatpush1.msra.mxu0 %v1034
      %1150 = vmatprep.subr.mxu0 0.0
      %1151 = vmatpush1.msra.mxu0 %v1035
      %1152 = vmatprep.subr.mxu0 0.0
      %1153 = vmatpush1.msra.mxu0 %v1036
      %1154 = vmatprep.subr.mxu0 0.0
      %1155 = vmatpush1.msra.mxu0 0.0
      %1156 = vmatprep.subr.mxu0 0.0
      %1157 = vmatpush1.msra.mxu0 0.0
      %1158 = vmatprep.subr.mxu0 0.0
      %1159 = vmatpush1.msra.mxu0 0.0
      %1160 = vmatprep.subr.mxu0 0.0
      %1161 = vmatpush1.msra.mxu0 0.0
      %1162 = vmatprep.subr.mxu0 0.0
      %1163 = vmatpush1.msra.mxu0 0.0
      %1164 = vmatprep.subr.mxu0 0.0
      %1165 = vmatpush1.msra.mxu0 0.0
      %1166 = vmatprep.subr.mxu0 0.0
      %1167 = vmatpush1.msra.mxu0 0.0
      %1168 = vmatprep.subr.mxu0 0.0
      %1169 = vmatpush1.msra.mxu0 0.0
      %1170 = vmatprep.subr.mxu0 0.0
      %1171 = vmatpush1.msra.mxu0 0.0
      %1172 = vmatprep.subr.mxu0 0.0
      %1173 = vmatpush1.msra.mxu0 0.0
      %1174 = vmatprep.subr.mxu0 0.0
      %1175 = vmatpush1.msra.mxu0 0.0
      %1176 = vmatprep.subr.mxu0 0.0
      %1177 = vmatpush1.msra.mxu0 0.0
      %1178 = vmatprep.subr.mxu0 0.0
      %1179 = vmatpush1.msra.mxu0 0.0
      %1180 = vmatprep.subr.mxu0 0.0
      %1181 = vmatpush1.msra.mxu0 0.0
      %1182 = vmatprep.subr.mxu0 0.0
      %1183 = vmatpush1.msra.mxu0 0.0
      %1184 = vmatprep.subr.mxu0 0.0
      %1185 = vmatpush1.msra.mxu0 0.0
      %1186 = vmatprep.mubr.f32.mxu0 0.0
      %1187 = vmatmul.mubr.f32.gmra.mrb[0].mxu0 %v314
      %v1188 = vpop.f32.mrb[0].mxu0
      %v1189 = vadd.f32 %v1104, %v1188
      %v1190 = vpop.f32.mrb[0].mxu0
      %1191 = vmatprep.mubr.f32.mxu0 0.0
      %1192 = vmatmul.mubr.f32.gmra.mrb[0].mxu0 %v317
      %v1193 = vpop.f32.mrb[0].mxu0
      %v1194 = vadd.f32 %v1109, %v1193
      %v1195 = vpop.f32.mrb[0].mxu0
      %1196 = vmatprep.mubr.f32.mxu0 0.0
      %1197 = vmatmul.mubr.f32.gmra.mrb[0].mxu0 %v320
      %v1198 = vpop.f32.mrb[0].mxu0
      %v1199 = vadd.f32 %v1114, %v1198
      %v1200 = vpop.f32.mrb[0].mxu0
      %1201 = vmatprep.mubr.f32.mxu0 0.0
      %1202 = vmatmul.mubr.f32.gmra.mrb[0].mxu0 %v323
      %v1203 = vpop.f32.mrb[0].mxu0
      %v1204 = vadd.f32 %v1119, %v1203
      %v1205 = vpop.f32.mrb[0].mxu0
      %1206 = vdwg.mxu0
      %v1207 = vmax.f32 %v984, %v1189
      %v1208 = vmax.f32 %v985, %v1194
      %v1209 = vmax.f32 %v986, %v1199
      %v1210 = vmax.f32 %v987, %v1204
      %v1211 = vld [vmem:[%s2] sm:$0xff]
      %v1212 = vld [vmem:[%s2 + $0x8] sm:$0xff]
      %v1213 = vld [vmem:[%s2 + $0x10] sm:$0xff]
      %v1214 = vld [vmem:[%s2 + $0x18] sm:$0xff]
      %1216 = vset.pattern.permute.xlu0 0
      %1217 = vperm.xlu0 %1216, %v1211
      %v1218 = vpop.permute.xlu0 %1217
      %1221 = vset.pattern.permute.xlu0 0
      %1222 = vperm.xlu0 %1221, %v1212
      %v1223 = vpop.permute.xlu0 %1222
      %1226 = vset.pattern.permute.xlu0 0
      %1227 = vperm.xlu0 %1226, %v1213
      %v1228 = vpop.permute.xlu0 %1227
      %1231 = vset.pattern.permute.xlu0 0
      %1232 = vperm.xlu0 %1231, %v1214
      %v1233 = vpop.permute.xlu0 %1232
      %v1235 = vadd.f32 %v1207, %v1218
      %v1236 = vadd.f32 %v1208, %v1223
      %v1237 = vadd.f32 %v1209, %v1228
      %v1238 = vadd.f32 %v1210, %v1233
      %v1239 = vld [vmem:[%s301] sm:$0xff]
      %v1240 = vld [vmem:[%s301 + $0x8] sm:$0xff]
      %v1241 = vld [vmem:[%s301 + $0x10] sm:$0xff]
      %v1242 = vld [vmem:[%s301 + $0x18] sm:$0xff]
      %v1243 = vtanh.pop %v1235
      %v1244 = vtanh.pop %v1236
      %v1245 = vtanh.pop %v1237
      %v1246 = vtanh.pop %v1238
      %v1247 = vadd.f32 %v1239, %v1243
      %v1248 = vadd.f32 %v1240, %v1244
      %v1249 = vadd.f32 %v1241, %v1245
      %v1250 = vadd.f32 %v1242, %v1246
      %v1251 = vld [vmem:[%s3] sm:$0xff]
      %v1252 = vld [vmem:[%s3 + $0x8] sm:$0xff]
      %v1253 = vld [vmem:[%s3 + $0x10] sm:$0xff]
      %v1254 = vld [vmem:[%s3 + $0x18] sm:$0xff]
      %vm1255 = vcmp.ge.f32.partialorder %v1247, %v1251
      %vm1256 = vcmp.ge.f32.partialorder %v1248, %v1252
      %vm1257 = vcmp.ge.f32.partialorder %v1249, %v1253
      %vm1258 = vcmp.ge.f32.partialorder %v1250, %v1254
      %v1259 = vsel %vm1255, %v1247, 0.0
      %v1260 = vsel %vm1256, %v1248, 0.0
      %v1261 = vsel %vm1257, %v1249, 0.0
      %v1262 = vsel %vm1258, %v1250, 0.0
      %vm1263 = vcmask 203776
      %1264 = vst.msk [vmem:[%s306] sm:$0xff] %vm1263, %v1259
      %1265 = vst.msk [vmem:[%s306 + $0x8] sm:$0xff] %vm1263, %v1260
      %1266 = vst.msk [vmem:[%s306 + $0x10] sm:$0xff] %vm1263, %v1261
      %1267 = vst.msk [vmem:[%s306 + $0x18] sm:$0xff] %vm1263, %v1262
      %v1268 = vmul.f32 %v1259, 0.2
      %v1269 = vmul.f32 %v1260, 0.2
      %v1270 = vmul.f32 %v1261, 0.2
      %v1271 = vmul.f32 %v1262, 0.2
      %v1272 = vsel %vm1255, 0.0, %v1247
      %v1273 = vsel %vm1256, 0.0, %v1248
      %v1274 = vsel %vm1257, 0.0, %v1249
      %v1275 = vsel %vm1258, 0.0, %v1250
      %v1276 = vld [vmem:[%s4] sm:$0xff]
      %v1277 = vld [vmem:[%s4 + $0x8] sm:$0xff]
      %v1278 = vld [vmem:[%s4 + $0x10] sm:$0xff]
      %v1279 = vld [vmem:[%s4 + $0x18] sm:$0xff]
      %v1280 = vmul.f32 %v1272, %v1276
      %v1281 = vmul.f32 %v1273, %v1277
      %v1282 = vmul.f32 %v1274, %v1278
      %v1283 = vmul.f32 %v1275, %v1279
      %v1284 = vadd.f32 %v1268, %v1280
      %v1285 = vadd.f32 %v1269, %v1281
      %v1286 = vadd.f32 %v1270, %v1282
      %v1287 = vadd.f32 %v1271, %v1283
      %1288 = vst.msk [vmem:[%s311] sm:$0xff] %vm1263, %v1284
      %1289 = vst.msk [vmem:[%s311 + $0x8] sm:$0xff] %vm1263, %v1285
      %1290 = vst.msk [vmem:[%s311 + $0x10] sm:$0xff] %vm1263, %v1286
      %1291 = vst.msk [vmem:[%s311 + $0x18] sm:$0xff] %vm1263, %v1287
      %p1292 = scmp.lt.s32.totalorder %s19, 1
      %s1293 = scalar_select %p1292, %s19, 1
      %s1294 = smul.addr %s1293, 4
      %s1295 = smul.addr %s1294, 8
      %s1296 = scalar_lea.vmem %s6, %s1295
      %p1297 = scmp.lt.s32.totalorder %s19, 1
      %s1298 = scalar_select %p1297, %s19, 1
      %s1299 = smul.addr %s1298, 4
      %s1300 = smul.addr %s1299, 8
      %s1301 = scalar_lea.vmem %s7, %s1300
      // Predicated region
      $region45: #{net_forward.4} parent=43 // pred_check
        %p1302 = pneg %p173
      $region46: #{net_forward.4} parent=43 // pred_check_branch
        %1304 = sbr.rel (%p1302) target = $region48
      $region47: #{net_forward.4} parent=43 // pred_region
        _
      $region48: #{net_forward.4} parent=43 // pred_fallthru
        _
      // Predicated region
      $region49: #{net_forward.4} parent=43 // pred_check
        %p1305 = pneg %p199
      $region50: #{net_forward.4} parent=43 // pred_check_branch
        %1307 = sbr.rel (%p1305) target = $region52
      $region51: #{net_forward.4} parent=43 // pred_region
        _
      $region52: #{net_forward.4} parent=43 // pred_fallthru
        _
    $region44: #{net_forward.4} parent=5 // pred_fallthru
      _
    %p1308 = scmp.le.s32.totalorder 2, %s14
    // Predicated region
    $region53: #{net_forward.4} parent=5 // pred_check
      %p1309 = pneg %p1308
    $region54: #{net_forward.4} parent=5 // pred_check_branch
      %1311 = sbr.rel (%p1309) target = $region56
    $region55: #{net_forward.4} parent=5 // pred_region
      %s1312 = ssub.s32 %s14, 2
      // Predicated region
      $region57: #{net_forward.4} parent=55 // pred_check
        %p1313 = pneg %p179
      $region58: #{net_forward.4} parent=55 // pred_check_branch
        %1315 = sbr.rel (%p1313) target = $region60
      $region59: #{net_forward.4} parent=55 // pred_region
        %p1316 = scmp.lt.s32.totalorder %s20, 1
        %s1317 = scalar_select %p1316, %s20, 1
        %s1318 = smul.addr %s1317, 4
        %s1319 = smul.addr %s1318, 8
        %s1320 = scalar_lea.vmem %s6, %s1319
      $region60: #{net_forward.4} parent=55 // pred_fallthru
        _
      // Predicated region
      $region61: #{net_forward.4} parent=55 // pred_check
        %p1321 = pneg %p205
      $region62: #{net_forward.4} parent=55 // pred_check_branch
        %1323 = sbr.rel (%p1321) target = $region64
      $region63: #{net_forward.4} parent=55 // pred_region
        %p1324 = scmp.lt.s32.totalorder %s20, 1
        %s1325 = scalar_select %p1324, %s20, 1
        %s1326 = smul.addr %s1325, 4
        %s1327 = smul.addr %s1326, 8
        %s1328 = scalar_lea.vmem %s7, %s1327
      $region64: #{net_forward.4} parent=55 // pred_fallthru
        _
    $region56: #{net_forward.4} parent=5 // pred_fallthru
      _
  $region6: #{net_forward.4} parent=0 // loop_footer
    %s18 = sadd.s32 1, %s14
  $region7: #{net_forward.4} parent=0 // loop_footer_branch
    %13 = sbr.rel target = $region3
  $region8: #{net_forward.4} parent=0 // loop_exit
    _

// kernel: net_forward.5
$region0: #{net_forward.5}
  #allocation0 [shape = 'u32[]', space=smem, size = 0x4, offset = 0x4, fixed_abs, tag = 'smem constant byte address 0x4 - core index']
  #allocation1 [shape = 'u32[144,128]{1,0:T(1,128)}', space=vmem, size = 0x12000, scoped, tag = 'internal scratch']
  %s0 = inlined_call_operand.vmem [shape: f32[2,2700], index: 0, kind: input, shape index: {}]
  %s1 = inlined_call_operand.vmem [shape: f32[2,800], index: 1, kind: input, shape index: {}]
  %s2 = inlined_call_operand.vmem [shape: f32[2700,10], index: 2, kind: input, shape index: {}]
  %s3 = inlined_call_operand.vmem [shape: f32[800,10], index: 3, kind: input, shape index: {}]
  %s4 = inlined_call_operand.vmem [shape: f32[1,10], index: 4, kind: input, shape index: {}]
  %s5 = inlined_call_operand.vmem [shape: f32[1,10], index: 5, kind: input, shape index: {}]
  %s6 = inlined_call_operand.vmem [shape: f32[1,10], index: 6, kind: input, shape index: {}]
  %s7 = inlined_call_operand.vmem [shape: f32[2,10], index: 7, kind: input, shape index: {}]
  %s8 = inlined_call_operand.hbm [shape: f32[2,10], index: 8, kind: output, shape index: {0}]
  %s9 = inlined_call_operand.hbm [shape: f32[2,10], index: 9, kind: output, shape index: {1}]
  %10 = xla_tuple %s8, %s9
  %s11 = sld [smem:[#allocation0]]
  $region50: #{net_forward.5} parent=0
    _
  %s13 = ssub.s32 1, %s11
  %s14 = scalar_select 0, %s13, %s11
  $region1: #{net_forward.5} parent=0
    #allocation2 [shape = 'u8[1024]{0}', space=vmem, size = 0x400, scoped, tag = 'output window, operand 0, single buffered']
    #allocation3 [shape = 's32[1]{0}', space=sflag, size = 0x4, scoped, tag = 'scoped memory for net_forward.5']
    #allocation4 [shape = 'u8[1024]{0}', space=vmem, size = 0x400, scoped, tag = 'output window, operand 1, single buffered']
    #allocation5 [shape = 's32[1]{0}', space=sflag, size = 0x4, scoped, tag = 'scoped memory for net_forward.5']
    %15 = vsyncpa [#allocation3], 0
    %16 = vsyncpa [#allocation5], 0
    // Predicated region
    $region2: #{net_forward.5} parent=1 // pred_check
      _
    $region3: #{net_forward.5} parent=1 // pred_check_branch
      %18 = sbr.rel (0) target = $region5
    $region4: #{net_forward.5} parent=1 // pred_region
      _
    $region5: #{net_forward.5} parent=1 // pred_fallthru
      _
    // Predicated region
    $region6: #{net_forward.5} parent=1 // pred_check
      _
    $region7: #{net_forward.5} parent=1 // pred_check_branch
      %20 = sbr.rel (0) target = $region9
    $region8: #{net_forward.5} parent=1 // pred_region
      _
    $region9: #{net_forward.5} parent=1 // pred_fallthru
      _
    // Predicated region
    $region10: #{net_forward.5} parent=1 // pred_check
      _
    $region11: #{net_forward.5} parent=1 // pred_check_branch
      %22 = sbr.rel (0) target = $region13
    $region12: #{net_forward.5} parent=1 // pred_region
      _
    $region13: #{net_forward.5} parent=1 // pred_fallthru
      _
    // Predicated region
    $region14: #{net_forward.5} parent=1 // pred_check
      _
    $region15: #{net_forward.5} parent=1 // pred_check_branch
      %24 = sbr.rel (0) target = $region17
    $region16: #{net_forward.5} parent=1 // pred_region
      _
    $region17: #{net_forward.5} parent=1 // pred_fallthru
      _
    // Predicated region
    $region18: #{net_forward.5} parent=1 // pred_check
      _
    $region19: #{net_forward.5} parent=1 // pred_check_branch
      %26 = sbr.rel (0) target = $region21
    $region20: #{net_forward.5} parent=1 // pred_region
      _
    $region21: #{net_forward.5} parent=1 // pred_fallthru
      _
    // Predicated region
    $region22: #{net_forward.5} parent=1 // pred_check
      _
    $region23: #{net_forward.5} parent=1 // pred_check_branch
      %28 = sbr.rel (0) target = $region25
    $region24: #{net_forward.5} parent=1 // pred_region
      _
    $region25: #{net_forward.5} parent=1 // pred_fallthru
      _
    // Predicated region
    $region26: #{net_forward.5} parent=1 // pred_check
      _
    $region27: #{net_forward.5} parent=1 // pred_check_branch
      %30 = sbr.rel (0) target = $region29
    $region28: #{net_forward.5} parent=1 // pred_region
      _
    $region29: #{net_forward.5} parent=1 // pred_fallthru
      _
    // Predicated region
    $region30: #{net_forward.5} parent=1 // pred_check
      _
    $region31: #{net_forward.5} parent=1 // pred_check_branch
      %32 = sbr.rel (0) target = $region33
    $region32: #{net_forward.5} parent=1 // pred_region
      _
    $region33: #{net_forward.5} parent=1 // pred_fallthru
      _
    %v33 = vld [vmem:[%s0] sm:$0xff]
    %v34 = vld [vmem:[%s0 + $0x8] sm:$0xff]
    %v35 = vld [vmem:[%s0 + $0x10] sm:$0xff]
    %v36 = vld [vmem:[%s0 + $0x18] sm:$0xff]
    %v37 = vld [vmem:[%s0 + $0x20] sm:$0xff]
    %v38 = vld [vmem:[%s0 + $0x28] sm:$0xf]
    %v39 = vld [vmem:[%s2] sm:$0xff]
    %v40 = vld [vmem:[%s2 + $0x8] sm:$0xff]
    %v41 = vld [vmem:[%s2 + $0x10] sm:$0xff]
    %v42 = vld [vmem:[%s2 + $0x18] sm:$0xff]
    %v43 = vld [vmem:[%s2 + $0x20] sm:$0xff]
    %v44 = vld [vmem:[%s2 + $0x28] sm:$0xff]
    %v45 = vld [vmem:[%s2 + $0x30] sm:$0xff]
    %v46 = vld [vmem:[%s2 + $0x38] sm:$0xff]
    %v47 = vld [vmem:[%s2 + $0x40] sm:$0xff]
    %v48 = vld [vmem:[%s2 + $0x48] sm:$0xff]
    %v49 = vld [vmem:[%s2 + $0x50] sm:$0xff]
    %v50 = vld [vmem:[%s2 + $0x58] sm:$0xff]
    %v51 = vld [vmem:[%s2 + $0x60] sm:$0xff]
    %v52 = vld [vmem:[%s2 + $0x68] sm:$0xff]
    %v53 = vld [vmem:[%s2 + $0x70] sm:$0xff]
    %v54 = vld [vmem:[%s2 + $0x78] sm:$0xff]
    %v55 = vld [vmem:[%s2 + $0x80] sm:$0xff]
    %v56 = vld [vmem:[%s2 + $0x88] sm:$0xff]
    %v57 = vld [vmem:[%s2 + $0x90] sm:$0xff]
    %v58 = vld [vmem:[%s2 + $0x98] sm:$0xff]
    %v59 = vld [vmem:[%s2 + $0xa0] sm:$0xff]
    %v60 = vld [vmem:[%s2 + $0xa8] sm:$0xff]
    %v61 = vld [vmem:[%s2 + $0xb0] sm:$0xff]
    %v62 = vld [vmem:[%s2 + $0xb8] sm:$0xff]
    %v63 = vld [vmem:[%s2 + $0xc0] sm:$0xff]
    %v64 = vld [vmem:[%s2 + $0xc8] sm:$0xff]
    %v65 = vld [vmem:[%s2 + $0xd0] sm:$0xff]
    %v66 = vld [vmem:[%s2 + $0xd8] sm:$0xff]
    %v67 = vld [vmem:[%s2 + $0xe0] sm:$0xff]
    %v68 = vld [vmem:[%s2 + $0xe8] sm:$0xff]
    %v69 = vld [vmem:[%s2 + $0xf0] sm:$0xff]
    %v70 = vld [vmem:[%s2 + $0xf8] sm:$0xff]
    %v71 = vld [vmem:[%s2 + $0x100] sm:$0xff]
    %v72 = vld [vmem:[%s2 + $0x108] sm:$0xff]
    %v73 = vld [vmem:[%s2 + $0x110] sm:$0xff]
    %v74 = vld [vmem:[%s2 + $0x118] sm:$0xff]
    %v75 = vld [vmem:[%s2 + $0x120] sm:$0xff]
    %v76 = vld [vmem:[%s2 + $0x128] sm:$0xff]
    %v77 = vld [vmem:[%s2 + $0x130] sm:$0xff]
    %v78 = vld [vmem:[%s2 + $0x138] sm:$0xff]
    %v79 = vld [vmem:[%s2 + $0x140] sm:$0xff]
    %v80 = vld [vmem:[%s2 + $0x148] sm:$0xff]
    %v81 = vld [vmem:[%s2 + $0x150] sm:$0xff]
    %v82 = vld [vmem:[%s2 + $0x158] sm:$0xff]
    %v83 = vld [vmem:[%s2 + $0x160] sm:$0xff]
    %v84 = vld [vmem:[%s2 + $0x168] sm:$0xff]
    %v85 = vld [vmem:[%s2 + $0x170] sm:$0xff]
    %v86 = vld [vmem:[%s2 + $0x178] sm:$0xff]
    %v87 = vld [vmem:[%s2 + $0x180] sm:$0xff]
    %v88 = vld [vmem:[%s2 + $0x188] sm:$0xff]
    %v89 = vld [vmem:[%s2 + $0x190] sm:$0xff]
    %v90 = vld [vmem:[%s2 + $0x198] sm:$0xff]
    %v91 = vld [vmem:[%s2 + $0x1a0] sm:$0xff]
    %v92 = vld [vmem:[%s2 + $0x1a8] sm:$0xff]
    %v93 = vld [vmem:[%s2 + $0x1b0] sm:$0xff]
    %v94 = vld [vmem:[%s2 + $0x1b8] sm:$0xff]
    %v95 = vld [vmem:[%s2 + $0x1c0] sm:$0xff]
    %v96 = vld [vmem:[%s2 + $0x1c8] sm:$0xff]
    %v97 = vld [vmem:[%s2 + $0x1d0] sm:$0xff]
    %v98 = vld [vmem:[%s2 + $0x1d8] sm:$0xff]
    %v99 = vld [vmem:[%s2 + $0x1e0] sm:$0xff]
    %v100 = vld [vmem:[%s2 + $0x1e8] sm:$0xff]
    %v101 = vld [vmem:[%s2 + $0x1f0] sm:$0xff]
    %v102 = vld [vmem:[%s2 + $0x1f8] sm:$0xff]
    %v103 = vld [vmem:[%s2 + $0x200] sm:$0xff]
    %v104 = vld [vmem:[%s2 + $0x208] sm:$0xff]
    %v105 = vld [vmem:[%s2 + $0x210] sm:$0xff]
    %v106 = vld [vmem:[%s2 + $0x218] sm:$0xff]
    %v107 = vld [vmem:[%s2 + $0x220] sm:$0xff]
    %v108 = vld [vmem:[%s2 + $0x228] sm:$0xff]
    %v109 = vld [vmem:[%s2 + $0x230] sm:$0xff]
    %v110 = vld [vmem:[%s2 + $0x238] sm:$0xff]
    %v111 = vld [vmem:[%s2 + $0x240] sm:$0xff]
    %v112 = vld [vmem:[%s2 + $0x248] sm:$0xff]
    %v113 = vld [vmem:[%s2 + $0x250] sm:$0xff]
    %v114 = vld [vmem:[%s2 + $0x258] sm:$0xff]
    %v115 = vld [vmem:[%s2 + $0x260] sm:$0xff]
    %v116 = vld [vmem:[%s2 + $0x268] sm:$0xff]
    %v117 = vld [vmem:[%s2 + $0x270] sm:$0xff]
    %v118 = vld [vmem:[%s2 + $0x278] sm:$0xff]
    %v119 = vld [vmem:[%s2 + $0x280] sm:$0xff]
    %v120 = vld [vmem:[%s2 + $0x288] sm:$0xff]
    %v121 = vld [vmem:[%s2 + $0x290] sm:$0xff]
    %v122 = vld [vmem:[%s2 + $0x298] sm:$0xff]
    %v123 = vld [vmem:[%s2 + $0x2a0] sm:$0xff]
    %v124 = vld [vmem:[%s2 + $0x2a8] sm:$0xff]
    %v125 = vld [vmem:[%s2 + $0x2b0] sm:$0xff]
    %v126 = vld [vmem:[%s2 + $0x2b8] sm:$0xff]
    %v127 = vld [vmem:[%s2 + $0x2c0] sm:$0xff]
    %v128 = vld [vmem:[%s2 + $0x2c8] sm:$0xff]
    %v129 = vld [vmem:[%s2 + $0x2d0] sm:$0xff]
    %v130 = vld [vmem:[%s2 + $0x2d8] sm:$0xff]
    %v131 = vld [vmem:[%s2 + $0x2e0] sm:$0xff]
    %v132 = vld [vmem:[%s2 + $0x2e8] sm:$0xff]
    %v133 = vld [vmem:[%s2 + $0x2f0] sm:$0xff]
    %v134 = vld [vmem:[%s2 + $0x2f8] sm:$0xff]
    %v135 = vld [vmem:[%s2 + $0x300] sm:$0xff]
    %v136 = vld [vmem:[%s2 + $0x308] sm:$0xff]
    %v137 = vld [vmem:[%s2 + $0x310] sm:$0xff]
    %v138 = vld [vmem:[%s2 + $0x318] sm:$0xff]
    %v139 = vld [vmem:[%s2 + $0x320] sm:$0xff]
    %v140 = vld [vmem:[%s2 + $0x328] sm:$0xff]
    %v141 = vld [vmem:[%s2 + $0x330] sm:$0xff]
    %v142 = vld [vmem:[%s2 + $0x338] sm:$0xff]
    %v143 = vld [vmem:[%s2 + $0x340] sm:$0xff]
    %v144 = vld [vmem:[%s2 + $0x348] sm:$0xff]
    %v145 = vld [vmem:[%s2 + $0x350] sm:$0xff]
    %v146 = vld [vmem:[%s2 + $0x358] sm:$0xff]
    %v147 = vld [vmem:[%s2 + $0x360] sm:$0xff]
    %v148 = vld [vmem:[%s2 + $0x368] sm:$0xff]
    %v149 = vld [vmem:[%s2 + $0x370] sm:$0xff]
    %v150 = vld [vmem:[%s2 + $0x378] sm:$0xff]
    %v151 = vld [vmem:[%s2 + $0x380] sm:$0xff]
    %v152 = vld [vmem:[%s2 + $0x388] sm:$0xff]
    %v153 = vld [vmem:[%s2 + $0x390] sm:$0xff]
    %v154 = vld [vmem:[%s2 + $0x398] sm:$0xff]
    %v155 = vld [vmem:[%s2 + $0x3a0] sm:$0xff]
    %v156 = vld [vmem:[%s2 + $0x3a8] sm:$0xff]
    %v157 = vld [vmem:[%s2 + $0x3b0] sm:$0xff]
    %v158 = vld [vmem:[%s2 + $0x3b8] sm:$0xff]
    %v159 = vld [vmem:[%s2 + $0x3c0] sm:$0xff]
    %v160 = vld [vmem:[%s2 + $0x3c8] sm:$0xff]
    %v161 = vld [vmem:[%s2 + $0x3d0] sm:$0xff]
    %v162 = vld [vmem:[%s2 + $0x3d8] sm:$0xff]
    %v163 = vld [vmem:[%s2 + $0x3e0] sm:$0xff]
    %v164 = vld [vmem:[%s2 + $0x3e8] sm:$0xff]
    %v165 = vld [vmem:[%s2 + $0x3f0] sm:$0xff]
    %v166 = vld [vmem:[%s2 + $0x3f8] sm:$0xff]
    %v167 = vld [vmem:[%s2 + $0x400] sm:$0xff]
    %v168 = vld [vmem:[%s2 + $0x408] sm:$0xff]
    %v169 = vld [vmem:[%s2 + $0x410] sm:$0xff]
    %v170 = vld [vmem:[%s2 + $0x418] sm:$0xff]
    %v171 = vld [vmem:[%s2 + $0x420] sm:$0xff]
    %v172 = vld [vmem:[%s2 + $0x428] sm:$0xff]
    %v173 = vld [vmem:[%s2 + $0x430] sm:$0xff]
    %v174 = vld [vmem:[%s2 + $0x438] sm:$0xff]
    %v175 = vld [vmem:[%s2 + $0x440] sm:$0xff]
    %v176 = vld [vmem:[%s2 + $0x448] sm:$0xff]
    %v177 = vld [vmem:[%s2 + $0x450] sm:$0xff]
    %v178 = vld [vmem:[%s2 + $0x458] sm:$0xff]
    %v179 = vld [vmem:[%s2 + $0x460] sm:$0xff]
    %v180 = vld [vmem:[%s2 + $0x468] sm:$0xff]
    %v181 = vld [vmem:[%s2 + $0x470] sm:$0xff]
    %v182 = vld [vmem:[%s2 + $0x478] sm:$0xff]
    %v183 = vld [vmem:[%s2 + $0x480] sm:$0xff]
    %v184 = vld [vmem:[%s2 + $0x488] sm:$0xff]
    %v185 = vld [vmem:[%s2 + $0x490] sm:$0xff]
    %v186 = vld [vmem:[%s2 + $0x498] sm:$0xff]
    %v187 = vld [vmem:[%s2 + $0x4a0] sm:$0xff]
    %v188 = vld [vmem:[%s2 + $0x4a8] sm:$0xff]
    %v189 = vld [vmem:[%s2 + $0x4b0] sm:$0xff]
    %v190 = vld [vmem:[%s2 + $0x4b8] sm:$0xff]
    %v191 = vld [vmem:[%s2 + $0x4c0] sm:$0xff]
    %v192 = vld [vmem:[%s2 + $0x4c8] sm:$0xff]
    %v193 = vld [vmem:[%s2 + $0x4d0] sm:$0xff]
    %v194 = vld [vmem:[%s2 + $0x4d8] sm:$0xff]
    %v195 = vld [vmem:[%s2 + $0x4e0] sm:$0xff]
    %v196 = vld [vmem:[%s2 + $0x4e8] sm:$0xff]
    %v197 = vld [vmem:[%s2 + $0x4f0] sm:$0xff]
    %v198 = vld [vmem:[%s2 + $0x4f8] sm:$0xff]
    %v199 = vld [vmem:[%s2 + $0x500] sm:$0xff]
    %v200 = vld [vmem:[%s2 + $0x508] sm:$0xff]
    %v201 = vld [vmem:[%s2 + $0x510] sm:$0xff]
    %v202 = vld [vmem:[%s2 + $0x518] sm:$0xff]
    %v203 = vld [vmem:[%s2 + $0x520] sm:$0xff]
    %v204 = vld [vmem:[%s2 + $0x528] sm:$0xff]
    %v205 = vld [vmem:[%s2 + $0x530] sm:$0xff]
    %v206 = vld [vmem:[%s2 + $0x538] sm:$0xff]
    %v207 = vld [vmem:[%s2 + $0x540] sm:$0xff]
    %v208 = vld [vmem:[%s2 + $0x548] sm:$0xff]
    %v209 = vld [vmem:[%s2 + $0x550] sm:$0xff]
    %v210 = vld [vmem:[%s2 + $0x558] sm:$0xff]
    %v211 = vld [vmem:[%s2 + $0x560] sm:$0xff]
    %v212 = vld [vmem:[%s2 + $0x568] sm:$0xff]
    %v213 = vld [vmem:[%s2 + $0x570] sm:$0xff]
    %v214 = vld [vmem:[%s2 + $0x578] sm:$0xff]
    %v215 = vld [vmem:[%s2 + $0x580] sm:$0xff]
    %v216 = vld [vmem:[%s2 + $0x588] sm:$0xff]
    %v217 = vld [vmem:[%s2 + $0x590] sm:$0xff]
    %v218 = vld [vmem:[%s2 + $0x598] sm:$0xff]
    %v219 = vld [vmem:[%s2 + $0x5a0] sm:$0xff]
    %v220 = vld [vmem:[%s2 + $0x5a8] sm:$0xff]
    %v221 = vld [vmem:[%s2 + $0x5b0] sm:$0xff]
    %v222 = vld [vmem:[%s2 + $0x5b8] sm:$0xff]
    %v223 = vld [vmem:[%s2 + $0x5c0] sm:$0xff]
    %v224 = vld [vmem:[%s2 + $0x5c8] sm:$0xff]
    %v225 = vld [vmem:[%s2 + $0x5d0] sm:$0xff]
    %v226 = vld [vmem:[%s2 + $0x5d8] sm:$0xff]
    %v227 = vld [vmem:[%s2 + $0x5e0] sm:$0xff]
    %v228 = vld [vmem:[%s2 + $0x5e8] sm:$0xff]
    %v229 = vld [vmem:[%s2 + $0x5f0] sm:$0xff]
    %v230 = vld [vmem:[%s2 + $0x5f8] sm:$0xff]
    %v231 = vld [vmem:[%s2 + $0x600] sm:$0xff]
    %v232 = vld [vmem:[%s2 + $0x608] sm:$0xff]
    %v233 = vld [vmem:[%s2 + $0x610] sm:$0xff]
    %v234 = vld [vmem:[%s2 + $0x618] sm:$0xff]
    %v235 = vld [vmem:[%s2 + $0x620] sm:$0xff]
    %v236 = vld [vmem:[%s2 + $0x628] sm:$0xff]
    %v237 = vld [vmem:[%s2 + $0x630] sm:$0xff]
    %v238 = vld [vmem:[%s2 + $0x638] sm:$0xff]
    %v239 = vld [vmem:[%s2 + $0x640] sm:$0xff]
    %v240 = vld [vmem:[%s2 + $0x648] sm:$0xff]
    %v241 = vld [vmem:[%s2 + $0x650] sm:$0xff]
    %v242 = vld [vmem:[%s2 + $0x658] sm:$0xff]
    %v243 = vld [vmem:[%s2 + $0x660] sm:$0xff]
    %v244 = vld [vmem:[%s2 + $0x668] sm:$0xff]
    %v245 = vld [vmem:[%s2 + $0x670] sm:$0xff]
    %v246 = vld [vmem:[%s2 + $0x678] sm:$0xff]
    %v247 = vld [vmem:[%s2 + $0x680] sm:$0xff]
    %v248 = vld [vmem:[%s2 + $0x688] sm:$0xff]
    %v249 = vld [vmem:[%s2 + $0x690] sm:$0xff]
    %v250 = vld [vmem:[%s2 + $0x698] sm:$0xff]
    %v251 = vld [vmem:[%s2 + $0x6a0] sm:$0xff]
    %v252 = vld [vmem:[%s2 + $0x6a8] sm:$0xff]
    %v253 = vld [vmem:[%s2 + $0x6b0] sm:$0xff]
    %v254 = vld [vmem:[%s2 + $0x6b8] sm:$0xff]
    %v255 = vld [vmem:[%s2 + $0x6c0] sm:$0xff]
    %v256 = vld [vmem:[%s2 + $0x6c8] sm:$0xff]
    %v257 = vld [vmem:[%s2 + $0x6d0] sm:$0xff]
    %v258 = vld [vmem:[%s2 + $0x6d8] sm:$0xff]
    %v259 = vld [vmem:[%s2 + $0x6e0] sm:$0xff]
    %v260 = vld [vmem:[%s2 + $0x6e8] sm:$0xff]
    %v261 = vld [vmem:[%s2 + $0x6f0] sm:$0xff]
    %v262 = vld [vmem:[%s2 + $0x6f8] sm:$0xff]
    %v263 = vld [vmem:[%s2 + $0x700] sm:$0xff]
    %v264 = vld [vmem:[%s2 + $0x708] sm:$0xff]
    %v265 = vld [vmem:[%s2 + $0x710] sm:$0xff]
    %v266 = vld [vmem:[%s2 + $0x718] sm:$0xff]
    %v267 = vld [vmem:[%s2 + $0x720] sm:$0xff]
    %v268 = vld [vmem:[%s2 + $0x728] sm:$0xff]
    %v269 = vld [vmem:[%s2 + $0x730] sm:$0xff]
    %v270 = vld [vmem:[%s2 + $0x738] sm:$0xff]
    %v271 = vld [vmem:[%s2 + $0x740] sm:$0xff]
    %v272 = vld [vmem:[%s2 + $0x748] sm:$0xff]
    %v273 = vld [vmem:[%s2 + $0x750] sm:$0xff]
    %v274 = vld [vmem:[%s2 + $0x758] sm:$0xff]
    %v275 = vld [vmem:[%s2 + $0x760] sm:$0xff]
    %v276 = vld [vmem:[%s2 + $0x768] sm:$0xff]
    %v277 = vld [vmem:[%s2 + $0x770] sm:$0xff]
    %v278 = vld [vmem:[%s2 + $0x778] sm:$0xff]
    %v279 = vld [vmem:[%s2 + $0x780] sm:$0xff]
    %v280 = vld [vmem:[%s2 + $0x788] sm:$0xff]
    %v281 = vld [vmem:[%s2 + $0x790] sm:$0xff]
    %v282 = vld [vmem:[%s2 + $0x798] sm:$0xff]
    %v283 = vld [vmem:[%s2 + $0x7a0] sm:$0xff]
    %v284 = vld [vmem:[%s2 + $0x7a8] sm:$0xff]
    %v285 = vld [vmem:[%s2 + $0x7b0] sm:$0xff]
    %v286 = vld [vmem:[%s2 + $0x7b8] sm:$0xff]
    %v287 = vld [vmem:[%s2 + $0x7c0] sm:$0xff]
    %v288 = vld [vmem:[%s2 + $0x7c8] sm:$0xff]
    %v289 = vld [vmem:[%s2 + $0x7d0] sm:$0xff]
    %v290 = vld [vmem:[%s2 + $0x7d8] sm:$0xff]
    %v291 = vld [vmem:[%s2 + $0x7e0] sm:$0xff]
    %v292 = vld [vmem:[%s2 + $0x7e8] sm:$0xff]
    %v293 = vld [vmem:[%s2 + $0x7f0] sm:$0xff]
    %v294 = vld [vmem:[%s2 + $0x7f8] sm:$0xff]
    %v295 = vld [vmem:[%s2 + $0x800] sm:$0xff]
    %v296 = vld [vmem:[%s2 + $0x808] sm:$0xff]
    %v297 = vld [vmem:[%s2 + $0x810] sm:$0xff]
    %v298 = vld [vmem:[%s2 + $0x818] sm:$0xff]
    %v299 = vld [vmem:[%s2 + $0x820] sm:$0xff]
    %v300 = vld [vmem:[%s2 + $0x828] sm:$0xff]
    %v301 = vld [vmem:[%s2 + $0x830] sm:$0xff]
    %v302 = vld [vmem:[%s2 + $0x838] sm:$0xff]
    %v303 = vld [vmem:[%s2 + $0x840] sm:$0xff]
    %v304 = vld [vmem:[%s2 + $0x848] sm:$0xff]
    %v305 = vld [vmem:[%s2 + $0x850] sm:$0xff]
    %v306 = vld [vmem:[%s2 + $0x858] sm:$0xff]
    %v307 = vld [vmem:[%s2 + $0x860] sm:$0xff]
    %v308 = vld [vmem:[%s2 + $0x868] sm:$0xff]
    %v309 = vld [vmem:[%s2 + $0x870] sm:$0xff]
    %v310 = vld [vmem:[%s2 + $0x878] sm:$0xff]
    %v311 = vld [vmem:[%s2 + $0x880] sm:$0xff]
    %v312 = vld [vmem:[%s2 + $0x888] sm:$0xff]
    %v313 = vld [vmem:[%s2 + $0x890] sm:$0xff]
    %v314 = vld [vmem:[%s2 + $0x898] sm:$0xff]
    %v315 = vld [vmem:[%s2 + $0x8a0] sm:$0xff]
    %v316 = vld [vmem:[%s2 + $0x8a8] sm:$0xff]
    %v317 = vld [vmem:[%s2 + $0x8b0] sm:$0xff]
    %v318 = vld [vmem:[%s2 + $0x8b8] sm:$0xff]
    %v319 = vld [vmem:[%s2 + $0x8c0] sm:$0xff]
    %v320 = vld [vmem:[%s2 + $0x8c8] sm:$0xff]
    %v321 = vld [vmem:[%s2 + $0x8d0] sm:$0xff]
    %v322 = vld [vmem:[%s2 + $0x8d8] sm:$0xff]
    %v323 = vld [vmem:[%s2 + $0x8e0] sm:$0xff]
    %v324 = vld [vmem:[%s2 + $0x8e8] sm:$0xff]
    %v325 = vld [vmem:[%s2 + $0x8f0] sm:$0xff]
    %v326 = vld [vmem:[%s2 + $0x8f8] sm:$0xff]
    %v327 = vld [vmem:[%s2 + $0x900] sm:$0xff]
    %v328 = vld [vmem:[%s2 + $0x908] sm:$0xff]
    %v329 = vld [vmem:[%s2 + $0x910] sm:$0xff]
    %v330 = vld [vmem:[%s2 + $0x918] sm:$0xff]
    %v331 = vld [vmem:[%s2 + $0x920] sm:$0xff]
    %v332 = vld [vmem:[%s2 + $0x928] sm:$0xff]
    %v333 = vld [vmem:[%s2 + $0x930] sm:$0xff]
    %v334 = vld [vmem:[%s2 + $0x938] sm:$0xff]
    %v335 = vld [vmem:[%s2 + $0x940] sm:$0xff]
    %v336 = vld [vmem:[%s2 + $0x948] sm:$0xff]
    %v337 = vld [vmem:[%s2 + $0x950] sm:$0xff]
    %v338 = vld [vmem:[%s2 + $0x958] sm:$0xff]
    %v339 = vld [vmem:[%s2 + $0x960] sm:$0xff]
    %v340 = vld [vmem:[%s2 + $0x968] sm:$0xff]
    %v341 = vld [vmem:[%s2 + $0x970] sm:$0xff]
    %v342 = vld [vmem:[%s2 + $0x978] sm:$0xff]
    %v343 = vld [vmem:[%s2 + $0x980] sm:$0xff]
    %v344 = vld [vmem:[%s2 + $0x988] sm:$0xff]
    %v345 = vld [vmem:[%s2 + $0x990] sm:$0xff]
    %v346 = vld [vmem:[%s2 + $0x998] sm:$0xff]
    %v347 = vld [vmem:[%s2 + $0x9a0] sm:$0xff]
    %v348 = vld [vmem:[%s2 + $0x9a8] sm:$0xff]
    %v349 = vld [vmem:[%s2 + $0x9b0] sm:$0xff]
    %v350 = vld [vmem:[%s2 + $0x9b8] sm:$0xff]
    %v351 = vld [vmem:[%s2 + $0x9c0] sm:$0xff]
    %v352 = vld [vmem:[%s2 + $0x9c8] sm:$0xff]
    %v353 = vld [vmem:[%s2 + $0x9d0] sm:$0xff]
    %v354 = vld [vmem:[%s2 + $0x9d8] sm:$0xff]
    %v355 = vld [vmem:[%s2 + $0x9e0] sm:$0xff]
    %v356 = vld [vmem:[%s2 + $0x9e8] sm:$0xff]
    %v357 = vld [vmem:[%s2 + $0x9f0] sm:$0xff]
    %v358 = vld [vmem:[%s2 + $0x9f8] sm:$0xff]
    %v359 = vld [vmem:[%s2 + $0xa00] sm:$0xff]
    %v360 = vld [vmem:[%s2 + $0xa08] sm:$0xff]
    %v361 = vld [vmem:[%s2 + $0xa10] sm:$0xff]
    %v362 = vld [vmem:[%s2 + $0xa18] sm:$0xff]
    %v363 = vld [vmem:[%s2 + $0xa20] sm:$0xff]
    %v364 = vld [vmem:[%s2 + $0xa28] sm:$0xff]
    %v365 = vld [vmem:[%s2 + $0xa30] sm:$0xff]
    %v366 = vld [vmem:[%s2 + $0xa38] sm:$0xff]
    %v367 = vld [vmem:[%s2 + $0xa40] sm:$0xff]
    %v368 = vld [vmem:[%s2 + $0xa48] sm:$0xff]
    %v369 = vld [vmem:[%s2 + $0xa50] sm:$0xff]
    %v370 = vld [vmem:[%s2 + $0xa58] sm:$0xff]
    %v371 = vld [vmem:[%s2 + $0xa60] sm:$0xff]
    %v372 = vld [vmem:[%s2 + $0xa68] sm:$0xff]
    %v373 = vld [vmem:[%s2 + $0xa70] sm:$0xff]
    %v374 = vld [vmem:[%s2 + $0xa78] sm:$0xff]
    %v375 = vld [vmem:[%s2 + $0xa80] sm:$0xff]
    %v376 = vld [vmem:[%s2 + $0xa88] sm:$0xf]
    %v377 = vld [vmem:[%s1] sm:$0xff]
    %v378 = vld [vmem:[%s1 + $0x8] sm:$0x3f]
    %v379 = vld [vmem:[%s3] sm:$0xff]
    %v380 = vld [vmem:[%s3 + $0x8] sm:$0xff]
    %v381 = vld [vmem:[%s3 + $0x10] sm:$0xff]
    %v382 = vld [vmem:[%s3 + $0x18] sm:$0xff]
    %v383 = vld [vmem:[%s3 + $0x20] sm:$0xff]
    %v384 = vld [vmem:[%s3 + $0x28] sm:$0xff]
    %v385 = vld [vmem:[%s3 + $0x30] sm:$0xff]
    %v386 = vld [vmem:[%s3 + $0x38] sm:$0xff]
    %v387 = vld [vmem:[%s3 + $0x40] sm:$0xff]
    %v388 = vld [vmem:[%s3 + $0x48] sm:$0xff]
    %v389 = vld [vmem:[%s3 + $0x50] sm:$0xff]
    %v390 = vld [vmem:[%s3 + $0x58] sm:$0xff]
    %v391 = vld [vmem:[%s3 + $0x60] sm:$0xff]
    %v392 = vld [vmem:[%s3 + $0x68] sm:$0xff]
    %v393 = vld [vmem:[%s3 + $0x70] sm:$0xff]
    %v394 = vld [vmem:[%s3 + $0x78] sm:$0xff]
    %v395 = vld [vmem:[%s3 + $0x80] sm:$0xff]
    %v396 = vld [vmem:[%s3 + $0x88] sm:$0xff]
    %v397 = vld [vmem:[%s3 + $0x90] sm:$0xff]
    %v398 = vld [vmem:[%s3 + $0x98] sm:$0xff]
    %v399 = vld [vmem:[%s3 + $0xa0] sm:$0xff]
    %v400 = vld [vmem:[%s3 + $0xa8] sm:$0xff]
    %v401 = vld [vmem:[%s3 + $0xb0] sm:$0xff]
    %v402 = vld [vmem:[%s3 + $0xb8] sm:$0xff]
    %v403 = vld [vmem:[%s3 + $0xc0] sm:$0xff]
    %v404 = vld [vmem:[%s3 + $0xc8] sm:$0xff]
    %v405 = vld [vmem:[%s3 + $0xd0] sm:$0xff]
    %v406 = vld [vmem:[%s3 + $0xd8] sm:$0xff]
    %v407 = vld [vmem:[%s3 + $0xe0] sm:$0xff]
    %v408 = vld [vmem:[%s3 + $0xe8] sm:$0xff]
    %v409 = vld [vmem:[%s3 + $0xf0] sm:$0xff]
    %v410 = vld [vmem:[%s3 + $0xf8] sm:$0xff]
    %v411 = vld [vmem:[%s3 + $0x100] sm:$0xff]
    %v412 = vld [vmem:[%s3 + $0x108] sm:$0xff]
    %v413 = vld [vmem:[%s3 + $0x110] sm:$0xff]
    %v414 = vld [vmem:[%s3 + $0x118] sm:$0xff]
    %v415 = vld [vmem:[%s3 + $0x120] sm:$0xff]
    %v416 = vld [vmem:[%s3 + $0x128] sm:$0xff]
    %v417 = vld [vmem:[%s3 + $0x130] sm:$0xff]
    %v418 = vld [vmem:[%s3 + $0x138] sm:$0xff]
    %v419 = vld [vmem:[%s3 + $0x140] sm:$0xff]
    %v420 = vld [vmem:[%s3 + $0x148] sm:$0xff]
    %v421 = vld [vmem:[%s3 + $0x150] sm:$0xff]
    %v422 = vld [vmem:[%s3 + $0x158] sm:$0xff]
    %v423 = vld [vmem:[%s3 + $0x160] sm:$0xff]
    %v424 = vld [vmem:[%s3 + $0x168] sm:$0xff]
    %v425 = vld [vmem:[%s3 + $0x170] sm:$0xff]
    %v426 = vld [vmem:[%s3 + $0x178] sm:$0xff]
    %v427 = vld [vmem:[%s3 + $0x180] sm:$0xff]
    %v428 = vld [vmem:[%s3 + $0x188] sm:$0xff]
    %v429 = vld [vmem:[%s3 + $0x190] sm:$0xff]
    %v430 = vld [vmem:[%s3 + $0x198] sm:$0xff]
    %v431 = vld [vmem:[%s3 + $0x1a0] sm:$0xff]
    %v432 = vld [vmem:[%s3 + $0x1a8] sm:$0xff]
    %v433 = vld [vmem:[%s3 + $0x1b0] sm:$0xff]
    %v434 = vld [vmem:[%s3 + $0x1b8] sm:$0xff]
    %v435 = vld [vmem:[%s3 + $0x1c0] sm:$0xff]
    %v436 = vld [vmem:[%s3 + $0x1c8] sm:$0xff]
    %v437 = vld [vmem:[%s3 + $0x1d0] sm:$0xff]
    %v438 = vld [vmem:[%s3 + $0x1d8] sm:$0xff]
    %v439 = vld [vmem:[%s3 + $0x1e0] sm:$0xff]
    %v440 = vld [vmem:[%s3 + $0x1e8] sm:$0xff]
    %v441 = vld [vmem:[%s3 + $0x1f0] sm:$0xff]
    %v442 = vld [vmem:[%s3 + $0x1f8] sm:$0xff]
    %v443 = vld [vmem:[%s3 + $0x200] sm:$0xff]
    %v444 = vld [vmem:[%s3 + $0x208] sm:$0xff]
    %v445 = vld [vmem:[%s3 + $0x210] sm:$0xff]
    %v446 = vld [vmem:[%s3 + $0x218] sm:$0xff]
    %v447 = vld [vmem:[%s3 + $0x220] sm:$0xff]
    %v448 = vld [vmem:[%s3 + $0x228] sm:$0xff]
    %v449 = vld [vmem:[%s3 + $0x230] sm:$0xff]
    %v450 = vld [vmem:[%s3 + $0x238] sm:$0xff]
    %v451 = vld [vmem:[%s3 + $0x240] sm:$0xff]
    %v452 = vld [vmem:[%s3 + $0x248] sm:$0xff]
    %v453 = vld [vmem:[%s3 + $0x250] sm:$0xff]
    %v454 = vld [vmem:[%s3 + $0x258] sm:$0xff]
    %v455 = vld [vmem:[%s3 + $0x260] sm:$0xff]
    %v456 = vld [vmem:[%s3 + $0x268] sm:$0xff]
    %v457 = vld [vmem:[%s3 + $0x270] sm:$0xff]
    %v458 = vld [vmem:[%s3 + $0x278] sm:$0xff]
    %v459 = vld [vmem:[%s3 + $0x280] sm:$0xff]
    %v460 = vld [vmem:[%s3 + $0x288] sm:$0xff]
    %v461 = vld [vmem:[%s3 + $0x290] sm:$0xff]
    %v462 = vld [vmem:[%s3 + $0x298] sm:$0xff]
    %v463 = vld [vmem:[%s3 + $0x2a0] sm:$0xff]
    %v464 = vld [vmem:[%s3 + $0x2a8] sm:$0xff]
    %v465 = vld [vmem:[%s3 + $0x2b0] sm:$0xff]
    %v466 = vld [vmem:[%s3 + $0x2b8] sm:$0xff]
    %v467 = vld [vmem:[%s3 + $0x2c0] sm:$0xff]
    %v468 = vld [vmem:[%s3 + $0x2c8] sm:$0xff]
    %v469 = vld [vmem:[%s3 + $0x2d0] sm:$0xff]
    %v470 = vld [vmem:[%s3 + $0x2d8] sm:$0xff]
    %v471 = vld [vmem:[%s3 + $0x2e0] sm:$0xff]
    %v472 = vld [vmem:[%s3 + $0x2e8] sm:$0xff]
    %v473 = vld [vmem:[%s3 + $0x2f0] sm:$0xff]
    %v474 = vld [vmem:[%s3 + $0x2f8] sm:$0xff]
    %v475 = vld [vmem:[%s3 + $0x300] sm:$0xff]
    %v476 = vld [vmem:[%s3 + $0x308] sm:$0xff]
    %v477 = vld [vmem:[%s3 + $0x310] sm:$0xff]
    %v478 = vld [vmem:[%s3 + $0x318] sm:$0xff]
    %v481 = vcombine.high %v377, %v377
    %v483 = vunpack.c.l.s4 1983009808
    %v484 = vunpack.c.0.s8 %v483
    %v485 = vlaneseq
    %v486 = vshrl.u32 %v485, 7
    %v487 = vsub.s32 %v484, %v486
    %v488 = vrot.slane %v377, %v487
    %v490 = vunpack.c.l.s4 1983009808
    %v491 = vunpack.c.0.s8 %v490
    %v492 = vlaneseq
    %v493 = vshrl.u32 %v492, 7
    %v494 = vsub.s32 %v491, %v493
    %v495 = vrot.slane %v481, %v494
    %v496 = vcombine.high %v488, %v488
    %v497 = vcombine.high %v495, %v495
    %v498 = vcombine.high %v378, %v378
    %v500 = vunpack.c.l.s4 1983009808
    %v501 = vunpack.c.0.s8 %v500
    %v502 = vlaneseq
    %v503 = vshrl.u32 %v502, 7
    %v504 = vsub.s32 %v501, %v503
    %v505 = vrot.slane %v378, %v504
    %v507 = vunpack.c.l.s4 1983009808
    %v508 = vunpack.c.0.s8 %v507
    %v509 = vlaneseq
    %v510 = vshrl.u32 %v509, 7
    %v511 = vsub.s32 %v508, %v510
    %v512 = vrot.slane %v498, %v511
    %v513 = vcombine.high %v505, %v505
    %vm520 = vcmask 261120
    %v521 = vsel %vm520, %v512, 0
    %523 = vmatprep.subr.mxu0 0.0
    %524 = vmatpush1.msra.mxu0 %v379
    %525 = vmatprep.subr.mxu0 0.0
    %526 = vmatpush1.msra.mxu0 %v380
    %527 = vmatprep.subr.mxu0 0.0
    %528 = vmatpush1.msra.mxu0 %v381
    %529 = vmatprep.subr.mxu0 0.0
    %530 = vmatpush1.msra.mxu0 %v382
    %531 = vmatprep.subr.mxu0 0.0
    %532 = vmatpush1.msra.mxu0 %v383
    %533 = vmatprep.subr.mxu0 0.0
    %534 = vmatpush1.msra.mxu0 %v384
    %535 = vmatprep.subr.mxu0 0.0
    %536 = vmatpush1.msra.mxu0 %v385
    %537 = vmatprep.subr.mxu0 0.0
    %538 = vmatpush1.msra.mxu0 %v386
    %539 = vmatprep.subr.mxu0 0.0
    %540 = vmatpush1.msra.mxu0 %v387
    %541 = vmatprep.subr.mxu0 0.0
    %542 = vmatpush1.msra.mxu0 %v388
    %543 = vmatprep.subr.mxu0 0.0
    %544 = vmatpush1.msra.mxu0 %v389
    %545 = vmatprep.subr.mxu0 0.0
    %546 = vmatpush1.msra.mxu0 %v390
    %547 = vmatprep.subr.mxu0 0.0
    %548 = vmatpush1.msra.mxu0 %v391
    %549 = vmatprep.subr.mxu0 0.0
    %550 = vmatpush1.msra.mxu0 %v392
    %551 = vmatprep.subr.mxu0 0.0
    %552 = vmatpush1.msra.mxu0 %v393
    %553 = vmatprep.subr.mxu0 0.0
    %554 = vmatpush1.msra.mxu0 %v394
    %555 = vmatprep.subr.mxu0 0.0
    %556 = vmatpush1.msra.mxu0 %v395
    %557 = vmatprep.subr.mxu0 0.0
    %558 = vmatpush1.msra.mxu0 %v396
    %559 = vmatprep.subr.mxu0 0.0
    %560 = vmatpush1.msra.mxu0 %v397
    %561 = vmatprep.subr.mxu0 0.0
    %562 = vmatpush1.msra.mxu0 %v398
    %563 = vmatprep.subr.mxu0 0.0
    %564 = vmatpush1.msra.mxu0 %v399
    %565 = vmatprep.subr.mxu0 0.0
    %566 = vmatpush1.msra.mxu0 %v400
    %567 = vmatprep.subr.mxu0 0.0
    %568 = vmatpush1.msra.mxu0 %v401
    %569 = vmatprep.subr.mxu0 0.0
    %570 = vmatpush1.msra.mxu0 %v402
    %571 = vmatprep.subr.mxu0 0.0
    %572 = vmatpush1.msra.mxu0 %v403
    %573 = vmatprep.subr.mxu0 0.0
    %574 = vmatpush1.msra.mxu0 %v404
    %575 = vmatprep.subr.mxu0 0.0
    %576 = vmatpush1.msra.mxu0 %v405
    %577 = vmatprep.subr.mxu0 0.0
    %578 = vmatpush1.msra.mxu0 %v406
    %579 = vmatprep.subr.mxu0 0.0
    %580 = vmatpush1.msra.mxu0 %v407
    %581 = vmatprep.subr.mxu0 0.0
    %582 = vmatpush1.msra.mxu0 %v408
    %583 = vmatprep.subr.mxu0 0.0
    %584 = vmatpush1.msra.mxu0 %v409
    %585 = vmatprep.subr.mxu0 0.0
    %586 = vmatpush1.msra.mxu0 %v410
    %587 = vmatprep.mubr.f32.mxu0 %v496
    %588 = vmatmul.mubr.f32.gmra.mrb[0].mxu0 %v488
    %v589 = vpop.f32.mrb[0].mxu0
    %v590 = vadd.f32 0.0, %v589
    %v591 = vpop.f32.mrb[0].mxu0
    %592 = vdwg.mxu0
    %593 = vmatprep.subr.mxu0 0.0
    %594 = vmatpush1.msra.mxu0 %v411
    %595 = vmatprep.subr.mxu0 0.0
    %596 = vmatpush1.msra.mxu0 %v412
    %597 = vmatprep.subr.mxu0 0.0
    %598 = vmatpush1.msra.mxu0 %v413
    %599 = vmatprep.subr.mxu0 0.0
    %600 = vmatpush1.msra.mxu0 %v414
    %601 = vmatprep.subr.mxu0 0.0
    %602 = vmatpush1.msra.mxu0 %v415
    %603 = vmatprep.subr.mxu0 0.0
    %604 = vmatpush1.msra.mxu0 %v416
    %605 = vmatprep.subr.mxu0 0.0
    %606 = vmatpush1.msra.mxu0 %v417
    %607 = vmatprep.subr.mxu0 0.0
    %608 = vmatpush1.msra.mxu0 %v418
    %609 = vmatprep.subr.mxu0 0.0
    %610 = vmatpush1.msra.mxu0 %v419
    %611 = vmatprep.subr.mxu0 0.0
    %612 = vmatpush1.msra.mxu0 %v420
    %613 = vmatprep.subr.mxu0 0.0
    %614 = vmatpush1.msra.mxu0 %v421
    %615 = vmatprep.subr.mxu0 0.0
    %616 = vmatpush1.msra.mxu0 %v422
    %617 = vmatprep.subr.mxu0 0.0
    %618 = vmatpush1.msra.mxu0 %v423
    %619 = vmatprep.subr.mxu0 0.0
    %620 = vmatpush1.msra.mxu0 %v424
    %621 = vmatprep.subr.mxu0 0.0
    %622 = vmatpush1.msra.mxu0 %v425
    %623 = vmatprep.subr.mxu0 0.0
    %624 = vmatpush1.msra.mxu0 %v426
    %625 = vmatprep.subr.mxu0 0.0
    %626 = vmatpush1.msra.mxu0 %v427
    %627 = vmatprep.subr.mxu0 0.0
    %628 = vmatpush1.msra.mxu0 %v428
    %629 = vmatprep.subr.mxu0 0.0
    %630 = vmatpush1.msra.mxu0 %v429
    %631 = vmatprep.subr.mxu0 0.0
    %632 = vmatpush1.msra.mxu0 %v430
    %633 = vmatprep.subr.mxu0 0.0
    %634 = vmatpush1.msra.mxu0 %v431
    %635 = vmatprep.subr.mxu0 0.0
    %636 = vmatpush1.msra.mxu0 %v432
    %637 = vmatprep.subr.mxu0 0.0
    %638 = vmatpush1.msra.mxu0 %v433
    %639 = vmatprep.subr.mxu0 0.0
    %640 = vmatpush1.msra.mxu0 %v434
    %641 = vmatprep.subr.mxu0 0.0
    %642 = vmatpush1.msra.mxu0 %v435
    %643 = vmatprep.subr.mxu0 0.0
    %644 = vmatpush1.msra.mxu0 %v436
    %645 = vmatprep.subr.mxu0 0.0
    %646 = vmatpush1.msra.mxu0 %v437
    %647 = vmatprep.subr.mxu0 0.0
    %648 = vmatpush1.msra.mxu0 %v438
    %649 = vmatprep.subr.mxu0 0.0
    %650 = vmatpush1.msra.mxu0 %v439
    %651 = vmatprep.subr.mxu0 0.0
    %652 = vmatpush1.msra.mxu0 %v440
    %653 = vmatprep.subr.mxu0 0.0
    %654 = vmatpush1.msra.mxu0 %v441
    %655 = vmatprep.subr.mxu0 0.0
    %656 = vmatpush1.msra.mxu0 %v442
    %657 = vmatprep.mubr.f32.mxu0 %v497
    %658 = vmatmul.mubr.f32.gmra.mrb[0].mxu0 %v495
    %v659 = vpop.f32.mrb[0].mxu0
    %v660 = vadd.f32 %v590, %v659
    %v661 = vpop.f32.mrb[0].mxu0
    %662 = vdwg.mxu0
    %663 = vmatprep.subr.mxu0 0.0
    %664 = vmatpush1.msra.mxu0 %v443
    %665 = vmatprep.subr.mxu0 0.0
    %666 = vmatpush1.msra.mxu0 %v444
    %667 = vmatprep.subr.mxu0 0.0
    %668 = vmatpush1.msra.mxu0 %v445
    %669 = vmatprep.subr.mxu0 0.0
    %670 = vmatpush1.msra.mxu0 %v446
    %671 = vmatprep.subr.mxu0 0.0
    %672 = vmatpush1.msra.mxu0 %v447
    %673 = vmatprep.subr.mxu0 0.0
    %674 = vmatpush1.msra.mxu0 %v448
    %675 = vmatprep.subr.mxu0 0.0
    %676 = vmatpush1.msra.mxu0 %v449
    %677 = vmatprep.subr.mxu0 0.0
    %678 = vmatpush1.msra.mxu0 %v450
    %679 = vmatprep.subr.mxu0 0.0
    %680 = vmatpush1.msra.mxu0 %v451
    %681 = vmatprep.subr.mxu0 0.0
    %682 = vmatpush1.msra.mxu0 %v452
    %683 = vmatprep.subr.mxu0 0.0
    %684 = vmatpush1.msra.mxu0 %v453
    %685 = vmatprep.subr.mxu0 0.0
    %686 = vmatpush1.msra.mxu0 %v454
    %687 = vmatprep.subr.mxu0 0.0
    %688 = vmatpush1.msra.mxu0 %v455
    %689 = vmatprep.subr.mxu0 0.0
    %690 = vmatpush1.msra.mxu0 %v456
    %691 = vmatprep.subr.mxu0 0.0
    %692 = vmatpush1.msra.mxu0 %v457
    %693 = vmatprep.subr.mxu0 0.0
    %694 = vmatpush1.msra.mxu0 %v458
    %695 = vmatprep.subr.mxu0 0.0
    %696 = vmatpush1.msra.mxu0 %v459
    %697 = vmatprep.subr.mxu0 0.0
    %698 = vmatpush1.msra.mxu0 %v460
    %699 = vmatprep.subr.mxu0 0.0
    %700 = vmatpush1.msra.mxu0 %v461
    %701 = vmatprep.subr.mxu0 0.0
    %702 = vmatpush1.msra.mxu0 %v462
    %703 = vmatprep.subr.mxu0 0.0
    %704 = vmatpush1.msra.mxu0 %v463
    %705 = vmatprep.subr.mxu0 0.0
    %706 = vmatpush1.msra.mxu0 %v464
    %707 = vmatprep.subr.mxu0 0.0
    %708 = vmatpush1.msra.mxu0 %v465
    %709 = vmatprep.subr.mxu0 0.0
    %710 = vmatpush1.msra.mxu0 %v466
    %711 = vmatprep.subr.mxu0 0.0
    %712 = vmatpush1.msra.mxu0 %v467
    %713 = vmatprep.subr.mxu0 0.0
    %714 = vmatpush1.msra.mxu0 %v468
    %715 = vmatprep.subr.mxu0 0.0
    %716 = vmatpush1.msra.mxu0 %v469
    %717 = vmatprep.subr.mxu0 0.0
    %718 = vmatpush1.msra.mxu0 %v470
    %719 = vmatprep.subr.mxu0 0.0
    %720 = vmatpush1.msra.mxu0 %v471
    %721 = vmatprep.subr.mxu0 0.0
    %722 = vmatpush1.msra.mxu0 %v472
    %723 = vmatprep.subr.mxu0 0.0
    %724 = vmatpush1.msra.mxu0 %v473
    %725 = vmatprep.subr.mxu0 0.0
    %726 = vmatpush1.msra.mxu0 %v474
    %727 = vmatprep.mubr.f32.mxu0 %v513
    %728 = vmatmul.mubr.f32.gmra.mrb[0].mxu0 %v505
    %v729 = vpop.f32.mrb[0].mxu0
    %v730 = vadd.f32 %v660, %v729
    %v731 = vpop.f32.mrb[0].mxu0
    %732 = vdwg.mxu0
    %733 = vmatprep.subr.mxu0 0.0
    %734 = vmatpush1.msra.mxu0 %v475
    %735 = vmatprep.subr.mxu0 0.0
    %736 = vmatpush1.msra.mxu0 %v476
    %737 = vmatprep.subr.mxu0 0.0
    %738 = vmatpush1.msra.mxu0 %v477
    %739 = vmatprep.subr.mxu0 0.0
    %740 = vmatpush1.msra.mxu0 %v478
    %741 = vmatprep.subr.mxu0 0.0
    %742 = vmatpush1.msra.mxu0 0.0
    %743 = vmatprep.subr.mxu0 0.0
    %744 = vmatpush1.msra.mxu0 0.0
    %745 = vmatprep.subr.mxu0 0.0
    %746 = vmatpush1.msra.mxu0 0.0
    %747 = vmatprep.subr.mxu0 0.0
    %748 = vmatpush1.msra.mxu0 0.0
    %749 = vmatprep.subr.mxu0 0.0
    %750 = vmatpush1.msra.mxu0 0.0
    %751 = vmatprep.subr.mxu0 0.0
    %752 = vmatpush1.msra.mxu0 0.0
    %753 = vmatprep.subr.mxu0 0.0
    %754 = vmatpush1.msra.mxu0 0.0
    %755 = vmatprep.subr.mxu0 0.0
    %756 = vmatpush1.msra.mxu0 0.0
    %757 = vmatprep.subr.mxu0 0.0
    %758 = vmatpush1.msra.mxu0 0.0
    %759 = vmatprep.subr.mxu0 0.0
    %760 = vmatpush1.msra.mxu0 0.0
    %761 = vmatprep.subr.mxu0 0.0
    %762 = vmatpush1.msra.mxu0 0.0
    %763 = vmatprep.subr.mxu0 0.0
    %764 = vmatpush1.msra.mxu0 0.0
    %765 = vmatprep.subr.mxu0 0.0
    %766 = vmatpush1.msra.mxu0 0.0
    %767 = vmatprep.subr.mxu0 0.0
    %768 = vmatpush1.msra.mxu0 0.0
    %769 = vmatprep.subr.mxu0 0.0
    %770 = vmatpush1.msra.mxu0 0.0
    %771 = vmatprep.subr.mxu0 0.0
    %772 = vmatpush1.msra.mxu0 0.0
    %773 = vmatprep.subr.mxu0 0.0
    %774 = vmatpush1.msra.mxu0 0.0
    %775 = vmatprep.subr.mxu0 0.0
    %776 = vmatpush1.msra.mxu0 0.0
    %777 = vmatprep.subr.mxu0 0.0
    %778 = vmatpush1.msra.mxu0 0.0
    %779 = vmatprep.subr.mxu0 0.0
    %780 = vmatpush1.msra.mxu0 0.0
    %781 = vmatprep.subr.mxu0 0.0
    %782 = vmatpush1.msra.mxu0 0.0
    %783 = vmatprep.subr.mxu0 0.0
    %784 = vmatpush1.msra.mxu0 0.0
    %785 = vmatprep.subr.mxu0 0.0
    %786 = vmatpush1.msra.mxu0 0.0
    %787 = vmatprep.subr.mxu0 0.0
    %788 = vmatpush1.msra.mxu0 0.0
    %789 = vmatprep.subr.mxu0 0.0
    %790 = vmatpush1.msra.mxu0 0.0
    %791 = vmatprep.subr.mxu0 0.0
    %792 = vmatpush1.msra.mxu0 0.0
    %793 = vmatprep.subr.mxu0 0.0
    %794 = vmatpush1.msra.mxu0 0.0
    %795 = vmatprep.subr.mxu0 0.0
    %796 = vmatpush1.msra.mxu0 0.0
    %797 = vmatprep.mubr.f32.mxu0 0.0
    %798 = vmatmul.mubr.f32.gmra.mrb[0].mxu0 %v521
    %v799 = vpop.f32.mrb[0].mxu0
    %v800 = vadd.f32 %v730, %v799
    %v801 = vpop.f32.mrb[0].mxu0
    %802 = vdwg.mxu0
    %v809 = vcombine.high %v33, %v33
    %v811 = vunpack.c.l.s4 1983009808
    %v812 = vunpack.c.0.s8 %v811
    %v813 = vlaneseq
    %v814 = vshrl.u32 %v813, 7
    %v815 = vsub.s32 %v812, %v814
    %v816 = vrot.slane %v33, %v815
    %v818 = vunpack.c.l.s4 1983009808
    %v819 = vunpack.c.0.s8 %v818
    %v820 = vlaneseq
    %v821 = vshrl.u32 %v820, 7
    %v822 = vsub.s32 %v819, %v821
    %v823 = vrot.slane %v809, %v822
    %v824 = vcombine.high %v816, %v816
    %v825 = vcombine.high %v823, %v823
    %v826 = vcombine.high %v34, %v34
    %v828 = vunpack.c.l.s4 1983009808
    %v829 = vunpack.c.0.s8 %v828
    %v830 = vlaneseq
    %v831 = vshrl.u32 %v830, 7
    %v832 = vsub.s32 %v829, %v831
    %v833 = vrot.slane %v34, %v832
    %v835 = vunpack.c.l.s4 1983009808
    %v836 = vunpack.c.0.s8 %v835
    %v837 = vlaneseq
    %v838 = vshrl.u32 %v837, 7
    %v839 = vsub.s32 %v836, %v838
    %v840 = vrot.slane %v826, %v839
    %v841 = vcombine.high %v833, %v833
    %v842 = vcombine.high %v840, %v840
    %v843 = vcombine.high %v35, %v35
    %v845 = vunpack.c.l.s4 1983009808
    %v846 = vunpack.c.0.s8 %v845
    %v847 = vlaneseq
    %v848 = vshrl.u32 %v847, 7
    %v849 = vsub.s32 %v846, %v848
    %v850 = vrot.slane %v35, %v849
    %v852 = vunpack.c.l.s4 1983009808
    %v853 = vunpack.c.0.s8 %v852
    %v854 = vlaneseq
    %v855 = vshrl.u32 %v854, 7
    %v856 = vsub.s32 %v853, %v855
    %v857 = vrot.slane %v843, %v856
    %v858 = vcombine.high %v850, %v850
    %v859 = vcombine.high %v857, %v857
    %v860 = vcombine.high %v36, %v36
    %v862 = vunpack.c.l.s4 1983009808
    %v863 = vunpack.c.0.s8 %v862
    %v864 = vlaneseq
    %v865 = vshrl.u32 %v864, 7
    %v866 = vsub.s32 %v863, %v865
    %v867 = vrot.slane %v36, %v866
    %v869 = vunpack.c.l.s4 1983009808
    %v870 = vunpack.c.0.s8 %v869
    %v871 = vlaneseq
    %v872 = vshrl.u32 %v871, 7
    %v873 = vsub.s32 %v870, %v872
    %v874 = vrot.slane %v860, %v873
    %v875 = vcombine.high %v867, %v867
    %v876 = vcombine.high %v874, %v874
    %v877 = vcombine.high %v37, %v37
    %v879 = vunpack.c.l.s4 1983009808
    %v880 = vunpack.c.0.s8 %v879
    %v881 = vlaneseq
    %v882 = vshrl.u32 %v881, 7
    %v883 = vsub.s32 %v880, %v882
    %v884 = vrot.slane %v37, %v883
    %v886 = vunpack.c.l.s4 1983009808
    %v887 = vunpack.c.0.s8 %v886
    %v888 = vlaneseq
    %v889 = vshrl.u32 %v888, 7
    %v890 = vsub.s32 %v887, %v889
    %v891 = vrot.slane %v877, %v890
    %v892 = vcombine.high %v884, %v884
    %v893 = vcombine.high %v891, %v891
    %v895 = vunpack.c.l.s4 1983009808
    %v896 = vunpack.c.0.s8 %v895
    %v897 = vlaneseq
    %v898 = vshrl.u32 %v897, 7
    %v899 = vsub.s32 %v896, %v898
    %v900 = vrot.slane %v38, %v899
    %v901 = vcombine.high %v900, %v900
    %vm923 = vcmask 97280
    %v924 = vsel %vm923, %v901, 0
    %vm926 = vcmask 1043456
    %v928 = vsel %vm926, %v376, 0
    %930 = vmatprep.subr.mxu0 0.0
    %931 = vmatpush1.msra.mxu0 %v39
    %932 = vmatprep.subr.mxu0 0.0
    %933 = vmatpush1.msra.mxu0 %v40
    %934 = vmatprep.subr.mxu0 0.0
    %935 = vmatpush1.msra.mxu0 %v41
    %936 = vmatprep.subr.mxu0 0.0
    %937 = vmatpush1.msra.mxu0 %v42
    %938 = vmatprep.subr.mxu0 0.0
    %939 = vmatpush1.msra.mxu0 %v43
    %940 = vmatprep.subr.mxu0 0.0
    %941 = vmatpush1.msra.mxu0 %v44
    %942 = vmatprep.subr.mxu0 0.0
    %943 = vmatpush1.msra.mxu0 %v45
    %944 = vmatprep.subr.mxu0 0.0
    %945 = vmatpush1.msra.mxu0 %v46
    %946 = vmatprep.subr.mxu0 0.0
    %947 = vmatpush1.msra.mxu0 %v47
    %948 = vmatprep.subr.mxu0 0.0
    %949 = vmatpush1.msra.mxu0 %v48
    %950 = vmatprep.subr.mxu0 0.0
    %951 = vmatpush1.msra.mxu0 %v49
    %952 = vmatprep.subr.mxu0 0.0
    %953 = vmatpush1.msra.mxu0 %v50
    %954 = vmatprep.subr.mxu0 0.0
    %955 = vmatpush1.msra.mxu0 %v51
    %956 = vmatprep.subr.mxu0 0.0
    %957 = vmatpush1.msra.mxu0 %v52
    %958 = vmatprep.subr.mxu0 0.0
    %959 = vmatpush1.msra.mxu0 %v53
    %960 = vmatprep.subr.mxu0 0.0
    %961 = vmatpush1.msra.mxu0 %v54
    %962 = vmatprep.subr.mxu0 0.0
    %963 = vmatpush1.msra.mxu0 %v55
    %964 = vmatprep.subr.mxu0 0.0
    %965 = vmatpush1.msra.mxu0 %v56
    %966 = vmatprep.subr.mxu0 0.0
    %967 = vmatpush1.msra.mxu0 %v57
    %968 = vmatprep.subr.mxu0 0.0
    %969 = vmatpush1.msra.mxu0 %v58
    %970 = vmatprep.subr.mxu0 0.0
    %971 = vmatpush1.msra.mxu0 %v59
    %972 = vmatprep.subr.mxu0 0.0
    %973 = vmatpush1.msra.mxu0 %v60
    %974 = vmatprep.subr.mxu0 0.0
    %975 = vmatpush1.msra.mxu0 %v61
    %976 = vmatprep.subr.mxu0 0.0
    %977 = vmatpush1.msra.mxu0 %v62
    %978 = vmatprep.subr.mxu0 0.0
    %979 = vmatpush1.msra.mxu0 %v63
    %980 = vmatprep.subr.mxu0 0.0
    %981 = vmatpush1.msra.mxu0 %v64
    %982 = vmatprep.subr.mxu0 0.0
    %983 = vmatpush1.msra.mxu0 %v65
    %984 = vmatprep.subr.mxu0 0.0
    %985 = vmatpush1.msra.mxu0 %v66
    %986 = vmatprep.subr.mxu0 0.0
    %987 = vmatpush1.msra.mxu0 %v67
    %988 = vmatprep.subr.mxu0 0.0
    %989 = vmatpush1.msra.mxu0 %v68
    %990 = vmatprep.subr.mxu0 0.0
    %991 = vmatpush1.msra.mxu0 %v69
    %992 = vmatprep.subr.mxu0 0.0
    %993 = vmatpush1.msra.mxu0 %v70
    %994 = vmatprep.mubr.f32.mxu0 %v824
    %995 = vmatmul.mubr.f32.gmra.mrb[0].mxu0 %v816
    %v996 = vpop.f32.mrb[0].mxu0
    %v997 = vadd.f32 %v800, %v996
    %v998 = vpop.f32.mrb[0].mxu0
    %999 = vdwg.mxu0
    %1000 = vmatprep.subr.mxu0 0.0
    %1001 = vmatpush1.msra.mxu0 %v71
    %1002 = vmatprep.subr.mxu0 0.0
    %1003 = vmatpush1.msra.mxu0 %v72
    %1004 = vmatprep.subr.mxu0 0.0
    %1005 = vmatpush1.msra.mxu0 %v73
    %1006 = vmatprep.subr.mxu0 0.0
    %1007 = vmatpush1.msra.mxu0 %v74
    %1008 = vmatprep.subr.mxu0 0.0
    %1009 = vmatpush1.msra.mxu0 %v75
    %1010 = vmatprep.subr.mxu0 0.0
    %1011 = vmatpush1.msra.mxu0 %v76
    %1012 = vmatprep.subr.mxu0 0.0
    %1013 = vmatpush1.msra.mxu0 %v77
    %1014 = vmatprep.subr.mxu0 0.0
    %1015 = vmatpush1.msra.mxu0 %v78
    %1016 = vmatprep.subr.mxu0 0.0
    %1017 = vmatpush1.msra.mxu0 %v79
    %1018 = vmatprep.subr.mxu0 0.0
    %1019 = vmatpush1.msra.mxu0 %v80
    %1020 = vmatprep.subr.mxu0 0.0
    %1021 = vmatpush1.msra.mxu0 %v81
    %1022 = vmatprep.subr.mxu0 0.0
    %1023 = vmatpush1.msra.mxu0 %v82
    %1024 = vmatprep.subr.mxu0 0.0
    %1025 = vmatpush1.msra.mxu0 %v83
    %1026 = vmatprep.subr.mxu0 0.0
    %1027 = vmatpush1.msra.mxu0 %v84
    %1028 = vmatprep.subr.mxu0 0.0
    %1029 = vmatpush1.msra.mxu0 %v85
    %1030 = vmatprep.subr.mxu0 0.0
    %1031 = vmatpush1.msra.mxu0 %v86
    %1032 = vmatprep.subr.mxu0 0.0
    %1033 = vmatpush1.msra.mxu0 %v87
    %1034 = vmatprep.subr.mxu0 0.0
    %1035 = vmatpush1.msra.mxu0 %v88
    %1036 = vmatprep.subr.mxu0 0.0
    %1037 = vmatpush1.msra.mxu0 %v89
    %1038 = vmatprep.subr.mxu0 0.0
    %1039 = vmatpush1.msra.mxu0 %v90
    %1040 = vmatprep.subr.mxu0 0.0
    %1041 = vmatpush1.msra.mxu0 %v91
    %1042 = vmatprep.subr.mxu0 0.0
    %1043 = vmatpush1.msra.mxu0 %v92
    %1044 = vmatprep.subr.mxu0 0.0
    %1045 = vmatpush1.msra.mxu0 %v93
    %1046 = vmatprep.subr.mxu0 0.0
    %1047 = vmatpush1.msra.mxu0 %v94
    %1048 = vmatprep.subr.mxu0 0.0
    %1049 = vmatpush1.msra.mxu0 %v95
    %1050 = vmatprep.subr.mxu0 0.0
    %1051 = vmatpush1.msra.mxu0 %v96
    %1052 = vmatprep.subr.mxu0 0.0
    %1053 = vmatpush1.msra.mxu0 %v97
    %1054 = vmatprep.subr.mxu0 0.0
    %1055 = vmatpush1.msra.mxu0 %v98
    %1056 = vmatprep.subr.mxu0 0.0
    %1057 = vmatpush1.msra.mxu0 %v99
    %1058 = vmatprep.subr.mxu0 0.0
    %1059 = vmatpush1.msra.mxu0 %v100
    %1060 = vmatprep.subr.mxu0 0.0
    %1061 = vmatpush1.msra.mxu0 %v101
    %1062 = vmatprep.subr.mxu0 0.0
    %1063 = vmatpush1.msra.mxu0 %v102
    %1064 = vmatprep.mubr.f32.mxu0 %v825
    %1065 = vmatmul.mubr.f32.gmra.mrb[0].mxu0 %v823
    %v1066 = vpop.f32.mrb[0].mxu0
    %v1067 = vadd.f32 %v997, %v1066
    %v1068 = vpop.f32.mrb[0].mxu0
    %1069 = vdwg.mxu0
    %1070 = vmatprep.subr.mxu0 0.0
    %1071 = vmatpush1.msra.mxu0 %v103
    %1072 = vmatprep.subr.mxu0 0.0
    %1073 = vmatpush1.msra.mxu0 %v104
    %1074 = vmatprep.subr.mxu0 0.0
    %1075 = vmatpush1.msra.mxu0 %v105
    %1076 = vmatprep.subr.mxu0 0.0
    %1077 = vmatpush1.msra.mxu0 %v106
    %1078 = vmatprep.subr.mxu0 0.0
    %1079 = vmatpush1.msra.mxu0 %v107
    %1080 = vmatprep.subr.mxu0 0.0
    %1081 = vmatpush1.msra.mxu0 %v108
    %1082 = vmatprep.subr.mxu0 0.0
    %1083 = vmatpush1.msra.mxu0 %v109
    %1084 = vmatprep.subr.mxu0 0.0
    %1085 = vmatpush1.msra.mxu0 %v110
    %1086 = vmatprep.subr.mxu0 0.0
    %1087 = vmatpush1.msra.mxu0 %v111
    %1088 = vmatprep.subr.mxu0 0.0
    %1089 = vmatpush1.msra.mxu0 %v112
    %1090 = vmatprep.subr.mxu0 0.0
    %1091 = vmatpush1.msra.mxu0 %v113
    %1092 = vmatprep.subr.mxu0 0.0
    %1093 = vmatpush1.msra.mxu0 %v114
    %1094 = vmatprep.subr.mxu0 0.0
    %1095 = vmatpush1.msra.mxu0 %v115
    %1096 = vmatprep.subr.mxu0 0.0
    %1097 = vmatpush1.msra.mxu0 %v116
    %1098 = vmatprep.subr.mxu0 0.0
    %1099 = vmatpush1.msra.mxu0 %v117
    %1100 = vmatprep.subr.mxu0 0.0
    %1101 = vmatpush1.msra.mxu0 %v118
    %1102 = vmatprep.subr.mxu0 0.0
    %1103 = vmatpush1.msra.mxu0 %v119
    %1104 = vmatprep.subr.mxu0 0.0
    %1105 = vmatpush1.msra.mxu0 %v120
    %1106 = vmatprep.subr.mxu0 0.0
    %1107 = vmatpush1.msra.mxu0 %v121
    %1108 = vmatprep.subr.mxu0 0.0
    %1109 = vmatpush1.msra.mxu0 %v122
    %1110 = vmatprep.subr.mxu0 0.0
    %1111 = vmatpush1.msra.mxu0 %v123
    %1112 = vmatprep.subr.mxu0 0.0
    %1113 = vmatpush1.msra.mxu0 %v124
    %1114 = vmatprep.subr.mxu0 0.0
    %1115 = vmatpush1.msra.mxu0 %v125
    %1116 = vmatprep.subr.mxu0 0.0
    %1117 = vmatpush1.msra.mxu0 %v126
    %1118 = vmatprep.subr.mxu0 0.0
    %1119 = vmatpush1.msra.mxu0 %v127
    %1120 = vmatprep.subr.mxu0 0.0
    %1121 = vmatpush1.msra.mxu0 %v128
    %1122 = vmatprep.subr.mxu0 0.0
    %1123 = vmatpush1.msra.mxu0 %v129
    %1124 = vmatprep.subr.mxu0 0.0
    %1125 = vmatpush1.msra.mxu0 %v130
    %1126 = vmatprep.subr.mxu0 0.0
    %1127 = vmatpush1.msra.mxu0 %v131
    %1128 = vmatprep.subr.mxu0 0.0
    %1129 = vmatpush1.msra.mxu0 %v132
    %1130 = vmatprep.subr.mxu0 0.0
    %1131 = vmatpush1.msra.mxu0 %v133
    %1132 = vmatprep.subr.mxu0 0.0
    %1133 = vmatpush1.msra.mxu0 %v134
    %1134 = vmatprep.mubr.f32.mxu0 %v841
    %1135 = vmatmul.mubr.f32.gmra.mrb[0].mxu0 %v833
    %v1136 = vpop.f32.mrb[0].mxu0
    %v1137 = vadd.f32 %v1067, %v1136
    %v1138 = vpop.f32.mrb[0].mxu0
    %1139 = vdwg.mxu0
    %1140 = vmatprep.subr.mxu0 0.0
    %1141 = vmatpush1.msra.mxu0 %v135
    %1142 = vmatprep.subr.mxu0 0.0
    %1143 = vmatpush1.msra.mxu0 %v136
    %1144 = vmatprep.subr.mxu0 0.0
    %1145 = vmatpush1.msra.mxu0 %v137
    %1146 = vmatprep.subr.mxu0 0.0
    %1147 = vmatpush1.msra.mxu0 %v138
    %1148 = vmatprep.subr.mxu0 0.0
    %1149 = vmatpush1.msra.mxu0 %v139
    %1150 = vmatprep.subr.mxu0 0.0
    %1151 = vmatpush1.msra.mxu0 %v140
    %1152 = vmatprep.subr.mxu0 0.0
    %1153 = vmatpush1.msra.mxu0 %v141
    %1154 = vmatprep.subr.mxu0 0.0
    %1155 = vmatpush1.msra.mxu0 %v142
    %1156 = vmatprep.subr.mxu0 0.0
    %1157 = vmatpush1.msra.mxu0 %v143
    %1158 = vmatprep.subr.mxu0 0.0
    %1159 = vmatpush1.msra.mxu0 %v144
    %1160 = vmatprep.subr.mxu0 0.0
    %1161 = vmatpush1.msra.mxu0 %v145
    %1162 = vmatprep.subr.mxu0 0.0
    %1163 = vmatpush1.msra.mxu0 %v146
    %1164 = vmatprep.subr.mxu0 0.0
    %1165 = vmatpush1.msra.mxu0 %v147
    %1166 = vmatprep.subr.mxu0 0.0
    %1167 = vmatpush1.msra.mxu0 %v148
    %1168 = vmatprep.subr.mxu0 0.0
    %1169 = vmatpush1.msra.mxu0 %v149
    %1170 = vmatprep.subr.mxu0 0.0
    %1171 = vmatpush1.msra.mxu0 %v150
    %1172 = vmatprep.subr.mxu0 0.0
    %1173 = vmatpush1.msra.mxu0 %v151
    %1174 = vmatprep.subr.mxu0 0.0
    %1175 = vmatpush1.msra.mxu0 %v152
    %1176 = vmatprep.subr.mxu0 0.0
    %1177 = vmatpush1.msra.mxu0 %v153
    %1178 = vmatprep.subr.mxu0 0.0
    %1179 = vmatpush1.msra.mxu0 %v154
    %1180 = vmatprep.subr.mxu0 0.0
    %1181 = vmatpush1.msra.mxu0 %v155
    %1182 = vmatprep.subr.mxu0 0.0
    %1183 = vmatpush1.msra.mxu0 %v156
    %1184 = vmatprep.subr.mxu0 0.0
    %1185 = vmatpush1.msra.mxu0 %v157
    %1186 = vmatprep.subr.mxu0 0.0
    %1187 = vmatpush1.msra.mxu0 %v158
    %1188 = vmatprep.subr.mxu0 0.0
    %1189 = vmatpush1.msra.mxu0 %v159
    %1190 = vmatprep.subr.mxu0 0.0
    %1191 = vmatpush1.msra.mxu0 %v160
    %1192 = vmatprep.subr.mxu0 0.0
    %1193 = vmatpush1.msra.mxu0 %v161
    %1194 = vmatprep.subr.mxu0 0.0
    %1195 = vmatpush1.msra.mxu0 %v162
    %1196 = vmatprep.subr.mxu0 0.0
    %1197 = vmatpush1.msra.mxu0 %v163
    %1198 = vmatprep.subr.mxu0 0.0
    %1199 = vmatpush1.msra.mxu0 %v164
    %1200 = vmatprep.subr.mxu0 0.0
    %1201 = vmatpush1.msra.mxu0 %v165
    %1202 = vmatprep.subr.mxu0 0.0
    %1203 = vmatpush1.msra.mxu0 %v166
    %1204 = vmatprep.mubr.f32.mxu0 %v842
    %1205 = vmatmul.mubr.f32.gmra.mrb[0].mxu0 %v840
    %v1206 = vpop.f32.mrb[0].mxu0
    %v1207 = vadd.f32 %v1137, %v1206
    %v1208 = vpop.f32.mrb[0].mxu0
    %1209 = vdwg.mxu0
    %1210 = vmatprep.subr.mxu0 0.0
    %1211 = vmatpush1.msra.mxu0 %v167
    %1212 = vmatprep.subr.mxu0 0.0
    %1213 = vmatpush1.msra.mxu0 %v168
    %1214 = vmatprep.subr.mxu0 0.0
    %1215 = vmatpush1.msra.mxu0 %v169
    %1216 = vmatprep.subr.mxu0 0.0
    %1217 = vmatpush1.msra.mxu0 %v170
    %1218 = vmatprep.subr.mxu0 0.0
    %1219 = vmatpush1.msra.mxu0 %v171
    %1220 = vmatprep.subr.mxu0 0.0
    %1221 = vmatpush1.msra.mxu0 %v172
    %1222 = vmatprep.subr.mxu0 0.0
    %1223 = vmatpush1.msra.mxu0 %v173
    %1224 = vmatprep.subr.mxu0 0.0
    %1225 = vmatpush1.msra.mxu0 %v174
    %1226 = vmatprep.subr.mxu0 0.0
    %1227 = vmatpush1.msra.mxu0 %v175
    %1228 = vmatprep.subr.mxu0 0.0
    %1229 = vmatpush1.msra.mxu0 %v176
    %1230 = vmatprep.subr.mxu0 0.0
    %1231 = vmatpush1.msra.mxu0 %v177
    %1232 = vmatprep.subr.mxu0 0.0
    %1233 = vmatpush1.msra.mxu0 %v178
    %1234 = vmatprep.subr.mxu0 0.0
    %1235 = vmatpush1.msra.mxu0 %v179
    %1236 = vmatprep.subr.mxu0 0.0
    %1237 = vmatpush1.msra.mxu0 %v180
    %1238 = vmatprep.subr.mxu0 0.0
    %1239 = vmatpush1.msra.mxu0 %v181
    %1240 = vmatprep.subr.mxu0 0.0
    %1241 = vmatpush1.msra.mxu0 %v182
    %1242 = vmatprep.subr.mxu0 0.0
    %1243 = vmatpush1.msra.mxu0 %v183
    %1244 = vmatprep.subr.mxu0 0.0
    %1245 = vmatpush1.msra.mxu0 %v184
    %1246 = vmatprep.subr.mxu0 0.0
    %1247 = vmatpush1.msra.mxu0 %v185
    %1248 = vmatprep.subr.mxu0 0.0
    %1249 = vmatpush1.msra.mxu0 %v186
    %1250 = vmatprep.subr.mxu0 0.0
    %1251 = vmatpush1.msra.mxu0 %v187
    %1252 = vmatprep.subr.mxu0 0.0
    %1253 = vmatpush1.msra.mxu0 %v188
    %1254 = vmatprep.subr.mxu0 0.0
    %1255 = vmatpush1.msra.mxu0 %v189
    %1256 = vmatprep.subr.mxu0 0.0
    %1257 = vmatpush1.msra.mxu0 %v190
    %1258 = vmatprep.subr.mxu0 0.0
    %1259 = vmatpush1.msra.mxu0 %v191
    %1260 = vmatprep.subr.mxu0 0.0
    %1261 = vmatpush1.msra.mxu0 %v192
    %1262 = vmatprep.subr.mxu0 0.0
    %1263 = vmatpush1.msra.mxu0 %v193
    %1264 = vmatprep.subr.mxu0 0.0
    %1265 = vmatpush1.msra.mxu0 %v194
    %1266 = vmatprep.subr.mxu0 0.0
    %1267 = vmatpush1.msra.mxu0 %v195
    %1268 = vmatprep.subr.mxu0 0.0
    %1269 = vmatpush1.msra.mxu0 %v196
    %1270 = vmatprep.subr.mxu0 0.0
    %1271 = vmatpush1.msra.mxu0 %v197
    %1272 = vmatprep.subr.mxu0 0.0
    %1273 = vmatpush1.msra.mxu0 %v198
    %1274 = vmatprep.mubr.f32.mxu0 %v858
    %1275 = vmatmul.mubr.f32.gmra.mrb[0].mxu0 %v850
    %v1276 = vpop.f32.mrb[0].mxu0
    %v1277 = vadd.f32 %v1207, %v1276
    %v1278 = vpop.f32.mrb[0].mxu0
    %1279 = vdwg.mxu0
    %1280 = vmatprep.subr.mxu0 0.0
    %1281 = vmatpush1.msra.mxu0 %v199
    %1282 = vmatprep.subr.mxu0 0.0
    %1283 = vmatpush1.msra.mxu0 %v200
    %1284 = vmatprep.subr.mxu0 0.0
    %1285 = vmatpush1.msra.mxu0 %v201
    %1286 = vmatprep.subr.mxu0 0.0
    %1287 = vmatpush1.msra.mxu0 %v202
    %1288 = vmatprep.subr.mxu0 0.0
    %1289 = vmatpush1.msra.mxu0 %v203
    %1290 = vmatprep.subr.mxu0 0.0
    %1291 = vmatpush1.msra.mxu0 %v204
    %1292 = vmatprep.subr.mxu0 0.0
    %1293 = vmatpush1.msra.mxu0 %v205
    %1294 = vmatprep.subr.mxu0 0.0
    %1295 = vmatpush1.msra.mxu0 %v206
    %1296 = vmatprep.subr.mxu0 0.0
    %1297 = vmatpush1.msra.mxu0 %v207
    %1298 = vmatprep.subr.mxu0 0.0
    %1299 = vmatpush1.msra.mxu0 %v208
    %1300 = vmatprep.subr.mxu0 0.0
    %1301 = vmatpush1.msra.mxu0 %v209
    %1302 = vmatprep.subr.mxu0 0.0
    %1303 = vmatpush1.msra.mxu0 %v210
    %1304 = vmatprep.subr.mxu0 0.0
    %1305 = vmatpush1.msra.mxu0 %v211
    %1306 = vmatprep.subr.mxu0 0.0
    %1307 = vmatpush1.msra.mxu0 %v212
    %1308 = vmatprep.subr.mxu0 0.0
    %1309 = vmatpush1.msra.mxu0 %v213
    %1310 = vmatprep.subr.mxu0 0.0
    %1311 = vmatpush1.msra.mxu0 %v214
    %1312 = vmatprep.subr.mxu0 0.0
    %1313 = vmatpush1.msra.mxu0 %v215
    %1314 = vmatprep.subr.mxu0 0.0
    %1315 = vmatpush1.msra.mxu0 %v216
    %1316 = vmatprep.subr.mxu0 0.0
    %1317 = vmatpush1.msra.mxu0 %v217
    %1318 = vmatprep.subr.mxu0 0.0
    %1319 = vmatpush1.msra.mxu0 %v218
    %1320 = vmatprep.subr.mxu0 0.0
    %1321 = vmatpush1.msra.mxu0 %v219
    %1322 = vmatprep.subr.mxu0 0.0
    %1323 = vmatpush1.msra.mxu0 %v220
    %1324 = vmatprep.subr.mxu0 0.0
    %1325 = vmatpush1.msra.mxu0 %v221
    %1326 = vmatprep.subr.mxu0 0.0
    %1327 = vmatpush1.msra.mxu0 %v222
    %1328 = vmatprep.subr.mxu0 0.0
    %1329 = vmatpush1.msra.mxu0 %v223
    %1330 = vmatprep.subr.mxu0 0.0
    %1331 = vmatpush1.msra.mxu0 %v224
    %1332 = vmatprep.subr.mxu0 0.0
    %1333 = vmatpush1.msra.mxu0 %v225
    %1334 = vmatprep.subr.mxu0 0.0
    %1335 = vmatpush1.msra.mxu0 %v226
    %1336 = vmatprep.subr.mxu0 0.0
    %1337 = vmatpush1.msra.mxu0 %v227
    %1338 = vmatprep.subr.mxu0 0.0
    %1339 = vmatpush1.msra.mxu0 %v228
    %1340 = vmatprep.subr.mxu0 0.0
    %1341 = vmatpush1.msra.mxu0 %v229
    %1342 = vmatprep.subr.mxu0 0.0
    %1343 = vmatpush1.msra.mxu0 %v230
    %1344 = vmatprep.mubr.f32.mxu0 %v859
    %1345 = vmatmul.mubr.f32.gmra.mrb[0].mxu0 %v857
    %v1346 = vpop.f32.mrb[0].mxu0
    %v1347 = vadd.f32 %v1277, %v1346
    %v1348 = vpop.f32.mrb[0].mxu0
    %1349 = vdwg.mxu0
    %1350 = vmatprep.subr.mxu0 0.0
    %1351 = vmatpush1.msra.mxu0 %v231
    %1352 = vmatprep.subr.mxu0 0.0
    %1353 = vmatpush1.msra.mxu0 %v232
    %1354 = vmatprep.subr.mxu0 0.0
    %1355 = vmatpush1.msra.mxu0 %v233
    %1356 = vmatprep.subr.mxu0 0.0
    %1357 = vmatpush1.msra.mxu0 %v234
    %1358 = vmatprep.subr.mxu0 0.0
    %1359 = vmatpush1.msra.mxu0 %v235
    %1360 = vmatprep.subr.mxu0 0.0
    %1361 = vmatpush1.msra.mxu0 %v236
    %1362 = vmatprep.subr.mxu0 0.0
    %1363 = vmatpush1.msra.mxu0 %v237
    %1364 = vmatprep.subr.mxu0 0.0
    %1365 = vmatpush1.msra.mxu0 %v238
    %1366 = vmatprep.subr.mxu0 0.0
    %1367 = vmatpush1.msra.mxu0 %v239
    %1368 = vmatprep.subr.mxu0 0.0
    %1369 = vmatpush1.msra.mxu0 %v240
    %1370 = vmatprep.subr.mxu0 0.0
    %1371 = vmatpush1.msra.mxu0 %v241
    %1372 = vmatprep.subr.mxu0 0.0
    %1373 = vmatpush1.msra.mxu0 %v242
    %1374 = vmatprep.subr.mxu0 0.0
    %1375 = vmatpush1.msra.mxu0 %v243
    %1376 = vmatprep.subr.mxu0 0.0
    %1377 = vmatpush1.msra.mxu0 %v244
    %1378 = vmatprep.subr.mxu0 0.0
    %1379 = vmatpush1.msra.mxu0 %v245
    %1380 = vmatprep.subr.mxu0 0.0
    %1381 = vmatpush1.msra.mxu0 %v246
    %1382 = vmatprep.subr.mxu0 0.0
    %1383 = vmatpush1.msra.mxu0 %v247
    %1384 = vmatprep.subr.mxu0 0.0
    %1385 = vmatpush1.msra.mxu0 %v248
    %1386 = vmatprep.subr.mxu0 0.0
    %1387 = vmatpush1.msra.mxu0 %v249
    %1388 = vmatprep.subr.mxu0 0.0
    %1389 = vmatpush1.msra.mxu0 %v250
    %1390 = vmatprep.subr.mxu0 0.0
    %1391 = vmatpush1.msra.mxu0 %v251
    %1392 = vmatprep.subr.mxu0 0.0
    %1393 = vmatpush1.msra.mxu0 %v252
    %1394 = vmatprep.subr.mxu0 0.0
    %1395 = vmatpush1.msra.mxu0 %v253
    %1396 = vmatprep.subr.mxu0 0.0
    %1397 = vmatpush1.msra.mxu0 %v254
    %1398 = vmatprep.subr.mxu0 0.0
    %1399 = vmatpush1.msra.mxu0 %v255
    %1400 = vmatprep.subr.mxu0 0.0
    %1401 = vmatpush1.msra.mxu0 %v256
    %1402 = vmatprep.subr.mxu0 0.0
    %1403 = vmatpush1.msra.mxu0 %v257
    %1404 = vmatprep.subr.mxu0 0.0
    %1405 = vmatpush1.msra.mxu0 %v258
    %1406 = vmatprep.subr.mxu0 0.0
    %1407 = vmatpush1.msra.mxu0 %v259
    %1408 = vmatprep.subr.mxu0 0.0
    %1409 = vmatpush1.msra.mxu0 %v260
    %1410 = vmatprep.subr.mxu0 0.0
    %1411 = vmatpush1.msra.mxu0 %v261
    %1412 = vmatprep.subr.mxu0 0.0
    %1413 = vmatpush1.msra.mxu0 %v262
    %1414 = vmatprep.mubr.f32.mxu0 %v875
    %1415 = vmatmul.mubr.f32.gmra.mrb[0].mxu0 %v867
    %v1416 = vpop.f32.mrb[0].mxu0
    %v1417 = vadd.f32 %v1347, %v1416
    %v1418 = vpop.f32.mrb[0].mxu0
    %1419 = vdwg.mxu0
    %1420 = vmatprep.subr.mxu0 0.0
    %1421 = vmatpush1.msra.mxu0 %v263
    %1422 = vmatprep.subr.mxu0 0.0
    %1423 = vmatpush1.msra.mxu0 %v264
    %1424 = vmatprep.subr.mxu0 0.0
    %1425 = vmatpush1.msra.mxu0 %v265
    %1426 = vmatprep.subr.mxu0 0.0
    %1427 = vmatpush1.msra.mxu0 %v266
    %1428 = vmatprep.subr.mxu0 0.0
    %1429 = vmatpush1.msra.mxu0 %v267
    %1430 = vmatprep.subr.mxu0 0.0
    %1431 = vmatpush1.msra.mxu0 %v268
    %1432 = vmatprep.subr.mxu0 0.0
    %1433 = vmatpush1.msra.mxu0 %v269
    %1434 = vmatprep.subr.mxu0 0.0
    %1435 = vmatpush1.msra.mxu0 %v270
    %1436 = vmatprep.subr.mxu0 0.0
    %1437 = vmatpush1.msra.mxu0 %v271
    %1438 = vmatprep.subr.mxu0 0.0
    %1439 = vmatpush1.msra.mxu0 %v272
    %1440 = vmatprep.subr.mxu0 0.0
    %1441 = vmatpush1.msra.mxu0 %v273
    %1442 = vmatprep.subr.mxu0 0.0
    %1443 = vmatpush1.msra.mxu0 %v274
    %1444 = vmatprep.subr.mxu0 0.0
    %1445 = vmatpush1.msra.mxu0 %v275
    %1446 = vmatprep.subr.mxu0 0.0
    %1447 = vmatpush1.msra.mxu0 %v276
    %1448 = vmatprep.subr.mxu0 0.0
    %1449 = vmatpush1.msra.mxu0 %v277
    %1450 = vmatprep.subr.mxu0 0.0
    %1451 = vmatpush1.msra.mxu0 %v278
    %1452 = vmatprep.subr.mxu0 0.0
    %1453 = vmatpush1.msra.mxu0 %v279
    %1454 = vmatprep.subr.mxu0 0.0
    %1455 = vmatpush1.msra.mxu0 %v280
    %1456 = vmatprep.subr.mxu0 0.0
    %1457 = vmatpush1.msra.mxu0 %v281
    %1458 = vmatprep.subr.mxu0 0.0
    %1459 = vmatpush1.msra.mxu0 %v282
    %1460 = vmatprep.subr.mxu0 0.0
    %1461 = vmatpush1.msra.mxu0 %v283
    %1462 = vmatprep.subr.mxu0 0.0
    %1463 = vmatpush1.msra.mxu0 %v284
    %1464 = vmatprep.subr.mxu0 0.0
    %1465 = vmatpush1.msra.mxu0 %v285
    %1466 = vmatprep.subr.mxu0 0.0
    %1467 = vmatpush1.msra.mxu0 %v286
    %1468 = vmatprep.subr.mxu0 0.0
    %1469 = vmatpush1.msra.mxu0 %v287
    %1470 = vmatprep.subr.mxu0 0.0
    %1471 = vmatpush1.msra.mxu0 %v288
    %1472 = vmatprep.subr.mxu0 0.0
    %1473 = vmatpush1.msra.mxu0 %v289
    %1474 = vmatprep.subr.mxu0 0.0
    %1475 = vmatpush1.msra.mxu0 %v290
    %1476 = vmatprep.subr.mxu0 0.0
    %1477 = vmatpush1.msra.mxu0 %v291
    %1478 = vmatprep.subr.mxu0 0.0
    %1479 = vmatpush1.msra.mxu0 %v292
    %1480 = vmatprep.subr.mxu0 0.0
    %1481 = vmatpush1.msra.mxu0 %v293
    %1482 = vmatprep.subr.mxu0 0.0
    %1483 = vmatpush1.msra.mxu0 %v294
    %1484 = vmatprep.mubr.f32.mxu0 %v876
    %1485 = vmatmul.mubr.f32.gmra.mrb[0].mxu0 %v874
    %v1486 = vpop.f32.mrb[0].mxu0
    %v1487 = vadd.f32 %v1417, %v1486
    %v1488 = vpop.f32.mrb[0].mxu0
    %1489 = vdwg.mxu0
    %1490 = vmatprep.subr.mxu0 0.0
    %1491 = vmatpush1.msra.mxu0 %v295
    %1492 = vmatprep.subr.mxu0 0.0
    %1493 = vmatpush1.msra.mxu0 %v296
    %1494 = vmatprep.subr.mxu0 0.0
    %1495 = vmatpush1.msra.mxu0 %v297
    %1496 = vmatprep.subr.mxu0 0.0
    %1497 = vmatpush1.msra.mxu0 %v298
    %1498 = vmatprep.subr.mxu0 0.0
    %1499 = vmatpush1.msra.mxu0 %v299
    %1500 = vmatprep.subr.mxu0 0.0
    %1501 = vmatpush1.msra.mxu0 %v300
    %1502 = vmatprep.subr.mxu0 0.0
    %1503 = vmatpush1.msra.mxu0 %v301
    %1504 = vmatprep.subr.mxu0 0.0
    %1505 = vmatpush1.msra.mxu0 %v302
    %1506 = vmatprep.subr.mxu0 0.0
    %1507 = vmatpush1.msra.mxu0 %v303
    %1508 = vmatprep.subr.mxu0 0.0
    %1509 = vmatpush1.msra.mxu0 %v304
    %1510 = vmatprep.subr.mxu0 0.0
    %1511 = vmatpush1.msra.mxu0 %v305
    %1512 = vmatprep.subr.mxu0 0.0
    %1513 = vmatpush1.msra.mxu0 %v306
    %1514 = vmatprep.subr.mxu0 0.0
    %1515 = vmatpush1.msra.mxu0 %v307
    %1516 = vmatprep.subr.mxu0 0.0
    %1517 = vmatpush1.msra.mxu0 %v308
    %1518 = vmatprep.subr.mxu0 0.0
    %1519 = vmatpush1.msra.mxu0 %v309
    %1520 = vmatprep.subr.mxu0 0.0
    %1521 = vmatpush1.msra.mxu0 %v310
    %1522 = vmatprep.subr.mxu0 0.0
    %1523 = vmatpush1.msra.mxu0 %v311
    %1524 = vmatprep.subr.mxu0 0.0
    %1525 = vmatpush1.msra.mxu0 %v312
    %1526 = vmatprep.subr.mxu0 0.0
    %1527 = vmatpush1.msra.mxu0 %v313
    %1528 = vmatprep.subr.mxu0 0.0
    %1529 = vmatpush1.msra.mxu0 %v314
    %1530 = vmatprep.subr.mxu0 0.0
    %1531 = vmatpush1.msra.mxu0 %v315
    %1532 = vmatprep.subr.mxu0 0.0
    %1533 = vmatpush1.msra.mxu0 %v316
    %1534 = vmatprep.subr.mxu0 0.0
    %1535 = vmatpush1.msra.mxu0 %v317
    %1536 = vmatprep.subr.mxu0 0.0
    %1537 = vmatpush1.msra.mxu0 %v318
    %1538 = vmatprep.subr.mxu0 0.0
    %1539 = vmatpush1.msra.mxu0 %v319
    %1540 = vmatprep.subr.mxu0 0.0
    %1541 = vmatpush1.msra.mxu0 %v320
    %1542 = vmatprep.subr.mxu0 0.0
    %1543 = vmatpush1.msra.mxu0 %v321
    %1544 = vmatprep.subr.mxu0 0.0
    %1545 = vmatpush1.msra.mxu0 %v322
    %1546 = vmatprep.subr.mxu0 0.0
    %1547 = vmatpush1.msra.mxu0 %v323
    %1548 = vmatprep.subr.mxu0 0.0
    %1549 = vmatpush1.msra.mxu0 %v324
    %1550 = vmatprep.subr.mxu0 0.0
    %1551 = vmatpush1.msra.mxu0 %v325
    %1552 = vmatprep.subr.mxu0 0.0
    %1553 = vmatpush1.msra.mxu0 %v326
    %1554 = vmatprep.mubr.f32.mxu0 %v892
    %1555 = vmatmul.mubr.f32.gmra.mrb[0].mxu0 %v884
    %v1556 = vpop.f32.mrb[0].mxu0
    %v1557 = vadd.f32 %v1487, %v1556
    %v1558 = vpop.f32.mrb[0].mxu0
    %1559 = vdwg.mxu0
    %1560 = vmatprep.subr.mxu0 0.0
    %1561 = vmatpush1.msra.mxu0 %v327
    %1562 = vmatprep.subr.mxu0 0.0
    %1563 = vmatpush1.msra.mxu0 %v328
    %1564 = vmatprep.subr.mxu0 0.0
    %1565 = vmatpush1.msra.mxu0 %v329
    %1566 = vmatprep.subr.mxu0 0.0
    %1567 = vmatpush1.msra.mxu0 %v330
    %1568 = vmatprep.subr.mxu0 0.0
    %1569 = vmatpush1.msra.mxu0 %v331
    %1570 = vmatprep.subr.mxu0 0.0
    %1571 = vmatpush1.msra.mxu0 %v332
    %1572 = vmatprep.subr.mxu0 0.0
    %1573 = vmatpush1.msra.mxu0 %v333
    %1574 = vmatprep.subr.mxu0 0.0
    %1575 = vmatpush1.msra.mxu0 %v334
    %1576 = vmatprep.subr.mxu0 0.0
    %1577 = vmatpush1.msra.mxu0 %v335
    %1578 = vmatprep.subr.mxu0 0.0
    %1579 = vmatpush1.msra.mxu0 %v336
    %1580 = vmatprep.subr.mxu0 0.0
    %1581 = vmatpush1.msra.mxu0 %v337
    %1582 = vmatprep.subr.mxu0 0.0
    %1583 = vmatpush1.msra.mxu0 %v338
    %1584 = vmatprep.subr.mxu0 0.0
    %1585 = vmatpush1.msra.mxu0 %v339
    %1586 = vmatprep.subr.mxu0 0.0
    %1587 = vmatpush1.msra.mxu0 %v340
    %1588 = vmatprep.subr.mxu0 0.0
    %1589 = vmatpush1.msra.mxu0 %v341
    %1590 = vmatprep.subr.mxu0 0.0
    %1591 = vmatpush1.msra.mxu0 %v342
    %1592 = vmatprep.subr.mxu0 0.0
    %1593 = vmatpush1.msra.mxu0 %v343
    %1594 = vmatprep.subr.mxu0 0.0
    %1595 = vmatpush1.msra.mxu0 %v344
    %1596 = vmatprep.subr.mxu0 0.0
    %1597 = vmatpush1.msra.mxu0 %v345
    %1598 = vmatprep.subr.mxu0 0.0
    %1599 = vmatpush1.msra.mxu0 %v346
    %1600 = vmatprep.subr.mxu0 0.0
    %1601 = vmatpush1.msra.mxu0 %v347
    %1602 = vmatprep.subr.mxu0 0.0
    %1603 = vmatpush1.msra.mxu0 %v348
    %1604 = vmatprep.subr.mxu0 0.0
    %1605 = vmatpush1.msra.mxu0 %v349
    %1606 = vmatprep.subr.mxu0 0.0
    %1607 = vmatpush1.msra.mxu0 %v350
    %1608 = vmatprep.subr.mxu0 0.0
    %1609 = vmatpush1.msra.mxu0 %v351
    %1610 = vmatprep.subr.mxu0 0.0
    %1611 = vmatpush1.msra.mxu0 %v352
    %1612 = vmatprep.subr.mxu0 0.0
    %1613 = vmatpush1.msra.mxu0 %v353
    %1614 = vmatprep.subr.mxu0 0.0
    %1615 = vmatpush1.msra.mxu0 %v354
    %1616 = vmatprep.subr.mxu0 0.0
    %1617 = vmatpush1.msra.mxu0 %v355
    %1618 = vmatprep.subr.mxu0 0.0
    %1619 = vmatpush1.msra.mxu0 %v356
    %1620 = vmatprep.subr.mxu0 0.0
    %1621 = vmatpush1.msra.mxu0 %v357
    %1622 = vmatprep.subr.mxu0 0.0
    %1623 = vmatpush1.msra.mxu0 %v358
    %1624 = vmatprep.mubr.f32.mxu0 %v893
    %1625 = vmatmul.mubr.f32.gmra.mrb[0].mxu0 %v891
    %v1626 = vpop.f32.mrb[0].mxu0
    %v1627 = vadd.f32 %v1557, %v1626
    %v1628 = vpop.f32.mrb[0].mxu0
    %1629 = vdwg.mxu0
    %1630 = vmatprep.subr.mxu0 0.0
    %1631 = vmatpush1.msra.mxu0 %v359
    %1632 = vmatprep.subr.mxu0 0.0
    %1633 = vmatpush1.msra.mxu0 %v360
    %1634 = vmatprep.subr.mxu0 0.0
    %1635 = vmatpush1.msra.mxu0 %v361
    %1636 = vmatprep.subr.mxu0 0.0
    %1637 = vmatpush1.msra.mxu0 %v362
    %1638 = vmatprep.subr.mxu0 0.0
    %1639 = vmatpush1.msra.mxu0 %v363
    %1640 = vmatprep.subr.mxu0 0.0
    %1641 = vmatpush1.msra.mxu0 %v364
    %1642 = vmatprep.subr.mxu0 0.0
    %1643 = vmatpush1.msra.mxu0 %v365
    %1644 = vmatprep.subr.mxu0 0.0
    %1645 = vmatpush1.msra.mxu0 %v366
    %1646 = vmatprep.subr.mxu0 0.0
    %1647 = vmatpush1.msra.mxu0 %v367
    %1648 = vmatprep.subr.mxu0 0.0
    %1649 = vmatpush1.msra.mxu0 %v368
    %1650 = vmatprep.subr.mxu0 0.0
    %1651 = vmatpush1.msra.mxu0 %v369
    %1652 = vmatprep.subr.mxu0 0.0
    %1653 = vmatpush1.msra.mxu0 %v370
    %1654 = vmatprep.subr.mxu0 0.0
    %1655 = vmatpush1.msra.mxu0 %v371
    %1656 = vmatprep.subr.mxu0 0.0
    %1657 = vmatpush1.msra.mxu0 %v372
    %1658 = vmatprep.subr.mxu0 0.0
    %1659 = vmatpush1.msra.mxu0 %v373
    %1660 = vmatprep.subr.mxu0 0.0
    %1661 = vmatpush1.msra.mxu0 %v374
    %1662 = vmatprep.subr.mxu0 0.0
    %1663 = vmatpush1.msra.mxu0 %v375
    %1664 = vmatprep.subr.mxu0 0.0
    %1665 = vmatpush1.msra.mxu0 %v928
    %1666 = vmatprep.subr.mxu0 0.0
    %1667 = vmatpush1.msra.mxu0 0.0
    %1668 = vmatprep.subr.mxu0 0.0
    %1669 = vmatpush1.msra.mxu0 0.0
    %1670 = vmatprep.subr.mxu0 0.0
    %1671 = vmatpush1.msra.mxu0 0.0
    %1672 = vmatprep.subr.mxu0 0.0
    %1673 = vmatpush1.msra.mxu0 0.0
    %1674 = vmatprep.subr.mxu0 0.0
    %1675 = vmatpush1.msra.mxu0 0.0
    %1676 = vmatprep.subr.mxu0 0.0
    %1677 = vmatpush1.msra.mxu0 0.0
    %1678 = vmatprep.subr.mxu0 0.0
    %1679 = vmatpush1.msra.mxu0 0.0
    %1680 = vmatprep.subr.mxu0 0.0
    %1681 = vmatpush1.msra.mxu0 0.0
    %1682 = vmatprep.subr.mxu0 0.0
    %1683 = vmatpush1.msra.mxu0 0.0
    %1684 = vmatprep.subr.mxu0 0.0
    %1685 = vmatpush1.msra.mxu0 0.0
    %1686 = vmatprep.subr.mxu0 0.0
    %1687 = vmatpush1.msra.mxu0 0.0
    %1688 = vmatprep.subr.mxu0 0.0
    %1689 = vmatpush1.msra.mxu0 0.0
    %1690 = vmatprep.subr.mxu0 0.0
    %1691 = vmatpush1.msra.mxu0 0.0
    %1692 = vmatprep.subr.mxu0 0.0
    %1693 = vmatpush1.msra.mxu0 0.0
    %1694 = vmatprep.mubr.f32.mxu0 %v924
    %1695 = vmatmul.mubr.f32.gmra.mrb[0].mxu0 %v900
    %v1696 = vpop.f32.mrb[0].mxu0
    %v1697 = vadd.f32 %v1627, %v1696
    %v1698 = vpop.f32.mrb[0].mxu0
    %1699 = vdwg.mxu0
    %v1700 = vld [vmem:[%s4] sm:$0x1]
    %v1702 = vlaneseq
    %v1703 = vshrl.u32 %v1702, 7
    %v1704 = vsub.s32 0, %v1703
    %v1705 = vrot.slane %v1700, %v1704
    %v1707 = vadd.f32 %v1697, %v1705
    %v1708 = vld [vmem:[%s7] sm:$0x3]
    %v1709 = vtanh.pop %v1707
    %v1710 = vadd.f32 %v1708, %v1709
    %v1711 = vld [vmem:[%s5] sm:$0x1]
    %v1713 = vlaneseq
    %v1714 = vshrl.u32 %v1713, 7
    %v1715 = vsub.s32 0, %v1714
    %v1716 = vrot.slane %v1711, %v1715
    %vm1718 = vcmp.ge.f32.partialorder %v1710, %v1716
    %v1719 = vsel %vm1718, %v1710, 0.0
    %vm1720 = vcmask 74752
    %1721 = vst.msk [vmem:[#allocation2] sm:$0x3] %vm1720, %v1719
    %v1722 = vmul.f32 %v1719, 0.2
    %v1723 = vsel %vm1718, 0.0, %v1710
    %v1724 = vld [vmem:[%s6] sm:$0x1]
    %v1726 = vlaneseq
    %v1727 = vshrl.u32 %v1726, 7
    %v1728 = vsub.s32 0, %v1727
    %v1729 = vrot.slane %v1724, %v1728
    %v1731 = vmul.f32 %v1723, %v1729
    %v1732 = vadd.f32 %v1722, %v1731
    %1733 = vst.msk [vmem:[#allocation4] sm:$0x3] %vm1720, %v1732
    // Predicated region
    $region34: #{net_forward.5} parent=1 // pred_check
      _
    $region35: #{net_forward.5} parent=1 // pred_check_branch
      %1735 = sbr.rel (0) target = $region37
    $region36: #{net_forward.5} parent=1 // pred_region
      %s1737 = ssub.s32 32, 32
      %1738 = vsyncadd [#allocation3], %s1737
      %s1740 = sshll.u32 [#allocation2], 4
      %s1741 = int_to_ptr.vmem [resolvable:$true] %s1740
      %1743 = dma.vmem_to_hbm [thread:$0]  %s1741, 32, %s8, [#allocation3]
    $region37: #{net_forward.5} parent=1 // pred_fallthru
      _
    // Predicated region
    $region38: #{net_forward.5} parent=1 // pred_check
      _
    $region39: #{net_forward.5} parent=1 // pred_check_branch
      %1745 = sbr.rel (0) target = $region41
    $region40: #{net_forward.5} parent=1 // pred_region
      %s1747 = ssub.s32 32, 32
      %1748 = vsyncadd [#allocation5], %s1747
      %s1750 = sshll.u32 [#allocation4], 4
      %s1751 = int_to_ptr.vmem [resolvable:$true] %s1750
      %1753 = dma.vmem_to_hbm [thread:$0]  %s1751, 32, %s9, [#allocation5]
    $region41: #{net_forward.5} parent=1 // pred_fallthru
      _
    // Predicated region
    $region42: #{net_forward.5} parent=1 // pred_check
      _
    $region43: #{net_forward.5} parent=1 // pred_check_branch
      %1755 = sbr.rel (0) target = $region45
    $region44: #{net_forward.5} parent=1 // pred_region
      %1756 = dma.done [#allocation3], 32
    $region45: #{net_forward.5} parent=1 // pred_fallthru
      _
    // Predicated region
    $region46: #{net_forward.5} parent=1 // pred_check
      _
    $region47: #{net_forward.5} parent=1 // pred_check_branch
      %1758 = sbr.rel (0) target = $region49
    $region48: #{net_forward.5} parent=1 // pred_region
      %1759 = dma.done [#allocation5], 32
    $region49: #{net_forward.5} parent=1 // pred_fallthru
      _
    %1760 = vsyncpa [#allocation3], 1
    %1761 = vsyncpa [#allocation5], 1

</llo_original>
